<compile_context>
chip_gen: v7x
topology: tpu7x:2x2x1
jax: 0.10.0
libtpu: 0.0.40
codegen_flags: <defaults>
</compile_context>

<pallas_src>
import jax
import jax.numpy as jnp
import numpy as np
from jax import lax
from jax.experimental import pallas as pl
from jax.experimental.pallas import tpu as pltpu

LANE = 128
SUBLANE = 8


def _round_up(x, m):
    return ((x + m - 1) // m) * m


# ----------------------------------------------------------------------------
# Fused Pallas kernel (built per (num_layers, T, B, Bp, D, HP) at trace time)
# ----------------------------------------------------------------------------
def _build_fused_kernel(num_layers, T, B, Bp, D, HP):
    def kernel(*refs):
        # inputs: x, then per layer (w_ih, w_hh, b_comb, b_hh_n), then fc_w, fc_b
        # outputs: o_ref ; scratch: xs_scr, gi_scr, hs_scr
        x_ref = refs[0]                                        # (B, T, D) f32
        layer_refs = [refs[1 + 4 * l: 1 + 4 * (l + 1)] for l in range(num_layers)]
        fc_w_ref = refs[1 + 4 * num_layers]                    # (HP, O) f32
        fc_b_ref = refs[2 + 4 * num_layers]                    # (1, O)  f32
        o_ref = refs[3 + 4 * num_layers]                       # (B, O)  f32
        xs_scr = refs[4 + 4 * num_layers]                      # (T, Bp, D)    f32
        gi_scr = refs[5 + 4 * num_layers]                      # (T, Bp, 3*HP) f32
        hs_scr = refs[6 + 4 * num_layers]                      # (T, Bp, HP)   f32

        # ---- in-kernel time-major reorder + batch pad (replaces host transpose) ----
        xs_scr[...] = jnp.zeros_like(xs_scr)                   # keep pad rows finite
        for t in range(T):                                     # tiny one-time copies
            xs_scr[t, 0:B, :] = x_ref[:, t, :]

        def bulk_project(src_flat_bf16, w_ih_ref, b_comb_ref):
            # One MXU matmul per layer for ALL timesteps; biases folded here.
            gi = jnp.dot(src_flat_bf16, w_ih_ref[...],
                         preferred_element_type=jnp.float32)   # (T*Bp, 3*HP) f32
            gi_scr[...] = (gi + b_comb_ref[...]).reshape(T, Bp, 3 * HP)

        def recurrence(w_hh_ref, b_hh_n_ref, store_seq):
            w_hh = w_hh_ref[...]                                # (HP, 3*HP) bf16
            # Hoisted: broadcast once per layer, not once per step.
            b_hh_n = jnp.broadcast_to(b_hh_n_ref[...], (Bp, HP))
            h = jnp.zeros((Bp, HP), jnp.float32)
            hb = jnp.zeros((Bp, HP), jnp.bfloat16)
            for t in range(T):                                  # T small & static
                gi_t = gi_scr[t]                                # (Bp, 3*HP) static view
                if t == 0:
                    # h0 == 0 -> gh == 0 exactly: skip the matmul on step 0.
                    r = jax.nn.sigmoid(gi_t[:, 0:HP])
                    z = jax.nn.sigmoid(gi_t[:, HP:2 * HP])
                    n = jnp.tanh(gi_t[:, 2 * HP:3 * HP] + r * b_hh_n)
                    h = (1.0 - z) * n
                else:
                    # bf16 operands, f32 accumulation; gate math stays f32.
                    gh = jnp.dot(hb, w_hh, preferred_element_type=jnp.float32)
                    r = jax.nn.sigmoid(gi_t[:, 0:HP] + gh[:, 0:HP])
                    z = jax.nn.sigmoid(gi_t[:, HP:2 * HP] + gh[:, HP:2 * HP])
                    n = jnp.tanh(gi_t[:, 2 * HP:3 * HP]
                                 + r * (gh[:, 2 * HP:3 * HP] + b_hh_n))
                    h = (1.0 - z) * n + z * h
                hb = h.astype(jnp.bfloat16)
                if store_seq:
                    hs_scr[t] = h                               # aligned (8, HP) store
            return h

        # ---- layer 0 ------------------------------------------------------------
        w_ih0, w_hh0, b_c0, b_hn0 = layer_refs[0]
        x_flat = xs_scr[...].reshape(T * Bp, D).astype(jnp.bfloat16)
        bulk_project(x_flat, w_ih0, b_c0)
        h = recurrence(w_hh0, b_hn0, store_seq=num_layers > 1)

        # ---- deeper layers --------------------------------------------------------
        for l in range(1, num_layers):
            w_ih, w_hh, b_c, b_hn = layer_refs[l]
            h_flat = hs_scr[...].reshape(T * Bp, HP).astype(jnp.bfloat16)
            bulk_project(h_flat, w_ih, b_c)
            h = recurrence(w_hh, b_hn, store_seq=l < num_layers - 1)

        # ---- FC head on the final hidden state only (f32) -------------------------
        out = jnp.dot(h, fc_w_ref[...], preferred_element_type=jnp.float32) + fc_b_ref[...]
        o_ref[...] = out[0:B, :]

    return kernel


# ----------------------------------------------------------------------------
# Wrapper
# ----------------------------------------------------------------------------
def _fused_forward(x_btd, packed):
    """x_btd: (B, T, input_dim) batch-first f32. Returns (B, output_dim) f32."""
    B, T, D = x_btd.shape
    num_layers = len(packed["layers"])
    HP = packed["layers"][0]["w_hh"].shape[0]
    O = packed["fc_w"].shape[1]
    Bp = _round_up(B, SUBLANE)

    args = [x_btd]
    for lyr in packed["layers"]:
        args += [lyr["w_ih"], lyr["w_hh"], lyr["b_comb"], lyr["b_hh_n"]]
    args += [packed["fc_w"], packed["fc_b"]]

    kernel = _build_fused_kernel(num_layers, T, B, Bp, D, HP)
    return pl.pallas_call(
        kernel,
        out_shape=jax.ShapeDtypeStruct((B, O), jnp.float32),
        scratch_shapes=[
            pltpu.VMEM((T, Bp, D), jnp.float32),        # time-major, batch-padded x
            pltpu.VMEM((T, Bp, 3 * HP), jnp.float32),   # bulk gate pre-activations
            pltpu.VMEM((T, Bp, HP), jnp.float32),       # previous layer's hidden seq
        ],
    )(*args)


gru_student_forward = jax.jit(_fused_forward)


# ----------------------------------------------------------------------------
# One-time parameter prepacking (pad H -> multiple of 128, fold biases, bf16 weights)
# ----------------------------------------------------------------------------
def prepack_params(params, lane=LANE):
    """Layout params for the fused kernel.

    Per layer: w_ih (Din_p, 3*HP) bf16, w_hh (HP, 3*HP) bf16,
               b_comb (1, 3*HP) f32, b_hh_n (1, HP) f32.
    Gate order is PyTorch's [r | z | n]; each gate block is HP wide (zero-padded).
    b_comb = b_ih + b_hh for r/z, b_ih only for n (b_hh_n is applied inside r*(...)).
    Zero padding keeps padded hidden lanes exactly 0 for all timesteps (also in bf16).
    """
    H = params["gru_layers"][0]["w_hh_t"].shape[0]
    HP = _round_up(H, lane)

    def pad_cols(a):
        return jnp.pad(a, ((0, 0), (0, HP - a.shape[1])))

    def pad_rows(a, rows):
        return jnp.pad(a, ((0, rows - a.shape[0]), (0, 0)))

    layers = []
    for idx, lyr in enumerate(params["gru_layers"]):
        d_in = lyr["w_ih_t"].shape[0]
        d_in_p = d_in if idx == 0 else HP          # deeper layers consume padded h
        wi = [lyr["w_ih_t"][:, g * H:(g + 1) * H] for g in range(3)]
        wh = [lyr["w_hh_t"][:, g * H:(g + 1) * H] for g in range(3)]
        bi = [lyr["b_ih"][:, g * H:(g + 1) * H] for g in range(3)]
        bh = [lyr["b_hh"][:, g * H:(g + 1) * H] for g in range(3)]
        w_ih = jnp.concatenate([pad_cols(pad_rows(w, d_in_p)) for w in wi],
                               axis=1).astype(jnp.bfloat16)
        w_hh = jnp.concatenate([pad_cols(pad_rows(w, HP)) for w in wh],
                               axis=1).astype(jnp.bfloat16)
        b_comb = jnp.concatenate(
            [pad_cols(bi[0] + bh[0]), pad_cols(bi[1] + bh[1]), pad_cols(bi[2])], axis=1)
        b_hh_n = pad_cols(bh[2])
        layers.append({"w_ih": w_ih, "w_hh": w_hh, "b_comb": b_comb, "b_hh_n": b_hh_n})

    fc_w = jnp.pad(params["fc_w_t"], ((0, HP - params["fc_w_t"].shape[0]), (0, 0)))
    return {"layers": layers, "fc_w": fc_w, "fc_b": params["fc_b"]}


# ----------------------------------------------------------------------------
# Pure-JAX f32 reference (unpadded params) for correctness check
# ----------------------------------------------------------------------------
def gru_student_forward_ref(x_btd, params):
    x = jnp.transpose(x_btd, (1, 0, 2))  # (T, B, D)
    h_seq = x
    for layer in params["gru_layers"]:
        H = layer["w_hh_t"].shape[0]
        B = x.shape[1]
        h0 = jnp.zeros((B, H), jnp.float32)

        def step(h_prev, x_t, layer=layer, H=H):
            gi = x_t @ layer["w_ih_t"] + layer["b_ih"]
            gh = h_prev @ layer["w_hh_t"] + layer["b_hh"]
            r = jax.nn.sigmoid(gi[:, :H] + gh[:, :H])
            z = jax.nn.sigmoid(gi[:, H:2 * H] + gh[:, H:2 * H])
            n = jnp.tanh(gi[:, 2 * H:] + r * gh[:, 2 * H:])
            h_new = (1.0 - z) * n + z * h_prev
            return h_new, h_new

        _, h_seq = lax.scan(step, h0, h_seq)
    h_last = h_seq[-1]
    return h_last @ params["fc_w_t"] + params["fc_b"]


# ----------------------------------------------------------------------------
# Deterministic parameter init (PyTorch-style uniform(-1/sqrt(H), 1/sqrt(H)))
# ----------------------------------------------------------------------------
def init_params(key, input_dim, hidden_dim, output_dim, num_layers):
    params = {"gru_layers": []}
    k_gru = 1.0 / np.sqrt(hidden_dim)
    for layer in range(num_layers):
        d_in = input_dim if layer == 0 else hidden_dim
        key, k1, k2, k3, k4 = jax.random.split(key, 5)
        # stored transposed: (d_in, 3H) / (H, 3H); gate order [r | z | n]
        w_ih_t = jax.random.uniform(k1, (d_in, 3 * hidden_dim), jnp.float32, -k_gru, k_gru)
        w_hh_t = jax.random.uniform(k2, (hidden_dim, 3 * hidden_dim), jnp.float32, -k_gru, k_gru)
        b_ih = jax.random.uniform(k3, (1, 3 * hidden_dim), jnp.float32, -k_gru, k_gru)
        b_hh = jax.random.uniform(k4, (1, 3 * hidden_dim), jnp.float32, -k_gru, k_gru)
        params["gru_layers"].append(
            {"w_ih_t": w_ih_t, "w_hh_t": w_hh_t, "b_ih": b_ih, "b_hh": b_hh}
        )
    key, k5, k6 = jax.random.split(key, 3)
    k_fc = 1.0 / np.sqrt(hidden_dim)
    params["fc_w_t"] = jax.random.uniform(k5, (hidden_dim, output_dim), jnp.float32, -k_fc, k_fc)
    params["fc_b"] = jax.random.uniform(k6, (1, output_dim), jnp.float32, -k_fc, k_fc)
    return params


# ----------------------------------------------------------------------------
if __name__ == "__main__":
    # Small shapes consistent with the module's forward: (batch, seq, input_dim)
    B, T, INPUT_DIM, HIDDEN_DIM, OUTPUT_DIM, NUM_LAYERS = 2, 8, 32, 32, 3, 2

    # TODO(synk): nn.GRU's inter-layer dropout(p=0.2) is train-only; the deterministic
    # eval forward implemented here intentionally omits it.

    key = jax.random.PRNGKey(0)
    key, kx, kp = jax.random.split(key, 3)
    x = jax.random.normal(kx, (B, T, INPUT_DIM), dtype=jnp.float32)
    params = init_params(kp, INPUT_DIM, HIDDEN_DIM, OUTPUT_DIM, NUM_LAYERS)

    packed = prepack_params(params)   # once, outside the jitted forward

    out = jax.block_until_ready(gru_student_forward(x, packed))
    ref = jax.block_until_ready(gru_student_forward_ref(x, params))
    # Tolerance note: the kernel stores GRU weights and matmul operands in bf16
    # (f32 accumulate / f32 gate math); vs the pure-f32 reference this contributes
    # ~4e-3 relative weight quantization accumulated over a 2-layer, 8-step
    # recurrence, so 2e-2 leaves comfortable margin while still catching real bugs.
    np.testing.assert_allclose(np.asarray(out), np.asarray(ref), rtol=2e-2, atol=2e-2)
    assert out.shape == (B, OUTPUT_DIM)

    print("KERNEL_OK")
</pallas_src>

<mosaic_0001>
module attributes {stable_mosaic.version = 11 : i64} {
  func.func @kernel(%arg0: memref<2x8x32xf32, #tpu.memory_space<vmem>>, %arg1: memref<32x384xbf16, #tpu.memory_space<vmem>>, %arg2: memref<128x384xbf16, #tpu.memory_space<vmem>>, %arg3: memref<1x384xf32, #tpu.memory_space<vmem>>, %arg4: memref<1x128xf32, #tpu.memory_space<vmem>>, %arg5: memref<128x384xbf16, #tpu.memory_space<vmem>>, %arg6: memref<128x384xbf16, #tpu.memory_space<vmem>>, %arg7: memref<1x384xf32, #tpu.memory_space<vmem>>, %arg8: memref<1x128xf32, #tpu.memory_space<vmem>>, %arg9: memref<128x3xf32, #tpu.memory_space<vmem>>, %arg10: memref<1x3xf32, #tpu.memory_space<vmem>>, %arg11: memref<2x3xf32, #tpu.memory_space<vmem>>, %arg12: memref<8x8x32xf32, #tpu.memory_space<vmem>>, %arg13: memref<8x8x384xf32, #tpu.memory_space<vmem>>, %arg14: memref<8x8x128xf32, #tpu.memory_space<vmem>>) attributes {dimension_semantics = [], scalar_prefetch = 0 : i64, scratch_operands = 3 : i64, tpu.core_type = #tpu.core_type<tc>} {
    %cst = arith.constant 0.000000e+00 : f32
    %0 = vector.broadcast %cst : f32 to vector<8x8x32xf32>
    %c0 = arith.constant 0 : index
    %c0_0 = arith.constant 0 : index
    %c0_1 = arith.constant 0 : index
    %1 = vector.load %arg12[%c0, %c0_0, %c0_1] : memref<8x8x32xf32, #tpu.memory_space<vmem>>, vector<8x8x32xf32>
    tpu.vector_store %arg12[%c0, %c0_0, %c0_1], %0 {strides = array<i32>} : memref<8x8x32xf32, #tpu.memory_space<vmem>>, vector<8x8x32xf32>,
    %c0_2 = arith.constant 0 : index
    %c0_3 = arith.constant 0 : index
    %c0_4 = arith.constant 0 : index
    %2 = vector.load %arg0[%c0_2, %c0_3, %c0_4] : memref<2x8x32xf32, #tpu.memory_space<vmem>>, vector<2x1x32xf32>
    %3 = vector.shape_cast %2 : vector<2x1x32xf32> to vector<2x32xf32>
    %c0_5 = arith.constant 0 : index
    %c0_6 = arith.constant 0 : index
    %c0_7 = arith.constant 0 : index
    %4 = vector.load %arg12[%c0_5, %c0_6, %c0_7] : memref<8x8x32xf32, #tpu.memory_space<vmem>>, vector<1x2x32xf32>
    %5 = vector.shape_cast %4 : vector<1x2x32xf32> to vector<2x32xf32>
    %6 = vector.shape_cast %3 : vector<2x32xf32> to vector<1x2x32xf32>
    tpu.vector_store %arg12[%c0_5, %c0_6, %c0_7], %6 {strides = array<i32>} : memref<8x8x32xf32, #tpu.memory_space<vmem>>, vector<1x2x32xf32>,
    %c0_8 = arith.constant 0 : index
    %c1 = arith.constant 1 : index
    %c0_9 = arith.constant 0 : index
    %7 = vector.load %arg0[%c0_8, %c1, %c0_9] : memref<2x8x32xf32, #tpu.memory_space<vmem>>, vector<2x1x32xf32>
    %8 = vector.shape_cast %7 : vector<2x1x32xf32> to vector<2x32xf32>
    %c1_10 = arith.constant 1 : index
    %c0_11 = arith.constant 0 : index
    %c0_12 = arith.constant 0 : index
    %9 = vector.load %arg12[%c1_10, %c0_11, %c0_12] : memref<8x8x32xf32, #tpu.memory_space<vmem>>, vector<1x2x32xf32>
    %10 = vector.shape_cast %9 : vector<1x2x32xf32> to vector<2x32xf32>
    %11 = vector.shape_cast %8 : vector<2x32xf32> to vector<1x2x32xf32>
    tpu.vector_store %arg12[%c1_10, %c0_11, %c0_12], %11 {strides = array<i32>} : memref<8x8x32xf32, #tpu.memory_space<vmem>>, vector<1x2x32xf32>,
    %c0_13 = arith.constant 0 : index
    %c2 = arith.constant 2 : index
    %c0_14 = arith.constant 0 : index
    %12 = vector.load %arg0[%c0_13, %c2, %c0_14] : memref<2x8x32xf32, #tpu.memory_space<vmem>>, vector<2x1x32xf32>
    %13 = vector.shape_cast %12 : vector<2x1x32xf32> to vector<2x32xf32>
    %c2_15 = arith.constant 2 : index
    %c0_16 = arith.constant 0 : index
    %c0_17 = arith.constant 0 : index
    %14 = vector.load %arg12[%c2_15, %c0_16, %c0_17] : memref<8x8x32xf32, #tpu.memory_space<vmem>>, vector<1x2x32xf32>
    %15 = vector.shape_cast %14 : vector<1x2x32xf32> to vector<2x32xf32>
    %16 = vector.shape_cast %13 : vector<2x32xf32> to vector<1x2x32xf32>
    tpu.vector_store %arg12[%c2_15, %c0_16, %c0_17], %16 {strides = array<i32>} : memref<8x8x32xf32, #tpu.memory_space<vmem>>, vector<1x2x32xf32>,
    %c0_18 = arith.constant 0 : index
    %c3 = arith.constant 3 : index
    %c0_19 = arith.constant 0 : index
    %17 = vector.load %arg0[%c0_18, %c3, %c0_19] : memref<2x8x32xf32, #tpu.memory_space<vmem>>, vector<2x1x32xf32>
    %18 = vector.shape_cast %17 : vector<2x1x32xf32> to vector<2x32xf32>
    %c3_20 = arith.constant 3 : index
    %c0_21 = arith.constant 0 : index
    %c0_22 = arith.constant 0 : index
    %19 = vector.load %arg12[%c3_20, %c0_21, %c0_22] : memref<8x8x32xf32, #tpu.memory_space<vmem>>, vector<1x2x32xf32>
    %20 = vector.shape_cast %19 : vector<1x2x32xf32> to vector<2x32xf32>
    %21 = vector.shape_cast %18 : vector<2x32xf32> to vector<1x2x32xf32>
    tpu.vector_store %arg12[%c3_20, %c0_21, %c0_22], %21 {strides = array<i32>} : memref<8x8x32xf32, #tpu.memory_space<vmem>>, vector<1x2x32xf32>,
    %c0_23 = arith.constant 0 : index
    %c4 = arith.constant 4 : index
    %c0_24 = arith.constant 0 : index
    %22 = vector.load %arg0[%c0_23, %c4, %c0_24] : memref<2x8x32xf32, #tpu.memory_space<vmem>>, vector<2x1x32xf32>
    %23 = vector.shape_cast %22 : vector<2x1x32xf32> to vector<2x32xf32>
    %c4_25 = arith.constant 4 : index
    %c0_26 = arith.constant 0 : index
    %c0_27 = arith.constant 0 : index
    %24 = vector.load %arg12[%c4_25, %c0_26, %c0_27] : memref<8x8x32xf32, #tpu.memory_space<vmem>>, vector<1x2x32xf32>
    %25 = vector.shape_cast %24 : vector<1x2x32xf32> to vector<2x32xf32>
    %26 = vector.shape_cast %23 : vector<2x32xf32> to vector<1x2x32xf32>
    tpu.vector_store %arg12[%c4_25, %c0_26, %c0_27], %26 {strides = array<i32>} : memref<8x8x32xf32, #tpu.memory_space<vmem>>, vector<1x2x32xf32>,
    %c0_28 = arith.constant 0 : index
    %c5 = arith.constant 5 : index
    %c0_29 = arith.constant 0 : index
    %27 = vector.load %arg0[%c0_28, %c5, %c0_29] : memref<2x8x32xf32, #tpu.memory_space<vmem>>, vector<2x1x32xf32>
    %28 = vector.shape_cast %27 : vector<2x1x32xf32> to vector<2x32xf32>
    %c5_30 = arith.constant 5 : index
    %c0_31 = arith.constant 0 : index
    %c0_32 = arith.constant 0 : index
    %29 = vector.load %arg12[%c5_30, %c0_31, %c0_32] : memref<8x8x32xf32, #tpu.memory_space<vmem>>, vector<1x2x32xf32>
    %30 = vector.shape_cast %29 : vector<1x2x32xf32> to vector<2x32xf32>
    %31 = vector.shape_cast %28 : vector<2x32xf32> to vector<1x2x32xf32>
    tpu.vector_store %arg12[%c5_30, %c0_31, %c0_32], %31 {strides = array<i32>} : memref<8x8x32xf32, #tpu.memory_space<vmem>>, vector<1x2x32xf32>,
    %c0_33 = arith.constant 0 : index
    %c6 = arith.constant 6 : index
    %c0_34 = arith.constant 0 : index
    %32 = vector.load %arg0[%c0_33, %c6, %c0_34] : memref<2x8x32xf32, #tpu.memory_space<vmem>>, vector<2x1x32xf32>
    %33 = vector.shape_cast %32 : vector<2x1x32xf32> to vector<2x32xf32>
    %c6_35 = arith.constant 6 : index
    %c0_36 = arith.constant 0 : index
    %c0_37 = arith.constant 0 : index
    %34 = vector.load %arg12[%c6_35, %c0_36, %c0_37] : memref<8x8x32xf32, #tpu.memory_space<vmem>>, vector<1x2x32xf32>
    %35 = vector.shape_cast %34 : vector<1x2x32xf32> to vector<2x32xf32>
    %36 = vector.shape_cast %33 : vector<2x32xf32> to vector<1x2x32xf32>
    tpu.vector_store %arg12[%c6_35, %c0_36, %c0_37], %36 {strides = array<i32>} : memref<8x8x32xf32, #tpu.memory_space<vmem>>, vector<1x2x32xf32>,
    %c0_38 = arith.constant 0 : index
    %c7 = arith.constant 7 : index
    %c0_39 = arith.constant 0 : index
    %37 = vector.load %arg0[%c0_38, %c7, %c0_39] : memref<2x8x32xf32, #tpu.memory_space<vmem>>, vector<2x1x32xf32>
    %38 = vector.shape_cast %37 : vector<2x1x32xf32> to vector<2x32xf32>
    %c7_40 = arith.constant 7 : index
    %c0_41 = arith.constant 0 : index
    %c0_42 = arith.constant 0 : index
    %39 = vector.load %arg12[%c7_40, %c0_41, %c0_42] : memref<8x8x32xf32, #tpu.memory_space<vmem>>, vector<1x2x32xf32>
    %40 = vector.shape_cast %39 : vector<1x2x32xf32> to vector<2x32xf32>
    %41 = vector.shape_cast %38 : vector<2x32xf32> to vector<1x2x32xf32>
    tpu.vector_store %arg12[%c7_40, %c0_41, %c0_42], %41 {strides = array<i32>} : memref<8x8x32xf32, #tpu.memory_space<vmem>>, vector<1x2x32xf32>,
    %c0_43 = arith.constant 0 : index
    %c0_44 = arith.constant 0 : index
    %c0_45 = arith.constant 0 : index
    %42 = vector.load %arg12[%c0_43, %c0_44, %c0_45] : memref<8x8x32xf32, #tpu.memory_space<vmem>>, vector<8x8x32xf32>
    %43 = vector.shape_cast %42 : vector<8x8x32xf32> to vector<64x32xf32>
    %44 = arith.truncf %43 : vector<64x32xf32> to vector<64x32xbf16>
    %c0_46 = arith.constant 0 : index
    %c0_47 = arith.constant 0 : index
    %45 = vector.load %arg1[%c0_46, %c0_47] : memref<32x384xbf16, #tpu.memory_space<vmem>>, vector<32x384xbf16>
    %cst_48 = arith.constant dense<0.000000e+00> : vector<64x384xf32>
    %46 = tpu.matmul %44, %45, %cst_48 {dimension_numbers = #tpu.dot_dimension_numbers<[1], [0], [0], [1], [0, 0, 1, 1], [], []>} : vector<64x32xbf16>, vector<32x384xbf16>, vector<64x384xf32> -> vector<64x384xf32>
    %c0_49 = arith.constant 0 : index
    %c0_50 = arith.constant 0 : index
    %47 = vector.load %arg3[%c0_49, %c0_50] : memref<1x384xf32, #tpu.memory_space<vmem>>, vector<1x384xf32>
    %48 = vector.broadcast %47 : vector<1x384xf32> to vector<64x384xf32>
    %49 = arith.addf %46, %48 : vector<64x384xf32>
    %50 = vector.shape_cast %49 : vector<64x384xf32> to vector<8x8x384xf32>
    %c0_51 = arith.constant 0 : index
    %c0_52 = arith.constant 0 : index
    %c0_53 = arith.constant 0 : index
    %51 = vector.load %arg13[%c0_51, %c0_52, %c0_53] : memref<8x8x384xf32, #tpu.memory_space<vmem>>, vector<8x8x384xf32>
    tpu.vector_store %arg13[%c0_51, %c0_52, %c0_53], %50 {strides = array<i32>} : memref<8x8x384xf32, #tpu.memory_space<vmem>>, vector<8x8x384xf32>,
    %c0_54 = arith.constant 0 : index
    %c0_55 = arith.constant 0 : index
    %52 = vector.load %arg2[%c0_54, %c0_55] : memref<128x384xbf16, #tpu.memory_space<vmem>>, vector<128x384xbf16>
    %c0_56 = arith.constant 0 : index
    %c0_57 = arith.constant 0 : index
    %53 = vector.load %arg4[%c0_56, %c0_57] : memref<1x128xf32, #tpu.memory_space<vmem>>, vector<1x128xf32>
    %54 = vector.shape_cast %53 : vector<1x128xf32> to vector<1x128xf32>
    %55 = vector.broadcast %54 : vector<1x128xf32> to vector<8x128xf32>
    %c0_58 = arith.constant 0 : index
    %c0_59 = arith.constant 0 : index
    %c0_60 = arith.constant 0 : index
    %56 = vector.load %arg13[%c0_58, %c0_59, %c0_60] : memref<8x8x384xf32, #tpu.memory_space<vmem>>, vector<1x8x384xf32>
    %57 = vector.shape_cast %56 : vector<1x8x384xf32> to vector<8x384xf32>
    %58 = vector.extract_strided_slice %57 {offsets = [0, 0], sizes = [8, 128], strides = [1, 1]} : vector<8x384xf32> to vector<8x128xf32>
    %59 = arith.negf %58 : vector<8x128xf32>
    %60 = math.exp %59 : vector<8x128xf32>
    %cst_61 = arith.constant 1.000000e+00 : f32
    %61 = vector.broadcast %cst_61 : f32 to vector<8x128xf32>
    %62 = arith.addf %61, %60 : vector<8x128xf32>
    %63 = arith.divf %61, %62 : vector<8x128xf32>
    %64 = vector.extract_strided_slice %57 {offsets = [0, 128], sizes = [8, 128], strides = [1, 1]} : vector<8x384xf32> to vector<8x128xf32>
    %65 = arith.negf %64 : vector<8x128xf32>
    %66 = math.exp %65 : vector<8x128xf32>
    %cst_62 = arith.constant 1.000000e+00 : f32
    %67 = vector.broadcast %cst_62 : f32 to vector<8x128xf32>
    %68 = arith.addf %67, %66 : vector<8x128xf32>
    %69 = arith.divf %67, %68 : vector<8x128xf32>
    %70 = vector.extract_strided_slice %57 {offsets = [0, 256], sizes = [8, 128], strides = [1, 1]} : vector<8x384xf32> to vector<8x128xf32>
    %71 = arith.mulf %63, %55 : vector<8x128xf32>
    %72 = arith.addf %70, %71 : vector<8x128xf32>
    %73 = math.tanh %72 : vector<8x128xf32>
    %cst_63 = arith.constant 1.000000e+00 : f32
    %74 = vector.broadcast %cst_63 : f32 to vector<8x128xf32>
    %75 = arith.subf %74, %69 : vector<8x128xf32>
    %76 = arith.mulf %75, %73 : vector<8x128xf32>
    %77 = arith.truncf %76 : vector<8x128xf32> to vector<8x128xbf16>
    %c0_64 = arith.constant 0 : index
    %c0_65 = arith.constant 0 : index
    %c0_66 = arith.constant 0 : index
    %78 = vector.load %arg14[%c0_64, %c0_65, %c0_66] : memref<8x8x128xf32, #tpu.memory_space<vmem>>, vector<1x8x128xf32>
    %79 = vector.shape_cast %78 : vector<1x8x128xf32> to vector<8x128xf32>
    %80 = vector.shape_cast %76 : vector<8x128xf32> to vector<1x8x128xf32>
    tpu.vector_store %arg14[%c0_64, %c0_65, %c0_66], %80 {strides = array<i32>} : memref<8x8x128xf32, #tpu.memory_space<vmem>>, vector<1x8x128xf32>,
    %c1_67 = arith.constant 1 : index
    %c0_68 = arith.constant 0 : index
    %c0_69 = arith.constant 0 : index
    %81 = vector.load %arg13[%c1_67, %c0_68, %c0_69] : memref<8x8x384xf32, #tpu.memory_space<vmem>>, vector<1x8x384xf32>
    %82 = vector.shape_cast %81 : vector<1x8x384xf32> to vector<8x384xf32>
    %cst_70 = arith.constant dense<0.000000e+00> : vector<8x384xf32>
    %83 = tpu.matmul %77, %52, %cst_70 {dimension_numbers = #tpu.dot_dimension_numbers<[1], [0], [0], [1], [0, 0, 1, 1], [], []>} : vector<8x128xbf16>, vector<128x384xbf16>, vector<8x384xf32> -> vector<8x384xf32>
    %84 = vector.extract_strided_slice %82 {offsets = [0, 0], sizes = [8, 128], strides = [1, 1]} : vector<8x384xf32> to vector<8x128xf32>
    %85 = vector.extract_strided_slice %83 {offsets = [0, 0], sizes = [8, 128], strides = [1, 1]} : vector<8x384xf32> to vector<8x128xf32>
    %86 = arith.addf %84, %85 : vector<8x128xf32>
    %87 = arith.negf %86 : vector<8x128xf32>
    %88 = math.exp %87 : vector<8x128xf32>
    %cst_71 = arith.constant 1.000000e+00 : f32
    %89 = vector.broadcast %cst_71 : f32 to vector<8x128xf32>
    %90 = arith.addf %89, %88 : vector<8x128xf32>
    %91 = arith.divf %89, %90 : vector<8x128xf32>
    %92 = vector.extract_strided_slice %82 {offsets = [0, 128], sizes = [8, 128], strides = [1, 1]} : vector<8x384xf32> to vector<8x128xf32>
    %93 = vector.extract_strided_slice %83 {offsets = [0, 128], sizes = [8, 128], strides = [1, 1]} : vector<8x384xf32> to vector<8x128xf32>
    %94 = arith.addf %92, %93 : vector<8x128xf32>
    %95 = arith.negf %94 : vector<8x128xf32>
    %96 = math.exp %95 : vector<8x128xf32>
    %cst_72 = arith.constant 1.000000e+00 : f32
    %97 = vector.broadcast %cst_72 : f32 to vector<8x128xf32>
    %98 = arith.addf %97, %96 : vector<8x128xf32>
    %99 = arith.divf %97, %98 : vector<8x128xf32>
    %100 = vector.extract_strided_slice %82 {offsets = [0, 256], sizes = [8, 128], strides = [1, 1]} : vector<8x384xf32> to vector<8x128xf32>
    %101 = vector.extract_strided_slice %83 {offsets = [0, 256], sizes = [8, 128], strides = [1, 1]} : vector<8x384xf32> to vector<8x128xf32>
    %102 = arith.addf %101, %55 : vector<8x128xf32>
    %103 = arith.mulf %91, %102 : vector<8x128xf32>
    %104 = arith.addf %100, %103 : vector<8x128xf32>
    %105 = math.tanh %104 : vector<8x128xf32>
    %cst_73 = arith.constant 1.000000e+00 : f32
    %106 = vector.broadcast %cst_73 : f32 to vector<8x128xf32>
    %107 = arith.subf %106, %99 : vector<8x128xf32>
    %108 = arith.mulf %107, %105 : vector<8x128xf32>
    %109 = arith.mulf %99, %76 : vector<8x128xf32>
    %110 = arith.addf %108, %109 : vector<8x128xf32>
    %111 = arith.truncf %110 : vector<8x128xf32> to vector<8x128xbf16>
    %c1_74 = arith.constant 1 : index
    %c0_75 = arith.constant 0 : index
    %c0_76 = arith.constant 0 : index
    %112 = vector.load %arg14[%c1_74, %c0_75, %c0_76] : memref<8x8x128xf32, #tpu.memory_space<vmem>>, vector<1x8x128xf32>
    %113 = vector.shape_cast %112 : vector<1x8x128xf32> to vector<8x128xf32>
    %114 = vector.shape_cast %110 : vector<8x128xf32> to vector<1x8x128xf32>
    tpu.vector_store %arg14[%c1_74, %c0_75, %c0_76], %114 {strides = array<i32>} : memref<8x8x128xf32, #tpu.memory_space<vmem>>, vector<1x8x128xf32>,
    %c2_77 = arith.constant 2 : index
    %c0_78 = arith.constant 0 : index
    %c0_79 = arith.constant 0 : index
    %115 = vector.load %arg13[%c2_77, %c0_78, %c0_79] : memref<8x8x384xf32, #tpu.memory_space<vmem>>, vector<1x8x384xf32>
    %116 = vector.shape_cast %115 : vector<1x8x384xf32> to vector<8x384xf32>
    %cst_80 = arith.constant dense<0.000000e+00> : vector<8x384xf32>
    %117 = tpu.matmul %111, %52, %cst_80 {dimension_numbers = #tpu.dot_dimension_numbers<[1], [0], [0], [1], [0, 0, 1, 1], [], []>} : vector<8x128xbf16>, vector<128x384xbf16>, vector<8x384xf32> -> vector<8x384xf32>
    %118 = vector.extract_strided_slice %116 {offsets = [0, 0], sizes = [8, 128], strides = [1, 1]} : vector<8x384xf32> to vector<8x128xf32>
    %119 = vector.extract_strided_slice %117 {offsets = [0, 0], sizes = [8, 128], strides = [1, 1]} : vector<8x384xf32> to vector<8x128xf32>
    %120 = arith.addf %118, %119 : vector<8x128xf32>
    %121 = arith.negf %120 : vector<8x128xf32>
    %122 = math.exp %121 : vector<8x128xf32>
    %cst_81 = arith.constant 1.000000e+00 : f32
    %123 = vector.broadcast %cst_81 : f32 to vector<8x128xf32>
    %124 = arith.addf %123, %122 : vector<8x128xf32>
    %125 = arith.divf %123, %124 : vector<8x128xf32>
    %126 = vector.extract_strided_slice %116 {offsets = [0, 128], sizes = [8, 128], strides = [1, 1]} : vector<8x384xf32> to vector<8x128xf32>
    %127 = vector.extract_strided_slice %117 {offsets = [0, 128], sizes = [8, 128], strides = [1, 1]} : vector<8x384xf32> to vector<8x128xf32>
    %128 = arith.addf %126, %127 : vector<8x128xf32>
    %129 = arith.negf %128 : vector<8x128xf32>
    %130 = math.exp %129 : vector<8x128xf32>
    %cst_82 = arith.constant 1.000000e+00 : f32
    %131 = vector.broadcast %cst_82 : f32 to vector<8x128xf32>
    %132 = arith.addf %131, %130 : vector<8x128xf32>
    %133 = arith.divf %131, %132 : vector<8x128xf32>
    %134 = vector.extract_strided_slice %116 {offsets = [0, 256], sizes = [8, 128], strides = [1, 1]} : vector<8x384xf32> to vector<8x128xf32>
    %135 = vector.extract_strided_slice %117 {offsets = [0, 256], sizes = [8, 128], strides = [1, 1]} : vector<8x384xf32> to vector<8x128xf32>
    %136 = arith.addf %135, %55 : vector<8x128xf32>
    %137 = arith.mulf %125, %136 : vector<8x128xf32>
    %138 = arith.addf %134, %137 : vector<8x128xf32>
    %139 = math.tanh %138 : vector<8x128xf32>
    %cst_83 = arith.constant 1.000000e+00 : f32
    %140 = vector.broadcast %cst_83 : f32 to vector<8x128xf32>
    %141 = arith.subf %140, %133 : vector<8x128xf32>
    %142 = arith.mulf %141, %139 : vector<8x128xf32>
    %143 = arith.mulf %133, %110 : vector<8x128xf32>
    %144 = arith.addf %142, %143 : vector<8x128xf32>
    %145 = arith.truncf %144 : vector<8x128xf32> to vector<8x128xbf16>
    %c2_84 = arith.constant 2 : index
    %c0_85 = arith.constant 0 : index
    %c0_86 = arith.constant 0 : index
    %146 = vector.load %arg14[%c2_84, %c0_85, %c0_86] : memref<8x8x128xf32, #tpu.memory_space<vmem>>, vector<1x8x128xf32>
    %147 = vector.shape_cast %146 : vector<1x8x128xf32> to vector<8x128xf32>
    %148 = vector.shape_cast %144 : vector<8x128xf32> to vector<1x8x128xf32>
    tpu.vector_store %arg14[%c2_84, %c0_85, %c0_86], %148 {strides = array<i32>} : memref<8x8x128xf32, #tpu.memory_space<vmem>>, vector<1x8x128xf32>,
    %c3_87 = arith.constant 3 : index
    %c0_88 = arith.constant 0 : index
    %c0_89 = arith.constant 0 : index
    %149 = vector.load %arg13[%c3_87, %c0_88, %c0_89] : memref<8x8x384xf32, #tpu.memory_space<vmem>>, vector<1x8x384xf32>
    %150 = vector.shape_cast %149 : vector<1x8x384xf32> to vector<8x384xf32>
    %cst_90 = arith.constant dense<0.000000e+00> : vector<8x384xf32>
    %151 = tpu.matmul %145, %52, %cst_90 {dimension_numbers = #tpu.dot_dimension_numbers<[1], [0], [0], [1], [0, 0, 1, 1], [], []>} : vector<8x128xbf16>, vector<128x384xbf16>, vector<8x384xf32> -> vector<8x384xf32>
    %152 = vector.extract_strided_slice %150 {offsets = [0, 0], sizes = [8, 128], strides = [1, 1]} : vector<8x384xf32> to vector<8x128xf32>
    %153 = vector.extract_strided_slice %151 {offsets = [0, 0], sizes = [8, 128], strides = [1, 1]} : vector<8x384xf32> to vector<8x128xf32>
    %154 = arith.addf %152, %153 : vector<8x128xf32>
    %155 = arith.negf %154 : vector<8x128xf32>
    %156 = math.exp %155 : vector<8x128xf32>
    %cst_91 = arith.constant 1.000000e+00 : f32
    %157 = vector.broadcast %cst_91 : f32 to vector<8x128xf32>
    %158 = arith.addf %157, %156 : vector<8x128xf32>
    %159 = arith.divf %157, %158 : vector<8x128xf32>
    %160 = vector.extract_strided_slice %150 {offsets = [0, 128], sizes = [8, 128], strides = [1, 1]} : vector<8x384xf32> to vector<8x128xf32>
    %161 = vector.extract_strided_slice %151 {offsets = [0, 128], sizes = [8, 128], strides = [1, 1]} : vector<8x384xf32> to vector<8x128xf32>
    %162 = arith.addf %160, %161 : vector<8x128xf32>
    %163 = arith.negf %162 : vector<8x128xf32>
    %164 = math.exp %163 : vector<8x128xf32>
    %cst_92 = arith.constant 1.000000e+00 : f32
    %165 = vector.broadcast %cst_92 : f32 to vector<8x128xf32>
    %166 = arith.addf %165, %164 : vector<8x128xf32>
    %167 = arith.divf %165, %166 : vector<8x128xf32>
    %168 = vector.extract_strided_slice %150 {offsets = [0, 256], sizes = [8, 128], strides = [1, 1]} : vector<8x384xf32> to vector<8x128xf32>
    %169 = vector.extract_strided_slice %151 {offsets = [0, 256], sizes = [8, 128], strides = [1, 1]} : vector<8x384xf32> to vector<8x128xf32>
    %170 = arith.addf %169, %55 : vector<8x128xf32>
    %171 = arith.mulf %159, %170 : vector<8x128xf32>
    %172 = arith.addf %168, %171 : vector<8x128xf32>
    %173 = math.tanh %172 : vector<8x128xf32>
    %cst_93 = arith.constant 1.000000e+00 : f32
    %174 = vector.broadcast %cst_93 : f32 to vector<8x128xf32>
    %175 = arith.subf %174, %167 : vector<8x128xf32>
    %176 = arith.mulf %175, %173 : vector<8x128xf32>
    %177 = arith.mulf %167, %144 : vector<8x128xf32>
    %178 = arith.addf %176, %177 : vector<8x128xf32>
    %179 = arith.truncf %178 : vector<8x128xf32> to vector<8x128xbf16>
    %c3_94 = arith.constant 3 : index
    %c0_95 = arith.constant 0 : index
    %c0_96 = arith.constant 0 : index
    %180 = vector.load %arg14[%c3_94, %c0_95, %c0_96] : memref<8x8x128xf32, #tpu.memory_space<vmem>>, vector<1x8x128xf32>
    %181 = vector.shape_cast %180 : vector<1x8x128xf32> to vector<8x128xf32>
    %182 = vector.shape_cast %178 : vector<8x128xf32> to vector<1x8x128xf32>
    tpu.vector_store %arg14[%c3_94, %c0_95, %c0_96], %182 {strides = array<i32>} : memref<8x8x128xf32, #tpu.memory_space<vmem>>, vector<1x8x128xf32>,
    %c4_97 = arith.constant 4 : index
    %c0_98 = arith.constant 0 : index
    %c0_99 = arith.constant 0 : index
    %183 = vector.load %arg13[%c4_97, %c0_98, %c0_99] : memref<8x8x384xf32, #tpu.memory_space<vmem>>, vector<1x8x384xf32>
    %184 = vector.shape_cast %183 : vector<1x8x384xf32> to vector<8x384xf32>
    %cst_100 = arith.constant dense<0.000000e+00> : vector<8x384xf32>
    %185 = tpu.matmul %179, %52, %cst_100 {dimension_numbers = #tpu.dot_dimension_numbers<[1], [0], [0], [1], [0, 0, 1, 1], [], []>} : vector<8x128xbf16>, vector<128x384xbf16>, vector<8x384xf32> -> vector<8x384xf32>
    %186 = vector.extract_strided_slice %184 {offsets = [0, 0], sizes = [8, 128], strides = [1, 1]} : vector<8x384xf32> to vector<8x128xf32>
    %187 = vector.extract_strided_slice %185 {offsets = [0, 0], sizes = [8, 128], strides = [1, 1]} : vector<8x384xf32> to vector<8x128xf32>
    %188 = arith.addf %186, %187 : vector<8x128xf32>
    %189 = arith.negf %188 : vector<8x128xf32>
    %190 = math.exp %189 : vector<8x128xf32>
    %cst_101 = arith.constant 1.000000e+00 : f32
    %191 = vector.broadcast %cst_101 : f32 to vector<8x128xf32>
    %192 = arith.addf %191, %190 : vector<8x128xf32>
    %193 = arith.divf %191, %192 : vector<8x128xf32>
    %194 = vector.extract_strided_slice %184 {offsets = [0, 128], sizes = [8, 128], strides = [1, 1]} : vector<8x384xf32> to vector<8x128xf32>
    %195 = vector.extract_strided_slice %185 {offsets = [0, 128], sizes = [8, 128], strides = [1, 1]} : vector<8x384xf32> to vector<8x128xf32>
    %196 = arith.addf %194, %195 : vector<8x128xf32>
    %197 = arith.negf %196 : vector<8x128xf32>
    %198 = math.exp %197 : vector<8x128xf32>
    %cst_102 = arith.constant 1.000000e+00 : f32
    %199 = vector.broadcast %cst_102 : f32 to vector<8x128xf32>
    %200 = arith.addf %199, %198 : vector<8x128xf32>
    %201 = arith.divf %199, %200 : vector<8x128xf32>
    %202 = vector.extract_strided_slice %184 {offsets = [0, 256], sizes = [8, 128], strides = [1, 1]} : vector<8x384xf32> to vector<8x128xf32>
    %203 = vector.extract_strided_slice %185 {offsets = [0, 256], sizes = [8, 128], strides = [1, 1]} : vector<8x384xf32> to vector<8x128xf32>
    %204 = arith.addf %203, %55 : vector<8x128xf32>
    %205 = arith.mulf %193, %204 : vector<8x128xf32>
    %206 = arith.addf %202, %205 : vector<8x128xf32>
    %207 = math.tanh %206 : vector<8x128xf32>
    %cst_103 = arith.constant 1.000000e+00 : f32
    %208 = vector.broadcast %cst_103 : f32 to vector<8x128xf32>
    %209 = arith.subf %208, %201 : vector<8x128xf32>
    %210 = arith.mulf %209, %207 : vector<8x128xf32>
    %211 = arith.mulf %201, %178 : vector<8x128xf32>
    %212 = arith.addf %210, %211 : vector<8x128xf32>
    %213 = arith.truncf %212 : vector<8x128xf32> to vector<8x128xbf16>
    %c4_104 = arith.constant 4 : index
    %c0_105 = arith.constant 0 : index
    %c0_106 = arith.constant 0 : index
    %214 = vector.load %arg14[%c4_104, %c0_105, %c0_106] : memref<8x8x128xf32, #tpu.memory_space<vmem>>, vector<1x8x128xf32>
    %215 = vector.shape_cast %214 : vector<1x8x128xf32> to vector<8x128xf32>
    %216 = vector.shape_cast %212 : vector<8x128xf32> to vector<1x8x128xf32>
    tpu.vector_store %arg14[%c4_104, %c0_105, %c0_106], %216 {strides = array<i32>} : memref<8x8x128xf32, #tpu.memory_space<vmem>>, vector<1x8x128xf32>,
    %c5_107 = arith.constant 5 : index
    %c0_108 = arith.constant 0 : index
    %c0_109 = arith.constant 0 : index
    %217 = vector.load %arg13[%c5_107, %c0_108, %c0_109] : memref<8x8x384xf32, #tpu.memory_space<vmem>>, vector<1x8x384xf32>
    %218 = vector.shape_cast %217 : vector<1x8x384xf32> to vector<8x384xf32>
    %cst_110 = arith.constant dense<0.000000e+00> : vector<8x384xf32>
    %219 = tpu.matmul %213, %52, %cst_110 {dimension_numbers = #tpu.dot_dimension_numbers<[1], [0], [0], [1], [0, 0, 1, 1], [], []>} : vector<8x128xbf16>, vector<128x384xbf16>, vector<8x384xf32> -> vector<8x384xf32>
    %220 = vector.extract_strided_slice %218 {offsets = [0, 0], sizes = [8, 128], strides = [1, 1]} : vector<8x384xf32> to vector<8x128xf32>
    %221 = vector.extract_strided_slice %219 {offsets = [0, 0], sizes = [8, 128], strides = [1, 1]} : vector<8x384xf32> to vector<8x128xf32>
    %222 = arith.addf %220, %221 : vector<8x128xf32>
    %223 = arith.negf %222 : vector<8x128xf32>
    %224 = math.exp %223 : vector<8x128xf32>
    %cst_111 = arith.constant 1.000000e+00 : f32
    %225 = vector.broadcast %cst_111 : f32 to vector<8x128xf32>
    %226 = arith.addf %225, %224 : vector<8x128xf32>
    %227 = arith.divf %225, %226 : vector<8x128xf32>
    %228 = vector.extract_strided_slice %218 {offsets = [0, 128], sizes = [8, 128], strides = [1, 1]} : vector<8x384xf32> to vector<8x128xf32>
    %229 = vector.extract_strided_slice %219 {offsets = [0, 128], sizes = [8, 128], strides = [1, 1]} : vector<8x384xf32> to vector<8x128xf32>
    %230 = arith.addf %228, %229 : vector<8x128xf32>
    %231 = arith.negf %230 : vector<8x128xf32>
    %232 = math.exp %231 : vector<8x128xf32>
    %cst_112 = arith.constant 1.000000e+00 : f32
    %233 = vector.broadcast %cst_112 : f32 to vector<8x128xf32>
    %234 = arith.addf %233, %232 : vector<8x128xf32>
    %235 = arith.divf %233, %234 : vector<8x128xf32>
    %236 = vector.extract_strided_slice %218 {offsets = [0, 256], sizes = [8, 128], strides = [1, 1]} : vector<8x384xf32> to vector<8x128xf32>
    %237 = vector.extract_strided_slice %219 {offsets = [0, 256], sizes = [8, 128], strides = [1, 1]} : vector<8x384xf32> to vector<8x128xf32>
    %238 = arith.addf %237, %55 : vector<8x128xf32>
    %239 = arith.mulf %227, %238 : vector<8x128xf32>
    %240 = arith.addf %236, %239 : vector<8x128xf32>
    %241 = math.tanh %240 : vector<8x128xf32>
    %cst_113 = arith.constant 1.000000e+00 : f32
    %242 = vector.broadcast %cst_113 : f32 to vector<8x128xf32>
    %243 = arith.subf %242, %235 : vector<8x128xf32>
    %244 = arith.mulf %243, %241 : vector<8x128xf32>
    %245 = arith.mulf %235, %212 : vector<8x128xf32>
    %246 = arith.addf %244, %245 : vector<8x128xf32>
    %247 = arith.truncf %246 : vector<8x128xf32> to vector<8x128xbf16>
    %c5_114 = arith.constant 5 : index
    %c0_115 = arith.constant 0 : index
    %c0_116 = arith.constant 0 : index
    %248 = vector.load %arg14[%c5_114, %c0_115, %c0_116] : memref<8x8x128xf32, #tpu.memory_space<vmem>>, vector<1x8x128xf32>
    %249 = vector.shape_cast %248 : vector<1x8x128xf32> to vector<8x128xf32>
    %250 = vector.shape_cast %246 : vector<8x128xf32> to vector<1x8x128xf32>
    tpu.vector_store %arg14[%c5_114, %c0_115, %c0_116], %250 {strides = array<i32>} : memref<8x8x128xf32, #tpu.memory_space<vmem>>, vector<1x8x128xf32>,
    %c6_117 = arith.constant 6 : index
    %c0_118 = arith.constant 0 : index
    %c0_119 = arith.constant 0 : index
    %251 = vector.load %arg13[%c6_117, %c0_118, %c0_119] : memref<8x8x384xf32, #tpu.memory_space<vmem>>, vector<1x8x384xf32>
    %252 = vector.shape_cast %251 : vector<1x8x384xf32> to vector<8x384xf32>
    %cst_120 = arith.constant dense<0.000000e+00> : vector<8x384xf32>
    %253 = tpu.matmul %247, %52, %cst_120 {dimension_numbers = #tpu.dot_dimension_numbers<[1], [0], [0], [1], [0, 0, 1, 1], [], []>} : vector<8x128xbf16>, vector<128x384xbf16>, vector<8x384xf32> -> vector<8x384xf32>
    %254 = vector.extract_strided_slice %252 {offsets = [0, 0], sizes = [8, 128], strides = [1, 1]} : vector<8x384xf32> to vector<8x128xf32>
    %255 = vector.extract_strided_slice %253 {offsets = [0, 0], sizes = [8, 128], strides = [1, 1]} : vector<8x384xf32> to vector<8x128xf32>
    %256 = arith.addf %254, %255 : vector<8x128xf32>
    %257 = arith.negf %256 : vector<8x128xf32>
    %258 = math.exp %257 : vector<8x128xf32>
    %cst_121 = arith.constant 1.000000e+00 : f32
    %259 = vector.broadcast %cst_121 : f32 to vector<8x128xf32>
    %260 = arith.addf %259, %258 : vector<8x128xf32>
    %261 = arith.divf %259, %260 : vector<8x128xf32>
    %262 = vector.extract_strided_slice %252 {offsets = [0, 128], sizes = [8, 128], strides = [1, 1]} : vector<8x384xf32> to vector<8x128xf32>
    %263 = vector.extract_strided_slice %253 {offsets = [0, 128], sizes = [8, 128], strides = [1, 1]} : vector<8x384xf32> to vector<8x128xf32>
    %264 = arith.addf %262, %263 : vector<8x128xf32>
    %265 = arith.negf %264 : vector<8x128xf32>
    %266 = math.exp %265 : vector<8x128xf32>
    %cst_122 = arith.constant 1.000000e+00 : f32
    %267 = vector.broadcast %cst_122 : f32 to vector<8x128xf32>
    %268 = arith.addf %267, %266 : vector<8x128xf32>
    %269 = arith.divf %267, %268 : vector<8x128xf32>
    %270 = vector.extract_strided_slice %252 {offsets = [0, 256], sizes = [8, 128], strides = [1, 1]} : vector<8x384xf32> to vector<8x128xf32>
    %271 = vector.extract_strided_slice %253 {offsets = [0, 256], sizes = [8, 128], strides = [1, 1]} : vector<8x384xf32> to vector<8x128xf32>
    %272 = arith.addf %271, %55 : vector<8x128xf32>
    %273 = arith.mulf %261, %272 : vector<8x128xf32>
    %274 = arith.addf %270, %273 : vector<8x128xf32>
    %275 = math.tanh %274 : vector<8x128xf32>
    %cst_123 = arith.constant 1.000000e+00 : f32
    %276 = vector.broadcast %cst_123 : f32 to vector<8x128xf32>
    %277 = arith.subf %276, %269 : vector<8x128xf32>
    %278 = arith.mulf %277, %275 : vector<8x128xf32>
    %279 = arith.mulf %269, %246 : vector<8x128xf32>
    %280 = arith.addf %278, %279 : vector<8x128xf32>
    %281 = arith.truncf %280 : vector<8x128xf32> to vector<8x128xbf16>
    %c6_124 = arith.constant 6 : index
    %c0_125 = arith.constant 0 : index
    %c0_126 = arith.constant 0 : index
    %282 = vector.load %arg14[%c6_124, %c0_125, %c0_126] : memref<8x8x128xf32, #tpu.memory_space<vmem>>, vector<1x8x128xf32>
    %283 = vector.shape_cast %282 : vector<1x8x128xf32> to vector<8x128xf32>
    %284 = vector.shape_cast %280 : vector<8x128xf32> to vector<1x8x128xf32>
    tpu.vector_store %arg14[%c6_124, %c0_125, %c0_126], %284 {strides = array<i32>} : memref<8x8x128xf32, #tpu.memory_space<vmem>>, vector<1x8x128xf32>,
    %c7_127 = arith.constant 7 : index
    %c0_128 = arith.constant 0 : index
    %c0_129 = arith.constant 0 : index
    %285 = vector.load %arg13[%c7_127, %c0_128, %c0_129] : memref<8x8x384xf32, #tpu.memory_space<vmem>>, vector<1x8x384xf32>
    %286 = vector.shape_cast %285 : vector<1x8x384xf32> to vector<8x384xf32>
    %cst_130 = arith.constant dense<0.000000e+00> : vector<8x384xf32>
    %287 = tpu.matmul %281, %52, %cst_130 {dimension_numbers = #tpu.dot_dimension_numbers<[1], [0], [0], [1], [0, 0, 1, 1], [], []>} : vector<8x128xbf16>, vector<128x384xbf16>, vector<8x384xf32> -> vector<8x384xf32>
    %288 = vector.extract_strided_slice %286 {offsets = [0, 0], sizes = [8, 128], strides = [1, 1]} : vector<8x384xf32> to vector<8x128xf32>
    %289 = vector.extract_strided_slice %287 {offsets = [0, 0], sizes = [8, 128], strides = [1, 1]} : vector<8x384xf32> to vector<8x128xf32>
    %290 = arith.addf %288, %289 : vector<8x128xf32>
    %291 = arith.negf %290 : vector<8x128xf32>
    %292 = math.exp %291 : vector<8x128xf32>
    %cst_131 = arith.constant 1.000000e+00 : f32
    %293 = vector.broadcast %cst_131 : f32 to vector<8x128xf32>
    %294 = arith.addf %293, %292 : vector<8x128xf32>
    %295 = arith.divf %293, %294 : vector<8x128xf32>
    %296 = vector.extract_strided_slice %286 {offsets = [0, 128], sizes = [8, 128], strides = [1, 1]} : vector<8x384xf32> to vector<8x128xf32>
    %297 = vector.extract_strided_slice %287 {offsets = [0, 128], sizes = [8, 128], strides = [1, 1]} : vector<8x384xf32> to vector<8x128xf32>
    %298 = arith.addf %296, %297 : vector<8x128xf32>
    %299 = arith.negf %298 : vector<8x128xf32>
    %300 = math.exp %299 : vector<8x128xf32>
    %cst_132 = arith.constant 1.000000e+00 : f32
    %301 = vector.broadcast %cst_132 : f32 to vector<8x128xf32>
    %302 = arith.addf %301, %300 : vector<8x128xf32>
    %303 = arith.divf %301, %302 : vector<8x128xf32>
    %304 = vector.extract_strided_slice %286 {offsets = [0, 256], sizes = [8, 128], strides = [1, 1]} : vector<8x384xf32> to vector<8x128xf32>
    %305 = vector.extract_strided_slice %287 {offsets = [0, 256], sizes = [8, 128], strides = [1, 1]} : vector<8x384xf32> to vector<8x128xf32>
    %306 = arith.addf %305, %55 : vector<8x128xf32>
    %307 = arith.mulf %295, %306 : vector<8x128xf32>
    %308 = arith.addf %304, %307 : vector<8x128xf32>
    %309 = math.tanh %308 : vector<8x128xf32>
    %cst_133 = arith.constant 1.000000e+00 : f32
    %310 = vector.broadcast %cst_133 : f32 to vector<8x128xf32>
    %311 = arith.subf %310, %303 : vector<8x128xf32>
    %312 = arith.mulf %311, %309 : vector<8x128xf32>
    %313 = arith.mulf %303, %280 : vector<8x128xf32>
    %314 = arith.addf %312, %313 : vector<8x128xf32>
    %c7_134 = arith.constant 7 : index
    %c0_135 = arith.constant 0 : index
    %c0_136 = arith.constant 0 : index
    %315 = vector.load %arg14[%c7_134, %c0_135, %c0_136] : memref<8x8x128xf32, #tpu.memory_space<vmem>>, vector<1x8x128xf32>
    %316 = vector.shape_cast %315 : vector<1x8x128xf32> to vector<8x128xf32>
    %317 = vector.shape_cast %314 : vector<8x128xf32> to vector<1x8x128xf32>
    tpu.vector_store %arg14[%c7_134, %c0_135, %c0_136], %317 {strides = array<i32>} : memref<8x8x128xf32, #tpu.memory_space<vmem>>, vector<1x8x128xf32>,
    %c0_137 = arith.constant 0 : index
    %c0_138 = arith.constant 0 : index
    %c0_139 = arith.constant 0 : index
    %318 = vector.load %arg14[%c0_137, %c0_138, %c0_139] : memref<8x8x128xf32, #tpu.memory_space<vmem>>, vector<8x8x128xf32>
    %319 = vector.shape_cast %318 : vector<8x8x128xf32> to vector<64x128xf32>
    %320 = arith.truncf %319 : vector<64x128xf32> to vector<64x128xbf16>
    %c0_140 = arith.constant 0 : index
    %c0_141 = arith.constant 0 : index
    %321 = vector.load %arg5[%c0_140, %c0_141] : memref<128x384xbf16, #tpu.memory_space<vmem>>, vector<128x384xbf16>
    %cst_142 = arith.constant dense<0.000000e+00> : vector<64x384xf32>
    %322 = tpu.matmul %320, %321, %cst_142 {dimension_numbers = #tpu.dot_dimension_numbers<[1], [0], [0], [1], [0, 0, 1, 1], [], []>} : vector<64x128xbf16>, vector<128x384xbf16>, vector<64x384xf32> -> vector<64x384xf32>
    %c0_143 = arith.constant 0 : index
    %c0_144 = arith.constant 0 : index
    %323 = vector.load %arg7[%c0_143, %c0_144] : memref<1x384xf32, #tpu.memory_space<vmem>>, vector<1x384xf32>
    %324 = vector.broadcast %323 : vector<1x384xf32> to vector<64x384xf32>
    %325 = arith.addf %322, %324 : vector<64x384xf32>
    %326 = vector.shape_cast %325 : vector<64x384xf32> to vector<8x8x384xf32>
    %c0_145 = arith.constant 0 : index
    %c0_146 = arith.constant 0 : index
    %c0_147 = arith.constant 0 : index
    %327 = vector.load %arg13[%c0_145, %c0_146, %c0_147] : memref<8x8x384xf32, #tpu.memory_space<vmem>>, vector<8x8x384xf32>
    tpu.vector_store %arg13[%c0_145, %c0_146, %c0_147], %326 {strides = array<i32>} : memref<8x8x384xf32, #tpu.memory_space<vmem>>, vector<8x8x384xf32>,
    %c0_148 = arith.constant 0 : index
    %c0_149 = arith.constant 0 : index
    %328 = vector.load %arg6[%c0_148, %c0_149] : memref<128x384xbf16, #tpu.memory_space<vmem>>, vector<128x384xbf16>
    %c0_150 = arith.constant 0 : index
    %c0_151 = arith.constant 0 : index
    %329 = vector.load %arg8[%c0_150, %c0_151] : memref<1x128xf32, #tpu.memory_space<vmem>>, vector<1x128xf32>
    %330 = vector.shape_cast %329 : vector<1x128xf32> to vector<1x128xf32>
    %331 = vector.broadcast %330 : vector<1x128xf32> to vector<8x128xf32>
    %c0_152 = arith.constant 0 : index
    %c0_153 = arith.constant 0 : index
    %c0_154 = arith.constant 0 : index
    %332 = vector.load %arg13[%c0_152, %c0_153, %c0_154] : memref<8x8x384xf32, #tpu.memory_space<vmem>>, vector<1x8x384xf32>
    %333 = vector.shape_cast %332 : vector<1x8x384xf32> to vector<8x384xf32>
    %334 = vector.extract_strided_slice %333 {offsets = [0, 0], sizes = [8, 128], strides = [1, 1]} : vector<8x384xf32> to vector<8x128xf32>
    %335 = arith.negf %334 : vector<8x128xf32>
    %336 = math.exp %335 : vector<8x128xf32>
    %cst_155 = arith.constant 1.000000e+00 : f32
    %337 = vector.broadcast %cst_155 : f32 to vector<8x128xf32>
    %338 = arith.addf %337, %336 : vector<8x128xf32>
    %339 = arith.divf %337, %338 : vector<8x128xf32>
    %340 = vector.extract_strided_slice %333 {offsets = [0, 128], sizes = [8, 128], strides = [1, 1]} : vector<8x384xf32> to vector<8x128xf32>
    %341 = arith.negf %340 : vector<8x128xf32>
    %342 = math.exp %341 : vector<8x128xf32>
    %cst_156 = arith.constant 1.000000e+00 : f32
    %343 = vector.broadcast %cst_156 : f32 to vector<8x128xf32>
    %344 = arith.addf %343, %342 : vector<8x128xf32>
    %345 = arith.divf %343, %344 : vector<8x128xf32>
    %346 = vector.extract_strided_slice %333 {offsets = [0, 256], sizes = [8, 128], strides = [1, 1]} : vector<8x384xf32> to vector<8x128xf32>
    %347 = arith.mulf %339, %331 : vector<8x128xf32>
    %348 = arith.addf %346, %347 : vector<8x128xf32>
    %349 = math.tanh %348 : vector<8x128xf32>
    %cst_157 = arith.constant 1.000000e+00 : f32
    %350 = vector.broadcast %cst_157 : f32 to vector<8x128xf32>
    %351 = arith.subf %350, %345 : vector<8x128xf32>
    %352 = arith.mulf %351, %349 : vector<8x128xf32>
    %353 = arith.truncf %352 : vector<8x128xf32> to vector<8x128xbf16>
    %c1_158 = arith.constant 1 : index
    %c0_159 = arith.constant 0 : index
    %c0_160 = arith.constant 0 : index
    %354 = vector.load %arg13[%c1_158, %c0_159, %c0_160] : memref<8x8x384xf32, #tpu.memory_space<vmem>>, vector<1x8x384xf32>
    %355 = vector.shape_cast %354 : vector<1x8x384xf32> to vector<8x384xf32>
    %cst_161 = arith.constant dense<0.000000e+00> : vector<8x384xf32>
    %356 = tpu.matmul %353, %328, %cst_161 {dimension_numbers = #tpu.dot_dimension_numbers<[1], [0], [0], [1], [0, 0, 1, 1], [], []>} : vector<8x128xbf16>, vector<128x384xbf16>, vector<8x384xf32> -> vector<8x384xf32>
    %357 = vector.extract_strided_slice %355 {offsets = [0, 0], sizes = [8, 128], strides = [1, 1]} : vector<8x384xf32> to vector<8x128xf32>
    %358 = vector.extract_strided_slice %356 {offsets = [0, 0], sizes = [8, 128], strides = [1, 1]} : vector<8x384xf32> to vector<8x128xf32>
    %359 = arith.addf %357, %358 : vector<8x128xf32>
    %360 = arith.negf %359 : vector<8x128xf32>
    %361 = math.exp %360 : vector<8x128xf32>
    %cst_162 = arith.constant 1.000000e+00 : f32
    %362 = vector.broadcast %cst_162 : f32 to vector<8x128xf32>
    %363 = arith.addf %362, %361 : vector<8x128xf32>
    %364 = arith.divf %362, %363 : vector<8x128xf32>
    %365 = vector.extract_strided_slice %355 {offsets = [0, 128], sizes = [8, 128], strides = [1, 1]} : vector<8x384xf32> to vector<8x128xf32>
    %366 = vector.extract_strided_slice %356 {offsets = [0, 128], sizes = [8, 128], strides = [1, 1]} : vector<8x384xf32> to vector<8x128xf32>
    %367 = arith.addf %365, %366 : vector<8x128xf32>
    %368 = arith.negf %367 : vector<8x128xf32>
    %369 = math.exp %368 : vector<8x128xf32>
    %cst_163 = arith.constant 1.000000e+00 : f32
    %370 = vector.broadcast %cst_163 : f32 to vector<8x128xf32>
    %371 = arith.addf %370, %369 : vector<8x128xf32>
    %372 = arith.divf %370, %371 : vector<8x128xf32>
    %373 = vector.extract_strided_slice %355 {offsets = [0, 256], sizes = [8, 128], strides = [1, 1]} : vector<8x384xf32> to vector<8x128xf32>
    %374 = vector.extract_strided_slice %356 {offsets = [0, 256], sizes = [8, 128], strides = [1, 1]} : vector<8x384xf32> to vector<8x128xf32>
    %375 = arith.addf %374, %331 : vector<8x128xf32>
    %376 = arith.mulf %364, %375 : vector<8x128xf32>
    %377 = arith.addf %373, %376 : vector<8x128xf32>
    %378 = math.tanh %377 : vector<8x128xf32>
    %cst_164 = arith.constant 1.000000e+00 : f32
    %379 = vector.broadcast %cst_164 : f32 to vector<8x128xf32>
    %380 = arith.subf %379, %372 : vector<8x128xf32>
    %381 = arith.mulf %380, %378 : vector<8x128xf32>
    %382 = arith.mulf %372, %352 : vector<8x128xf32>
    %383 = arith.addf %381, %382 : vector<8x128xf32>
    %384 = arith.truncf %383 : vector<8x128xf32> to vector<8x128xbf16>
    %c2_165 = arith.constant 2 : index
    %c0_166 = arith.constant 0 : index
    %c0_167 = arith.constant 0 : index
    %385 = vector.load %arg13[%c2_165, %c0_166, %c0_167] : memref<8x8x384xf32, #tpu.memory_space<vmem>>, vector<1x8x384xf32>
    %386 = vector.shape_cast %385 : vector<1x8x384xf32> to vector<8x384xf32>
    %cst_168 = arith.constant dense<0.000000e+00> : vector<8x384xf32>
    %387 = tpu.matmul %384, %328, %cst_168 {dimension_numbers = #tpu.dot_dimension_numbers<[1], [0], [0], [1], [0, 0, 1, 1], [], []>} : vector<8x128xbf16>, vector<128x384xbf16>, vector<8x384xf32> -> vector<8x384xf32>
    %388 = vector.extract_strided_slice %386 {offsets = [0, 0], sizes = [8, 128], strides = [1, 1]} : vector<8x384xf32> to vector<8x128xf32>
    %389 = vector.extract_strided_slice %387 {offsets = [0, 0], sizes = [8, 128], strides = [1, 1]} : vector<8x384xf32> to vector<8x128xf32>
    %390 = arith.addf %388, %389 : vector<8x128xf32>
    %391 = arith.negf %390 : vector<8x128xf32>
    %392 = math.exp %391 : vector<8x128xf32>
    %cst_169 = arith.constant 1.000000e+00 : f32
    %393 = vector.broadcast %cst_169 : f32 to vector<8x128xf32>
    %394 = arith.addf %393, %392 : vector<8x128xf32>
    %395 = arith.divf %393, %394 : vector<8x128xf32>
    %396 = vector.extract_strided_slice %386 {offsets = [0, 128], sizes = [8, 128], strides = [1, 1]} : vector<8x384xf32> to vector<8x128xf32>
    %397 = vector.extract_strided_slice %387 {offsets = [0, 128], sizes = [8, 128], strides = [1, 1]} : vector<8x384xf32> to vector<8x128xf32>
    %398 = arith.addf %396, %397 : vector<8x128xf32>
    %399 = arith.negf %398 : vector<8x128xf32>
    %400 = math.exp %399 : vector<8x128xf32>
    %cst_170 = arith.constant 1.000000e+00 : f32
    %401 = vector.broadcast %cst_170 : f32 to vector<8x128xf32>
    %402 = arith.addf %401, %400 : vector<8x128xf32>
    %403 = arith.divf %401, %402 : vector<8x128xf32>
    %404 = vector.extract_strided_slice %386 {offsets = [0, 256], sizes = [8, 128], strides = [1, 1]} : vector<8x384xf32> to vector<8x128xf32>
    %405 = vector.extract_strided_slice %387 {offsets = [0, 256], sizes = [8, 128], strides = [1, 1]} : vector<8x384xf32> to vector<8x128xf32>
    %406 = arith.addf %405, %331 : vector<8x128xf32>
    %407 = arith.mulf %395, %406 : vector<8x128xf32>
    %408 = arith.addf %404, %407 : vector<8x128xf32>
    %409 = math.tanh %408 : vector<8x128xf32>
    %cst_171 = arith.constant 1.000000e+00 : f32
    %410 = vector.broadcast %cst_171 : f32 to vector<8x128xf32>
    %411 = arith.subf %410, %403 : vector<8x128xf32>
    %412 = arith.mulf %411, %409 : vector<8x128xf32>
    %413 = arith.mulf %403, %383 : vector<8x128xf32>
    %414 = arith.addf %412, %413 : vector<8x128xf32>
    %415 = arith.truncf %414 : vector<8x128xf32> to vector<8x128xbf16>
    %c3_172 = arith.constant 3 : index
    %c0_173 = arith.constant 0 : index
    %c0_174 = arith.constant 0 : index
    %416 = vector.load %arg13[%c3_172, %c0_173, %c0_174] : memref<8x8x384xf32, #tpu.memory_space<vmem>>, vector<1x8x384xf32>
    %417 = vector.shape_cast %416 : vector<1x8x384xf32> to vector<8x384xf32>
    %cst_175 = arith.constant dense<0.000000e+00> : vector<8x384xf32>
    %418 = tpu.matmul %415, %328, %cst_175 {dimension_numbers = #tpu.dot_dimension_numbers<[1], [0], [0], [1], [0, 0, 1, 1], [], []>} : vector<8x128xbf16>, vector<128x384xbf16>, vector<8x384xf32> -> vector<8x384xf32>
    %419 = vector.extract_strided_slice %417 {offsets = [0, 0], sizes = [8, 128], strides = [1, 1]} : vector<8x384xf32> to vector<8x128xf32>
    %420 = vector.extract_strided_slice %418 {offsets = [0, 0], sizes = [8, 128], strides = [1, 1]} : vector<8x384xf32> to vector<8x128xf32>
    %421 = arith.addf %419, %420 : vector<8x128xf32>
    %422 = arith.negf %421 : vector<8x128xf32>
    %423 = math.exp %422 : vector<8x128xf32>
    %cst_176 = arith.constant 1.000000e+00 : f32
    %424 = vector.broadcast %cst_176 : f32 to vector<8x128xf32>
    %425 = arith.addf %424, %423 : vector<8x128xf32>
    %426 = arith.divf %424, %425 : vector<8x128xf32>
    %427 = vector.extract_strided_slice %417 {offsets = [0, 128], sizes = [8, 128], strides = [1, 1]} : vector<8x384xf32> to vector<8x128xf32>
    %428 = vector.extract_strided_slice %418 {offsets = [0, 128], sizes = [8, 128], strides = [1, 1]} : vector<8x384xf32> to vector<8x128xf32>
    %429 = arith.addf %427, %428 : vector<8x128xf32>
    %430 = arith.negf %429 : vector<8x128xf32>
    %431 = math.exp %430 : vector<8x128xf32>
    %cst_177 = arith.constant 1.000000e+00 : f32
    %432 = vector.broadcast %cst_177 : f32 to vector<8x128xf32>
    %433 = arith.addf %432, %431 : vector<8x128xf32>
    %434 = arith.divf %432, %433 : vector<8x128xf32>
    %435 = vector.extract_strided_slice %417 {offsets = [0, 256], sizes = [8, 128], strides = [1, 1]} : vector<8x384xf32> to vector<8x128xf32>
    %436 = vector.extract_strided_slice %418 {offsets = [0, 256], sizes = [8, 128], strides = [1, 1]} : vector<8x384xf32> to vector<8x128xf32>
    %437 = arith.addf %436, %331 : vector<8x128xf32>
    %438 = arith.mulf %426, %437 : vector<8x128xf32>
    %439 = arith.addf %435, %438 : vector<8x128xf32>
    %440 = math.tanh %439 : vector<8x128xf32>
    %cst_178 = arith.constant 1.000000e+00 : f32
    %441 = vector.broadcast %cst_178 : f32 to vector<8x128xf32>
    %442 = arith.subf %441, %434 : vector<8x128xf32>
    %443 = arith.mulf %442, %440 : vector<8x128xf32>
    %444 = arith.mulf %434, %414 : vector<8x128xf32>
    %445 = arith.addf %443, %444 : vector<8x128xf32>
    %446 = arith.truncf %445 : vector<8x128xf32> to vector<8x128xbf16>
    %c4_179 = arith.constant 4 : index
    %c0_180 = arith.constant 0 : index
    %c0_181 = arith.constant 0 : index
    %447 = vector.load %arg13[%c4_179, %c0_180, %c0_181] : memref<8x8x384xf32, #tpu.memory_space<vmem>>, vector<1x8x384xf32>
    %448 = vector.shape_cast %447 : vector<1x8x384xf32> to vector<8x384xf32>
    %cst_182 = arith.constant dense<0.000000e+00> : vector<8x384xf32>
    %449 = tpu.matmul %446, %328, %cst_182 {dimension_numbers = #tpu.dot_dimension_numbers<[1], [0], [0], [1], [0, 0, 1, 1], [], []>} : vector<8x128xbf16>, vector<128x384xbf16>, vector<8x384xf32> -> vector<8x384xf32>
    %450 = vector.extract_strided_slice %448 {offsets = [0, 0], sizes = [8, 128], strides = [1, 1]} : vector<8x384xf32> to vector<8x128xf32>
    %451 = vector.extract_strided_slice %449 {offsets = [0, 0], sizes = [8, 128], strides = [1, 1]} : vector<8x384xf32> to vector<8x128xf32>
    %452 = arith.addf %450, %451 : vector<8x128xf32>
    %453 = arith.negf %452 : vector<8x128xf32>
    %454 = math.exp %453 : vector<8x128xf32>
    %cst_183 = arith.constant 1.000000e+00 : f32
    %455 = vector.broadcast %cst_183 : f32 to vector<8x128xf32>
    %456 = arith.addf %455, %454 : vector<8x128xf32>
    %457 = arith.divf %455, %456 : vector<8x128xf32>
    %458 = vector.extract_strided_slice %448 {offsets = [0, 128], sizes = [8, 128], strides = [1, 1]} : vector<8x384xf32> to vector<8x128xf32>
    %459 = vector.extract_strided_slice %449 {offsets = [0, 128], sizes = [8, 128], strides = [1, 1]} : vector<8x384xf32> to vector<8x128xf32>
    %460 = arith.addf %458, %459 : vector<8x128xf32>
    %461 = arith.negf %460 : vector<8x128xf32>
    %462 = math.exp %461 : vector<8x128xf32>
    %cst_184 = arith.constant 1.000000e+00 : f32
    %463 = vector.broadcast %cst_184 : f32 to vector<8x128xf32>
    %464 = arith.addf %463, %462 : vector<8x128xf32>
    %465 = arith.divf %463, %464 : vector<8x128xf32>
    %466 = vector.extract_strided_slice %448 {offsets = [0, 256], sizes = [8, 128], strides = [1, 1]} : vector<8x384xf32> to vector<8x128xf32>
    %467 = vector.extract_strided_slice %449 {offsets = [0, 256], sizes = [8, 128], strides = [1, 1]} : vector<8x384xf32> to vector<8x128xf32>
    %468 = arith.addf %467, %331 : vector<8x128xf32>
    %469 = arith.mulf %457, %468 : vector<8x128xf32>
    %470 = arith.addf %466, %469 : vector<8x128xf32>
    %471 = math.tanh %470 : vector<8x128xf32>
    %cst_185 = arith.constant 1.000000e+00 : f32
    %472 = vector.broadcast %cst_185 : f32 to vector<8x128xf32>
    %473 = arith.subf %472, %465 : vector<8x128xf32>
    %474 = arith.mulf %473, %471 : vector<8x128xf32>
    %475 = arith.mulf %465, %445 : vector<8x128xf32>
    %476 = arith.addf %474, %475 : vector<8x128xf32>
    %477 = arith.truncf %476 : vector<8x128xf32> to vector<8x128xbf16>
    %c5_186 = arith.constant 5 : index
    %c0_187 = arith.constant 0 : index
    %c0_188 = arith.constant 0 : index
    %478 = vector.load %arg13[%c5_186, %c0_187, %c0_188] : memref<8x8x384xf32, #tpu.memory_space<vmem>>, vector<1x8x384xf32>
    %479 = vector.shape_cast %478 : vector<1x8x384xf32> to vector<8x384xf32>
    %cst_189 = arith.constant dense<0.000000e+00> : vector<8x384xf32>
    %480 = tpu.matmul %477, %328, %cst_189 {dimension_numbers = #tpu.dot_dimension_numbers<[1], [0], [0], [1], [0, 0, 1, 1], [], []>} : vector<8x128xbf16>, vector<128x384xbf16>, vector<8x384xf32> -> vector<8x384xf32>
    %481 = vector.extract_strided_slice %479 {offsets = [0, 0], sizes = [8, 128], strides = [1, 1]} : vector<8x384xf32> to vector<8x128xf32>
    %482 = vector.extract_strided_slice %480 {offsets = [0, 0], sizes = [8, 128], strides = [1, 1]} : vector<8x384xf32> to vector<8x128xf32>
    %483 = arith.addf %481, %482 : vector<8x128xf32>
    %484 = arith.negf %483 : vector<8x128xf32>
    %485 = math.exp %484 : vector<8x128xf32>
    %cst_190 = arith.constant 1.000000e+00 : f32
    %486 = vector.broadcast %cst_190 : f32 to vector<8x128xf32>
    %487 = arith.addf %486, %485 : vector<8x128xf32>
    %488 = arith.divf %486, %487 : vector<8x128xf32>
    %489 = vector.extract_strided_slice %479 {offsets = [0, 128], sizes = [8, 128], strides = [1, 1]} : vector<8x384xf32> to vector<8x128xf32>
    %490 = vector.extract_strided_slice %480 {offsets = [0, 128], sizes = [8, 128], strides = [1, 1]} : vector<8x384xf32> to vector<8x128xf32>
    %491 = arith.addf %489, %490 : vector<8x128xf32>
    %492 = arith.negf %491 : vector<8x128xf32>
    %493 = math.exp %492 : vector<8x128xf32>
    %cst_191 = arith.constant 1.000000e+00 : f32
    %494 = vector.broadcast %cst_191 : f32 to vector<8x128xf32>
    %495 = arith.addf %494, %493 : vector<8x128xf32>
    %496 = arith.divf %494, %495 : vector<8x128xf32>
    %497 = vector.extract_strided_slice %479 {offsets = [0, 256], sizes = [8, 128], strides = [1, 1]} : vector<8x384xf32> to vector<8x128xf32>
    %498 = vector.extract_strided_slice %480 {offsets = [0, 256], sizes = [8, 128], strides = [1, 1]} : vector<8x384xf32> to vector<8x128xf32>
    %499 = arith.addf %498, %331 : vector<8x128xf32>
    %500 = arith.mulf %488, %499 : vector<8x128xf32>
    %501 = arith.addf %497, %500 : vector<8x128xf32>
    %502 = math.tanh %501 : vector<8x128xf32>
    %cst_192 = arith.constant 1.000000e+00 : f32
    %503 = vector.broadcast %cst_192 : f32 to vector<8x128xf32>
    %504 = arith.subf %503, %496 : vector<8x128xf32>
    %505 = arith.mulf %504, %502 : vector<8x128xf32>
    %506 = arith.mulf %496, %476 : vector<8x128xf32>
    %507 = arith.addf %505, %506 : vector<8x128xf32>
    %508 = arith.truncf %507 : vector<8x128xf32> to vector<8x128xbf16>
    %c6_193 = arith.constant 6 : index
    %c0_194 = arith.constant 0 : index
    %c0_195 = arith.constant 0 : index
    %509 = vector.load %arg13[%c6_193, %c0_194, %c0_195] : memref<8x8x384xf32, #tpu.memory_space<vmem>>, vector<1x8x384xf32>
    %510 = vector.shape_cast %509 : vector<1x8x384xf32> to vector<8x384xf32>
    %cst_196 = arith.constant dense<0.000000e+00> : vector<8x384xf32>
    %511 = tpu.matmul %508, %328, %cst_196 {dimension_numbers = #tpu.dot_dimension_numbers<[1], [0], [0], [1], [0, 0, 1, 1], [], []>} : vector<8x128xbf16>, vector<128x384xbf16>, vector<8x384xf32> -> vector<8x384xf32>
    %512 = vector.extract_strided_slice %510 {offsets = [0, 0], sizes = [8, 128], strides = [1, 1]} : vector<8x384xf32> to vector<8x128xf32>
    %513 = vector.extract_strided_slice %511 {offsets = [0, 0], sizes = [8, 128], strides = [1, 1]} : vector<8x384xf32> to vector<8x128xf32>
    %514 = arith.addf %512, %513 : vector<8x128xf32>
    %515 = arith.negf %514 : vector<8x128xf32>
    %516 = math.exp %515 : vector<8x128xf32>
    %cst_197 = arith.constant 1.000000e+00 : f32
    %517 = vector.broadcast %cst_197 : f32 to vector<8x128xf32>
    %518 = arith.addf %517, %516 : vector<8x128xf32>
    %519 = arith.divf %517, %518 : vector<8x128xf32>
    %520 = vector.extract_strided_slice %510 {offsets = [0, 128], sizes = [8, 128], strides = [1, 1]} : vector<8x384xf32> to vector<8x128xf32>
    %521 = vector.extract_strided_slice %511 {offsets = [0, 128], sizes = [8, 128], strides = [1, 1]} : vector<8x384xf32> to vector<8x128xf32>
    %522 = arith.addf %520, %521 : vector<8x128xf32>
    %523 = arith.negf %522 : vector<8x128xf32>
    %524 = math.exp %523 : vector<8x128xf32>
    %cst_198 = arith.constant 1.000000e+00 : f32
    %525 = vector.broadcast %cst_198 : f32 to vector<8x128xf32>
    %526 = arith.addf %525, %524 : vector<8x128xf32>
    %527 = arith.divf %525, %526 : vector<8x128xf32>
    %528 = vector.extract_strided_slice %510 {offsets = [0, 256], sizes = [8, 128], strides = [1, 1]} : vector<8x384xf32> to vector<8x128xf32>
    %529 = vector.extract_strided_slice %511 {offsets = [0, 256], sizes = [8, 128], strides = [1, 1]} : vector<8x384xf32> to vector<8x128xf32>
    %530 = arith.addf %529, %331 : vector<8x128xf32>
    %531 = arith.mulf %519, %530 : vector<8x128xf32>
    %532 = arith.addf %528, %531 : vector<8x128xf32>
    %533 = math.tanh %532 : vector<8x128xf32>
    %cst_199 = arith.constant 1.000000e+00 : f32
    %534 = vector.broadcast %cst_199 : f32 to vector<8x128xf32>
    %535 = arith.subf %534, %527 : vector<8x128xf32>
    %536 = arith.mulf %535, %533 : vector<8x128xf32>
    %537 = arith.mulf %527, %507 : vector<8x128xf32>
    %538 = arith.addf %536, %537 : vector<8x128xf32>
    %539 = arith.truncf %538 : vector<8x128xf32> to vector<8x128xbf16>
    %c7_200 = arith.constant 7 : index
    %c0_201 = arith.constant 0 : index
    %c0_202 = arith.constant 0 : index
    %540 = vector.load %arg13[%c7_200, %c0_201, %c0_202] : memref<8x8x384xf32, #tpu.memory_space<vmem>>, vector<1x8x384xf32>
    %541 = vector.shape_cast %540 : vector<1x8x384xf32> to vector<8x384xf32>
    %cst_203 = arith.constant dense<0.000000e+00> : vector<8x384xf32>
    %542 = tpu.matmul %539, %328, %cst_203 {dimension_numbers = #tpu.dot_dimension_numbers<[1], [0], [0], [1], [0, 0, 1, 1], [], []>} : vector<8x128xbf16>, vector<128x384xbf16>, vector<8x384xf32> -> vector<8x384xf32>
    %543 = vector.extract_strided_slice %541 {offsets = [0, 0], sizes = [8, 128], strides = [1, 1]} : vector<8x384xf32> to vector<8x128xf32>
    %544 = vector.extract_strided_slice %542 {offsets = [0, 0], sizes = [8, 128], strides = [1, 1]} : vector<8x384xf32> to vector<8x128xf32>
    %545 = arith.addf %543, %544 : vector<8x128xf32>
    %546 = arith.negf %545 : vector<8x128xf32>
    %547 = math.exp %546 : vector<8x128xf32>
    %cst_204 = arith.constant 1.000000e+00 : f32
    %548 = vector.broadcast %cst_204 : f32 to vector<8x128xf32>
    %549 = arith.addf %548, %547 : vector<8x128xf32>
    %550 = arith.divf %548, %549 : vector<8x128xf32>
    %551 = vector.extract_strided_slice %541 {offsets = [0, 128], sizes = [8, 128], strides = [1, 1]} : vector<8x384xf32> to vector<8x128xf32>
    %552 = vector.extract_strided_slice %542 {offsets = [0, 128], sizes = [8, 128], strides = [1, 1]} : vector<8x384xf32> to vector<8x128xf32>
    %553 = arith.addf %551, %552 : vector<8x128xf32>
    %554 = arith.negf %553 : vector<8x128xf32>
    %555 = math.exp %554 : vector<8x128xf32>
    %cst_205 = arith.constant 1.000000e+00 : f32
    %556 = vector.broadcast %cst_205 : f32 to vector<8x128xf32>
    %557 = arith.addf %556, %555 : vector<8x128xf32>
    %558 = arith.divf %556, %557 : vector<8x128xf32>
    %559 = vector.extract_strided_slice %541 {offsets = [0, 256], sizes = [8, 128], strides = [1, 1]} : vector<8x384xf32> to vector<8x128xf32>
    %560 = vector.extract_strided_slice %542 {offsets = [0, 256], sizes = [8, 128], strides = [1, 1]} : vector<8x384xf32> to vector<8x128xf32>
    %561 = arith.addf %560, %331 : vector<8x128xf32>
    %562 = arith.mulf %550, %561 : vector<8x128xf32>
    %563 = arith.addf %559, %562 : vector<8x128xf32>
    %564 = math.tanh %563 : vector<8x128xf32>
    %cst_206 = arith.constant 1.000000e+00 : f32
    %565 = vector.broadcast %cst_206 : f32 to vector<8x128xf32>
    %566 = arith.subf %565, %558 : vector<8x128xf32>
    %567 = arith.mulf %566, %564 : vector<8x128xf32>
    %568 = arith.mulf %558, %538 : vector<8x128xf32>
    %569 = arith.addf %567, %568 : vector<8x128xf32>
    %c0_207 = arith.constant 0 : index
    %c0_208 = arith.constant 0 : index
    %570 = vector.load %arg9[%c0_207, %c0_208] : memref<128x3xf32, #tpu.memory_space<vmem>>, vector<128x3xf32>
    %cst_209 = arith.constant dense<0.000000e+00> : vector<8x3xf32>
    %571 = tpu.matmul %569, %570, %cst_209 {dimension_numbers = #tpu.dot_dimension_numbers<[1], [0], [0], [1], [0, 0, 1, 1], [], []>} : vector<8x128xf32>, vector<128x3xf32>, vector<8x3xf32> -> vector<8x3xf32>
    %c0_210 = arith.constant 0 : index
    %c0_211 = arith.constant 0 : index
    %572 = vector.load %arg10[%c0_210, %c0_211] : memref<1x3xf32, #tpu.memory_space<vmem>>, vector<1x3xf32>
    %573 = vector.broadcast %572 : vector<1x3xf32> to vector<8x3xf32>
    %574 = arith.addf %571, %573 : vector<8x3xf32>
    %575 = vector.extract_strided_slice %574 {offsets = [0, 0], sizes = [2, 3], strides = [1, 1]} : vector<8x3xf32> to vector<2x3xf32>
    %c0_212 = arith.constant 0 : index
    %c0_213 = arith.constant 0 : index
    %576 = vector.load %arg11[%c0_212, %c0_213] : memref<2x3xf32, #tpu.memory_space<vmem>>, vector<2x3xf32>
    tpu.vector_store %arg11[%c0_212, %c0_213], %575 {strides = array<i32>} : memref<2x3xf32, #tpu.memory_space<vmem>>, vector<2x3xf32>,
    return
  }
}

</mosaic_0001>

<llo_original>
// kernel: _fused_forward.1
$region0: #{_fused_forward.1}
  #allocation0 [shape = 'u32[]', space=smem, size = 0x4, offset = 0x4, fixed_abs, tag = 'smem constant byte address 0x4 - core index']
  #allocation1 [shape = 'u32[144,128]{1,0:T(1,128)}', space=vmem, size = 0x12000, scoped, tag = 'internal scratch']
  #allocation2 [shape = 'f32[8,8,32]{2,1,0:T(8,128)}', space=vmem, size = 0x8000, scoped, tag = 'scratch operand']
  #allocation3 [shape = 'f32[8,8,384]{2,1,0:T(8,128)}', space=vmem, size = 0x18000, scoped, tag = 'scratch operand']
  #allocation4 [shape = 'f32[8,8,128]{2,1,0:T(8,128)}', space=vmem, size = 0x8000, scoped, tag = 'scratch operand']
  %s0 = inlined_call_operand.vmem [shape: f32[2,8,32], index: 0, kind: input, shape index: {}]
  %s1 = inlined_call_operand.vmem [shape: bf16[32,384], index: 1, kind: input, shape index: {}]
  %s2 = inlined_call_operand.hbm [shape: bf16[128,384], index: 2, kind: input, shape index: {}]
  %s3 = inlined_call_operand.vmem [shape: f32[1,384], index: 3, kind: input, shape index: {}]
  %s4 = inlined_call_operand.vmem [shape: f32[1,128], index: 4, kind: input, shape index: {}]
  %s5 = inlined_call_operand.hbm [shape: bf16[128,384], index: 5, kind: input, shape index: {}]
  %s6 = inlined_call_operand.hbm [shape: bf16[128,384], index: 6, kind: input, shape index: {}]
  %s7 = inlined_call_operand.vmem [shape: f32[1,384], index: 7, kind: input, shape index: {}]
  %s8 = inlined_call_operand.vmem [shape: f32[1,128], index: 8, kind: input, shape index: {}]
  %s9 = inlined_call_operand.vmem [shape: f32[128,3], index: 9, kind: input, shape index: {}]
  %s10 = inlined_call_operand.vmem [shape: f32[1,3], index: 10, kind: input, shape index: {}]
  %s11 = inlined_call_operand.hbm [shape: f32[2,3], index: 11, kind: output, shape index: {}]
  %s12 = sld [smem:[#allocation0]]
  $region66: #{_fused_forward.1} parent=0
    _
  %s14 = ssub.s32 1, %s12
  %s15 = scalar_select 0, %s14, %s12
  $region1: #{_fused_forward.1} parent=0
    #allocation5 [shape = 'u8[98304]{0}', space=vmem, size = 0x18000, scoped, tag = 'input window, operand 2, single buffered']
    #allocation6 [shape = 's32[1]{0}', space=sflag, size = 0x4, scoped, tag = 'scoped memory for _fused_forward.1']
    #allocation7 [shape = 's32[1]{0}', space=sflag, size = 0x4, scoped, tag = 'scoped memory for _fused_forward.1']
    #allocation8 [shape = 'u8[98304]{0}', space=vmem, size = 0x18000, scoped, tag = 'input window, operand 5, single buffered']
    #allocation9 [shape = 's32[1]{0}', space=sflag, size = 0x4, scoped, tag = 'scoped memory for _fused_forward.1']
    #allocation10 [shape = 'u8[98304]{0}', space=vmem, size = 0x18000, scoped, tag = 'input window, operand 6, single buffered']
    #allocation11 [shape = 'u8[1024]{0}', space=vmem, size = 0x400, scoped, tag = 'output window, operand 0, single buffered']
    %16 = vsyncpa [#allocation6], 0
    %17 = vsyncpa [#allocation9], 0
    %18 = vsyncpa [#allocation7], 0
    // Predicated region
    $region2: #{_fused_forward.1} parent=1 // pred_check
      _
    $region3: #{_fused_forward.1} parent=1 // pred_check_branch
      %20 = sbr.rel (0) target = $region5
    $region4: #{_fused_forward.1} parent=1 // pred_region
      _
    $region5: #{_fused_forward.1} parent=1 // pred_fallthru
      _
    // Predicated region
    $region6: #{_fused_forward.1} parent=1 // pred_check
      _
    $region7: #{_fused_forward.1} parent=1 // pred_check_branch
      %22 = sbr.rel (0) target = $region9
    $region8: #{_fused_forward.1} parent=1 // pred_region
      _
    $region9: #{_fused_forward.1} parent=1 // pred_fallthru
      _
    // Predicated region
    $region10: #{_fused_forward.1} parent=1 // pred_check
      _
    $region11: #{_fused_forward.1} parent=1 // pred_check_branch
      %24 = sbr.rel (0) target = $region13
    $region12: #{_fused_forward.1} parent=1 // pred_region
      %s26 = ssub.s32 3072, 3072
      %27 = vsyncadd [#allocation6], %s26
      %s28 = sshll.u32 [#allocation5], 4
      %s29 = int_to_ptr.vmem [resolvable:$true] %s28
      %34 = dma.hbm_to_vmem [thread:$0]  %s2, 3072, %s29, [#allocation6], 192, 192, 12
    $region13: #{_fused_forward.1} parent=1 // pred_fallthru
      _
    // Predicated region
    $region14: #{_fused_forward.1} parent=1 // pred_check
      _
    $region15: #{_fused_forward.1} parent=1 // pred_check_branch
      %36 = sbr.rel (0) target = $region17
    $region16: #{_fused_forward.1} parent=1 // pred_region
      _
    $region17: #{_fused_forward.1} parent=1 // pred_fallthru
      _
    // Predicated region
    $region18: #{_fused_forward.1} parent=1 // pred_check
      _
    $region19: #{_fused_forward.1} parent=1 // pred_check_branch
      %38 = sbr.rel (0) target = $region21
    $region20: #{_fused_forward.1} parent=1 // pred_region
      _
    $region21: #{_fused_forward.1} parent=1 // pred_fallthru
      _
    // Predicated region
    $region22: #{_fused_forward.1} parent=1 // pred_check
      _
    $region23: #{_fused_forward.1} parent=1 // pred_check_branch
      %40 = sbr.rel (0) target = $region25
    $region24: #{_fused_forward.1} parent=1 // pred_region
      %s42 = ssub.s32 3072, 3072
      %43 = vsyncadd [#allocation9], %s42
      %s44 = sshll.u32 [#allocation8], 4
      %s45 = int_to_ptr.vmem [resolvable:$true] %s44
      %50 = dma.hbm_to_vmem [thread:$0]  %s5, 3072, %s45, [#allocation9], 192, 192, 12
    $region25: #{_fused_forward.1} parent=1 // pred_fallthru
      _
    // Predicated region
    $region26: #{_fused_forward.1} parent=1 // pred_check
      _
    $region27: #{_fused_forward.1} parent=1 // pred_check_branch
      %52 = sbr.rel (0) target = $region29
    $region28: #{_fused_forward.1} parent=1 // pred_region
      %s54 = ssub.s32 3072, 3072
      %55 = vsyncadd [#allocation9], %s54
      %s56 = sshll.u32 [#allocation10], 4
      %s57 = int_to_ptr.vmem [resolvable:$true] %s56
      %62 = dma.hbm_to_vmem [thread:$0]  %s6, 3072, %s57, [#allocation9], 192, 192, 12
    $region29: #{_fused_forward.1} parent=1 // pred_fallthru
      _
    // Predicated region
    $region30: #{_fused_forward.1} parent=1 // pred_check
      _
    $region31: #{_fused_forward.1} parent=1 // pred_check_branch
      %64 = sbr.rel (0) target = $region33
    $region32: #{_fused_forward.1} parent=1 // pred_region
      _
    $region33: #{_fused_forward.1} parent=1 // pred_fallthru
      _
    // Predicated region
    $region34: #{_fused_forward.1} parent=1 // pred_check
      _
    $region35: #{_fused_forward.1} parent=1 // pred_check_branch
      %66 = sbr.rel (0) target = $region37
    $region36: #{_fused_forward.1} parent=1 // pred_region
      _
    $region37: #{_fused_forward.1} parent=1 // pred_fallthru
      _
    // Predicated region
    $region38: #{_fused_forward.1} parent=1 // pred_check
      _
    $region39: #{_fused_forward.1} parent=1 // pred_check_branch
      %68 = sbr.rel (0) target = $region41
    $region40: #{_fused_forward.1} parent=1 // pred_region
      _
    $region41: #{_fused_forward.1} parent=1 // pred_fallthru
      _
    // Predicated region
    $region42: #{_fused_forward.1} parent=1 // pred_check
      _
    $region43: #{_fused_forward.1} parent=1 // pred_check_branch
      %70 = sbr.rel (0) target = $region45
    $region44: #{_fused_forward.1} parent=1 // pred_region
      _
    $region45: #{_fused_forward.1} parent=1 // pred_fallthru
      _
    // Predicated region
    $region46: #{_fused_forward.1} parent=1 // pred_check
      _
    $region47: #{_fused_forward.1} parent=1 // pred_check_branch
      %72 = sbr.rel (0) target = $region49
    $region48: #{_fused_forward.1} parent=1 // pred_region
      %73 = dma.done [#allocation6], 3072
    $region49: #{_fused_forward.1} parent=1 // pred_fallthru
      _
    // Predicated region
    $region50: #{_fused_forward.1} parent=1 // pred_check
      _
    $region51: #{_fused_forward.1} parent=1 // pred_check_branch
      %75 = sbr.rel (0) target = $region53
    $region52: #{_fused_forward.1} parent=1 // pred_region
      %76 = dma.done [#allocation9], 3072
    $region53: #{_fused_forward.1} parent=1 // pred_fallthru
      _
    // Predicated region
    $region54: #{_fused_forward.1} parent=1 // pred_check
      _
    $region55: #{_fused_forward.1} parent=1 // pred_check_branch
      %78 = sbr.rel (0) target = $region57
    $region56: #{_fused_forward.1} parent=1 // pred_region
      %79 = dma.done [#allocation9], 3072
    $region57: #{_fused_forward.1} parent=1 // pred_fallthru
      _
    %vm81 = vcmask 261120
    %82 = vst.msk [vmem:[#allocation2] sm:$0xff] %vm81, 0.0
    %83 = vst.msk [vmem:[#allocation2 + $0x8] sm:$0xff] %vm81, 0.0
    %84 = vst.msk [vmem:[#allocation2 + $0x10] sm:$0xff] %vm81, 0.0
    %85 = vst.msk [vmem:[#allocation2 + $0x18] sm:$0xff] %vm81, 0.0
    %86 = vst.msk [vmem:[#allocation2 + $0x20] sm:$0xff] %vm81, 0.0
    %87 = vst.msk [vmem:[#allocation2 + $0x28] sm:$0xff] %vm81, 0.0
    %88 = vst.msk [vmem:[#allocation2 + $0x30] sm:$0xff] %vm81, 0.0
    %89 = vst.msk [vmem:[#allocation2 + $0x38] sm:$0xff] %vm81, 0.0
    %v90 = vld [vmem:[%s0] sm:$0x1]
    %v91 = vld [vmem:[%s0 + $0x8] sm:$0x1]
    %v94 = vrot.slane %v91, 7
    %vm95 = vcmask 1041409
    %v96 = vsel %vm95, %v94, %v90
    %vm98 = vcmask 254976
    %99 = vst.msk [vmem:[#allocation2] sm:$0x3] %vm98, %v96
    %v100 = vld [vmem:[%s0 + $0x1] sm:$0x1]
    %v101 = vld [vmem:[%s0 + $0x9] sm:$0x1]
    %v104 = vrot.slane %v101, 7
    %v105 = vsel %vm95, %v104, %v100
    %s107 = scalar_lea.vmem [#allocation2], 8
    %108 = vst.msk [vmem:[%s107] sm:$0x3] %vm98, %v105
    %v109 = vld [vmem:[%s0 + $0x2] sm:$0x1]
    %v110 = vld [vmem:[%s0 + $0xa] sm:$0x1]
    %v113 = vrot.slane %v110, 7
    %v114 = vsel %vm95, %v113, %v109
    %s116 = scalar_lea.vmem [#allocation2], 16
    %117 = vst.msk [vmem:[%s116] sm:$0x3] %vm98, %v114
    %v118 = vld [vmem:[%s0 + $0x3] sm:$0x1]
    %v119 = vld [vmem:[%s0 + $0xb] sm:$0x1]
    %v122 = vrot.slane %v119, 7
    %v123 = vsel %vm95, %v122, %v118
    %s125 = scalar_lea.vmem [#allocation2], 24
    %126 = vst.msk [vmem:[%s125] sm:$0x3] %vm98, %v123
    %v127 = vld [vmem:[%s0 + $0x4] sm:$0x1]
    %v128 = vld [vmem:[%s0 + $0xc] sm:$0x1]
    %v131 = vrot.slane %v128, 7
    %v132 = vsel %vm95, %v131, %v127
    %s134 = scalar_lea.vmem [#allocation2], 32
    %135 = vst.msk [vmem:[%s134] sm:$0x3] %vm98, %v132
    %v136 = vld [vmem:[%s0 + $0x5] sm:$0x1]
    %v137 = vld [vmem:[%s0 + $0xd] sm:$0x1]
    %v140 = vrot.slane %v137, 7
    %v141 = vsel %vm95, %v140, %v136
    %s143 = scalar_lea.vmem [#allocation2], 40
    %144 = vst.msk [vmem:[%s143] sm:$0x3] %vm98, %v141
    %v145 = vld [vmem:[%s0 + $0x6] sm:$0x1]
    %v146 = vld [vmem:[%s0 + $0xe] sm:$0x1]
    %v149 = vrot.slane %v146, 7
    %v150 = vsel %vm95, %v149, %v145
    %s152 = scalar_lea.vmem [#allocation2], 48
    %153 = vst.msk [vmem:[%s152] sm:$0x3] %vm98, %v150
    %v154 = vld [vmem:[%s0 + $0x7] sm:$0x1]
    %v155 = vld [vmem:[%s0 + $0xf] sm:$0x1]
    %v158 = vrot.slane %v155, 7
    %v159 = vsel %vm95, %v158, %v154
    %s161 = scalar_lea.vmem [#allocation2], 56
    %162 = vst.msk [vmem:[%s161] sm:$0x3] %vm98, %v159
    %v163 = vld [vmem:[#allocation2] sm:$0xff]
    %v164 = vld [vmem:[#allocation2 + $0x8] sm:$0xff]
    %v165 = vld [vmem:[#allocation2 + $0x10] sm:$0xff]
    %v166 = vld [vmem:[#allocation2 + $0x18] sm:$0xff]
    %v167 = vld [vmem:[#allocation2 + $0x20] sm:$0xff]
    %v168 = vld [vmem:[#allocation2 + $0x28] sm:$0xff]
    %v169 = vld [vmem:[#allocation2 + $0x30] sm:$0xff]
    %v170 = vld [vmem:[#allocation2 + $0x38] sm:$0xff]
    %v171 = vpack.c.bf16 %v164, %v163
    %v172 = vpack.c.bf16 %v166, %v165
    %v173 = vpack.c.bf16 %v168, %v167
    %v174 = vpack.c.bf16 %v170, %v169
    %v175 = vld [vmem:[%s1] sm:$0xff]
    %v176 = vld [vmem:[%s1 + $0x8] sm:$0xf]
    %v177 = vld [vmem:[%s1 + $0xc] sm:$0xff]
    %v178 = vld [vmem:[%s1 + $0x14] sm:$0xf]
    %v179 = vld [vmem:[%s1 + $0x18] sm:$0xff]
    %v180 = vld [vmem:[%s1 + $0x20] sm:$0xf]
    %v181 = vld [vmem:[%s1 + $0x24] sm:$0xff]
    %v182 = vld [vmem:[%s1 + $0x2c] sm:$0xf]
    %v183 = vld [vmem:[%s3] sm:$0x7]
    %v185 = vlaneseq
    %v186 = vshrl.u32 %v185, 7
    %v187 = vsub.s32 0, %v186
    %v188 = vrot.slane %v183, %v187
    %v189 = vlaneseq
    %v190 = vshrl.u32 %v189, 7
    %v191 = vsub.s32 1, %v190
    %v192 = vrot.slane %v183, %v191
    %v193 = vlaneseq
    %v194 = vshrl.u32 %v193, 7
    %v195 = vsub.s32 2, %v194
    %v196 = vrot.slane %v183, %v195
    %v208 = vunpack.c.l.b16 %v175
    %v209 = vunpack.c.h.b16 %v175
    %v210 = vunpack.c.l.b16 %v176
    %v211 = vunpack.c.l.b16 %v177
    %v212 = vunpack.c.h.b16 %v177
    %v213 = vunpack.c.l.b16 %v178
    %v214 = vunpack.c.l.b16 %v179
    %v215 = vunpack.c.h.b16 %v179
    %v216 = vunpack.c.l.b16 %v180
    %v217 = vunpack.c.l.b16 %v181
    %v218 = vunpack.c.h.b16 %v181
    %v219 = vunpack.c.l.b16 %v182
    %v220 = vpack.c.b16 %v211, %v208
    %v221 = vpack.c.b16 %v212, %v209
    %v222 = vpack.c.b16 %v213, %v210
    %v223 = vpack.c.b16 %v217, %v214
    %v224 = vpack.c.b16 %v218, %v215
    %v225 = vpack.c.b16 %v219, %v216
    %v233 = vsel %vm81, %v171, 0
    %v236 = vsel %vm81, %v172, 0
    %v239 = vsel %vm81, %v173, 0
    %v242 = vsel %vm81, %v174, 0
    %244 = vmatprep.subr.bf16.mxu0 %v221
    %245 = vmatpush1.bf16.msra.mxu0 %v220
    %246 = vmatprep.subr.bf16.mxu0 %v224
    %247 = vmatpush1.bf16.msra.mxu0 %v223
    %248 = vmatprep.subr.bf16.mxu0 0
    %249 = vmatpush1.bf16.msra.mxu0 0
    %250 = vmatprep.subr.bf16.mxu0 0
    %251 = vmatpush1.bf16.msra.mxu0 0
    %252 = vmatprep.subr.bf16.mxu0 0
    %253 = vmatpush1.bf16.msra.mxu0 0
    %254 = vmatprep.subr.bf16.mxu0 0
    %255 = vmatpush1.bf16.msra.mxu0 0
    %256 = vmatprep.subr.bf16.mxu0 0
    %257 = vmatpush1.bf16.msra.mxu0 0
    %258 = vmatprep.subr.bf16.mxu0 0
    %259 = vmatpush1.bf16.msra.mxu0 0
    %260 = vmatprep.subr.bf16.mxu0 0
    %261 = vmatpush1.bf16.msra.mxu0 0
    %262 = vmatprep.subr.bf16.mxu0 0
    %263 = vmatpush1.bf16.msra.mxu0 0
    %264 = vmatprep.subr.bf16.mxu0 0
    %265 = vmatpush1.bf16.msra.mxu0 0
    %266 = vmatprep.subr.bf16.mxu0 0
    %267 = vmatpush1.bf16.msra.mxu0 0
    %268 = vmatprep.subr.bf16.mxu0 0
    %269 = vmatpush1.bf16.msra.mxu0 0
    %270 = vmatprep.subr.bf16.mxu0 0
    %271 = vmatpush1.bf16.msra.mxu0 0
    %272 = vmatprep.subr.bf16.mxu0 0
    %273 = vmatpush1.bf16.msra.mxu0 0
    %274 = vmatprep.subr.bf16.mxu0 0
    %275 = vmatpush1.bf16.msra.mxu0 0
    %276 = vmatprep.mubr.bf16.mxu0 0
    %277 = vmatmul.mubr.bf16.gmra.mrb[0].mxu0 %v233
    %v278 = vpop.f32.mrb[0].mxu0
    %v279 = vadd.f32 %v188, %v278
    %v280 = vpop.f32.mrb[0].mxu0
    %v281 = vadd.f32 %v192, %v280
    %v282 = vpop.f32.mrb[0].mxu0
    %v283 = vadd.f32 %v188, %v282
    %v284 = vpop.f32.mrb[0].mxu0
    %v285 = vadd.f32 %v192, %v284
    %286 = vmatprep.mubr.bf16.mxu0 0
    %287 = vmatmul.mubr.bf16.gmra.mrb[0].mxu0 %v236
    %v288 = vpop.f32.mrb[0].mxu0
    %v289 = vadd.f32 %v188, %v288
    %v290 = vpop.f32.mrb[0].mxu0
    %v291 = vadd.f32 %v192, %v290
    %v292 = vpop.f32.mrb[0].mxu0
    %v293 = vadd.f32 %v188, %v292
    %v294 = vpop.f32.mrb[0].mxu0
    %v295 = vadd.f32 %v192, %v294
    %296 = vmatprep.mubr.bf16.mxu0 0
    %297 = vmatmul.mubr.bf16.gmra.mrb[0].mxu0 %v239
    %v298 = vpop.f32.mrb[0].mxu0
    %v299 = vadd.f32 %v188, %v298
    %v300 = vpop.f32.mrb[0].mxu0
    %v301 = vadd.f32 %v192, %v300
    %v302 = vpop.f32.mrb[0].mxu0
    %v303 = vadd.f32 %v188, %v302
    %v304 = vpop.f32.mrb[0].mxu0
    %v305 = vadd.f32 %v192, %v304
    %306 = vmatprep.mubr.bf16.mxu0 0
    %307 = vmatmul.mubr.bf16.gmra.mrb[0].mxu0 %v242
    %v308 = vpop.f32.mrb[0].mxu0
    %v309 = vadd.f32 %v188, %v308
    %v310 = vpop.f32.mrb[0].mxu0
    %v311 = vadd.f32 %v192, %v310
    %v312 = vpop.f32.mrb[0].mxu0
    %v313 = vadd.f32 %v188, %v312
    %v314 = vpop.f32.mrb[0].mxu0
    %v315 = vadd.f32 %v192, %v314
    %316 = vdwg.mxu0
    %317 = vmatprep.subr.bf16.mxu0 0
    %318 = vmatpush1.bf16.msra.mxu0 %v222
    %319 = vmatprep.subr.bf16.mxu0 0
    %320 = vmatpush1.bf16.msra.mxu0 %v225
    %321 = vmatprep.subr.bf16.mxu0 0
    %322 = vmatpush1.bf16.msra.mxu0 0
    %323 = vmatprep.subr.bf16.mxu0 0
    %324 = vmatpush1.bf16.msra.mxu0 0
    %325 = vmatprep.subr.bf16.mxu0 0
    %326 = vmatpush1.bf16.msra.mxu0 0
    %327 = vmatprep.subr.bf16.mxu0 0
    %328 = vmatpush1.bf16.msra.mxu0 0
    %329 = vmatprep.subr.bf16.mxu0 0
    %330 = vmatpush1.bf16.msra.mxu0 0
    %331 = vmatprep.subr.bf16.mxu0 0
    %332 = vmatpush1.bf16.msra.mxu0 0
    %333 = vmatprep.subr.bf16.mxu0 0
    %334 = vmatpush1.bf16.msra.mxu0 0
    %335 = vmatprep.subr.bf16.mxu0 0
    %336 = vmatpush1.bf16.msra.mxu0 0
    %337 = vmatprep.subr.bf16.mxu0 0
    %338 = vmatpush1.bf16.msra.mxu0 0
    %339 = vmatprep.subr.bf16.mxu0 0
    %340 = vmatpush1.bf16.msra.mxu0 0
    %341 = vmatprep.subr.bf16.mxu0 0
    %342 = vmatpush1.bf16.msra.mxu0 0
    %343 = vmatprep.subr.bf16.mxu0 0
    %344 = vmatpush1.bf16.msra.mxu0 0
    %345 = vmatprep.subr.bf16.mxu0 0
    %346 = vmatpush1.bf16.msra.mxu0 0
    %347 = vmatprep.subr.bf16.mxu0 0
    %348 = vmatpush1.bf16.msra.mxu0 0
    %349 = vmatprep.mubr.bf16.mxu0 0
    %350 = vmatmul.mubr.bf16.gmra.mrb[0].mxu0 %v233
    %v351 = vpop.f32.mrb[0].mxu0
    %v352 = vadd.f32 %v196, %v351
    %v353 = vpop.f32.mrb[0].mxu0
    %v354 = vpop.f32.mrb[0].mxu0
    %v355 = vadd.f32 %v196, %v354
    %v356 = vpop.f32.mrb[0].mxu0
    %357 = vmatprep.mubr.bf16.mxu0 0
    %358 = vmatmul.mubr.bf16.gmra.mrb[0].mxu0 %v236
    %v359 = vpop.f32.mrb[0].mxu0
    %v360 = vadd.f32 %v196, %v359
    %v361 = vpop.f32.mrb[0].mxu0
    %v362 = vpop.f32.mrb[0].mxu0
    %v363 = vadd.f32 %v196, %v362
    %v364 = vpop.f32.mrb[0].mxu0
    %365 = vmatprep.mubr.bf16.mxu0 0
    %366 = vmatmul.mubr.bf16.gmra.mrb[0].mxu0 %v239
    %v367 = vpop.f32.mrb[0].mxu0
    %v368 = vadd.f32 %v196, %v367
    %v369 = vpop.f32.mrb[0].mxu0
    %v370 = vpop.f32.mrb[0].mxu0
    %v371 = vadd.f32 %v196, %v370
    %v372 = vpop.f32.mrb[0].mxu0
    %373 = vmatprep.mubr.bf16.mxu0 0
    %374 = vmatmul.mubr.bf16.gmra.mrb[0].mxu0 %v242
    %v375 = vpop.f32.mrb[0].mxu0
    %v376 = vadd.f32 %v196, %v375
    %v377 = vpop.f32.mrb[0].mxu0
    %v378 = vpop.f32.mrb[0].mxu0
    %v379 = vadd.f32 %v196, %v378
    %v380 = vpop.f32.mrb[0].mxu0
    %381 = vdwg.mxu0
    %382 = vst [vmem:[#allocation3] sm:$0xff] %v279
    %383 = vst [vmem:[#allocation3 + $0x8] sm:$0xff] %v281
    %384 = vst [vmem:[#allocation3 + $0x10] sm:$0xff] %v352
    %385 = vst [vmem:[#allocation3 + $0x18] sm:$0xff] %v283
    %386 = vst [vmem:[#allocation3 + $0x20] sm:$0xff] %v285
    %387 = vst [vmem:[#allocation3 + $0x28] sm:$0xff] %v355
    %388 = vst [vmem:[#allocation3 + $0x30] sm:$0xff] %v289
    %389 = vst [vmem:[#allocation3 + $0x38] sm:$0xff] %v291
    %390 = vst [vmem:[#allocation3 + $0x40] sm:$0xff] %v360
    %391 = vst [vmem:[#allocation3 + $0x48] sm:$0xff] %v293
    %392 = vst [vmem:[#allocation3 + $0x50] sm:$0xff] %v295
    %393 = vst [vmem:[#allocation3 + $0x58] sm:$0xff] %v363
    %394 = vst [vmem:[#allocation3 + $0x60] sm:$0xff] %v299
    %395 = vst [vmem:[#allocation3 + $0x68] sm:$0xff] %v301
    %396 = vst [vmem:[#allocation3 + $0x70] sm:$0xff] %v368
    %397 = vst [vmem:[#allocation3 + $0x78] sm:$0xff] %v303
    %398 = vst [vmem:[#allocation3 + $0x80] sm:$0xff] %v305
    %399 = vst [vmem:[#allocation3 + $0x88] sm:$0xff] %v371
    %400 = vst [vmem:[#allocation3 + $0x90] sm:$0xff] %v309
    %401 = vst [vmem:[#allocation3 + $0x98] sm:$0xff] %v311
    %402 = vst [vmem:[#allocation3 + $0xa0] sm:$0xff] %v376
    %403 = vst [vmem:[#allocation3 + $0xa8] sm:$0xff] %v313
    %404 = vst [vmem:[#allocation3 + $0xb0] sm:$0xff] %v315
    %405 = vst [vmem:[#allocation3 + $0xb8] sm:$0xff] %v379
    %v406 = vld [vmem:[#allocation5] sm:$0xff]
    %v407 = vld [vmem:[#allocation5 + $0x8] sm:$0xf]
    %v408 = vld [vmem:[#allocation5 + $0xc] sm:$0xff]
    %v409 = vld [vmem:[#allocation5 + $0x14] sm:$0xf]
    %v410 = vld [vmem:[#allocation5 + $0x18] sm:$0xff]
    %v411 = vld [vmem:[#allocation5 + $0x20] sm:$0xf]
    %v412 = vld [vmem:[#allocation5 + $0x24] sm:$0xff]
    %v413 = vld [vmem:[#allocation5 + $0x2c] sm:$0xf]
    %v414 = vld [vmem:[#allocation5 + $0x30] sm:$0xff]
    %v415 = vld [vmem:[#allocation5 + $0x38] sm:$0xf]
    %v416 = vld [vmem:[#allocation5 + $0x3c] sm:$0xff]
    %v417 = vld [vmem:[#allocation5 + $0x44] sm:$0xf]
    %v418 = vld [vmem:[#allocation5 + $0x48] sm:$0xff]
    %v419 = vld [vmem:[#allocation5 + $0x50] sm:$0xf]
    %v420 = vld [vmem:[#allocation5 + $0x54] sm:$0xff]
    %v421 = vld [vmem:[#allocation5 + $0x5c] sm:$0xf]
    %v422 = vld [vmem:[#allocation5 + $0x60] sm:$0xff]
    %v423 = vld [vmem:[#allocation5 + $0x68] sm:$0xf]
    %v424 = vld [vmem:[#allocation5 + $0x6c] sm:$0xff]
    %v425 = vld [vmem:[#allocation5 + $0x74] sm:$0xf]
    %v426 = vld [vmem:[#allocation5 + $0x78] sm:$0xff]
    %v427 = vld [vmem:[#allocation5 + $0x80] sm:$0xf]
    %v428 = vld [vmem:[#allocation5 + $0x84] sm:$0xff]
    %v429 = vld [vmem:[#allocation5 + $0x8c] sm:$0xf]
    %v430 = vld [vmem:[#allocation5 + $0x90] sm:$0xff]
    %v431 = vld [vmem:[#allocation5 + $0x98] sm:$0xf]
    %v432 = vld [vmem:[#allocation5 + $0x9c] sm:$0xff]
    %v433 = vld [vmem:[#allocation5 + $0xa4] sm:$0xf]
    %v434 = vld [vmem:[#allocation5 + $0xa8] sm:$0xff]
    %v435 = vld [vmem:[#allocation5 + $0xb0] sm:$0xf]
    %v436 = vld [vmem:[#allocation5 + $0xb4] sm:$0xff]
    %v437 = vld [vmem:[#allocation5 + $0xbc] sm:$0xf]
    %v438 = vld [vmem:[%s4] sm:$0x1]
    %v440 = vlaneseq
    %v441 = vshrl.u32 %v440, 7
    %v442 = vsub.s32 0, %v441
    %v443 = vrot.slane %v438, %v442
    %v445 = vld [vmem:[#allocation3] sm:$0xff]
    %v446 = vld [vmem:[#allocation3 + $0x8] sm:$0xff]
    %v447 = vld [vmem:[#allocation3 + $0x10] sm:$0xff]
    %v448 = vxor.u32 %v445, 2147483648
    %v449 = vmul.f32 %v448, 1.442695
    %v450 = vpow.pop %v449
    %v451 = vadd.f32 %v450, 1.0
    %v452 = vrcp.pop %v451
    %v453 = vmul.f32 1.0, %v452
    %v454 = vxor.u32 %v446, 2147483648
    %v455 = vmul.f32 %v454, 1.442695
    %v456 = vpow.pop %v455
    %v457 = vadd.f32 %v456, 1.0
    %v458 = vrcp.pop %v457
    %v459 = vmul.f32 1.0, %v458
    %v460 = vmul.f32 %v453, %v443
    %v461 = vadd.f32 %v447, %v460
    %v462 = vtanh.pop %v461
    %v463 = vsub.f32 1.0, %v459
    %v464 = vmul.f32 %v463, %v462
    %v465 = vpack.c.bf16 %v464, %v464
    %466 = vst [vmem:[#allocation4] sm:$0xff] %v464
    %s467 = scalar_lea.vmem [#allocation3], 24
    %v468 = vld [vmem:[%s467] sm:$0xff]
    %v469 = vld [vmem:[%s467 + $0x8] sm:$0xff]
    %v470 = vld [vmem:[%s467 + $0x10] sm:$0xff]
    %v503 = vunpack.c.l.b16 %v406
    %v504 = vunpack.c.h.b16 %v406
    %v505 = vunpack.c.l.b16 %v407
    %v506 = vunpack.c.l.b16 %v408
    %v507 = vunpack.c.h.b16 %v408
    %v508 = vunpack.c.l.b16 %v409
    %v509 = vunpack.c.l.b16 %v410
    %v510 = vunpack.c.h.b16 %v410
    %v511 = vunpack.c.l.b16 %v411
    %v512 = vunpack.c.l.b16 %v412
    %v513 = vunpack.c.h.b16 %v412
    %v514 = vunpack.c.l.b16 %v413
    %v515 = vunpack.c.l.b16 %v414
    %v516 = vunpack.c.h.b16 %v414
    %v517 = vunpack.c.l.b16 %v415
    %v518 = vunpack.c.l.b16 %v416
    %v519 = vunpack.c.h.b16 %v416
    %v520 = vunpack.c.l.b16 %v417
    %v521 = vunpack.c.l.b16 %v418
    %v522 = vunpack.c.h.b16 %v418
    %v523 = vunpack.c.l.b16 %v419
    %v524 = vunpack.c.l.b16 %v420
    %v525 = vunpack.c.h.b16 %v420
    %v526 = vunpack.c.l.b16 %v421
    %v527 = vunpack.c.l.b16 %v422
    %v528 = vunpack.c.h.b16 %v422
    %v529 = vunpack.c.l.b16 %v423
    %v530 = vunpack.c.l.b16 %v424
    %v531 = vunpack.c.h.b16 %v424
    %v532 = vunpack.c.l.b16 %v425
    %v533 = vunpack.c.l.b16 %v426
    %v534 = vunpack.c.h.b16 %v426
    %v535 = vunpack.c.l.b16 %v427
    %v536 = vunpack.c.l.b16 %v428
    %v537 = vunpack.c.h.b16 %v428
    %v538 = vunpack.c.l.b16 %v429
    %v539 = vunpack.c.l.b16 %v430
    %v540 = vunpack.c.h.b16 %v430
    %v541 = vunpack.c.l.b16 %v431
    %v542 = vunpack.c.l.b16 %v432
    %v543 = vunpack.c.h.b16 %v432
    %v544 = vunpack.c.l.b16 %v433
    %v545 = vunpack.c.l.b16 %v434
    %v546 = vunpack.c.h.b16 %v434
    %v547 = vunpack.c.l.b16 %v435
    %v548 = vunpack.c.l.b16 %v436
    %v549 = vunpack.c.h.b16 %v436
    %v550 = vunpack.c.l.b16 %v437
    %v551 = vpack.c.b16 %v506, %v503
    %v552 = vpack.c.b16 %v507, %v504
    %v553 = vpack.c.b16 %v508, %v505
    %v554 = vpack.c.b16 %v512, %v509
    %v555 = vpack.c.b16 %v513, %v510
    %v556 = vpack.c.b16 %v514, %v511
    %v557 = vpack.c.b16 %v518, %v515
    %v558 = vpack.c.b16 %v519, %v516
    %v559 = vpack.c.b16 %v520, %v517
    %v560 = vpack.c.b16 %v524, %v521
    %v561 = vpack.c.b16 %v525, %v522
    %v562 = vpack.c.b16 %v526, %v523
    %v563 = vpack.c.b16 %v530, %v527
    %v564 = vpack.c.b16 %v531, %v528
    %v565 = vpack.c.b16 %v532, %v529
    %v566 = vpack.c.b16 %v536, %v533
    %v567 = vpack.c.b16 %v537, %v534
    %v568 = vpack.c.b16 %v538, %v535
    %v569 = vpack.c.b16 %v542, %v539
    %v570 = vpack.c.b16 %v543, %v540
    %v571 = vpack.c.b16 %v544, %v541
    %v572 = vpack.c.b16 %v548, %v545
    %v573 = vpack.c.b16 %v549, %v546
    %v574 = vpack.c.b16 %v550, %v547
    %599 = vmatprep.subr.bf16.mxu0 %v552
    %600 = vmatpush1.bf16.msra.mxu0 %v551
    %601 = vmatprep.subr.bf16.mxu0 %v555
    %602 = vmatpush1.bf16.msra.mxu0 %v554
    %603 = vmatprep.subr.bf16.mxu0 %v558
    %604 = vmatpush1.bf16.msra.mxu0 %v557
    %605 = vmatprep.subr.bf16.mxu0 %v561
    %606 = vmatpush1.bf16.msra.mxu0 %v560
    %607 = vmatprep.subr.bf16.mxu0 %v564
    %608 = vmatpush1.bf16.msra.mxu0 %v563
    %609 = vmatprep.subr.bf16.mxu0 %v567
    %610 = vmatpush1.bf16.msra.mxu0 %v566
    %611 = vmatprep.subr.bf16.mxu0 %v570
    %612 = vmatpush1.bf16.msra.mxu0 %v569
    %613 = vmatprep.subr.bf16.mxu0 %v573
    %614 = vmatpush1.bf16.msra.mxu0 %v572
    %615 = vmatprep.subr.bf16.mxu0 0
    %616 = vmatpush1.bf16.msra.mxu0 0
    %617 = vmatprep.subr.bf16.mxu0 0
    %618 = vmatpush1.bf16.msra.mxu0 0
    %619 = vmatprep.subr.bf16.mxu0 0
    %620 = vmatpush1.bf16.msra.mxu0 0
    %621 = vmatprep.subr.bf16.mxu0 0
    %622 = vmatpush1.bf16.msra.mxu0 0
    %623 = vmatprep.subr.bf16.mxu0 0
    %624 = vmatpush1.bf16.msra.mxu0 0
    %625 = vmatprep.subr.bf16.mxu0 0
    %626 = vmatpush1.bf16.msra.mxu0 0
    %627 = vmatprep.subr.bf16.mxu0 0
    %628 = vmatpush1.bf16.msra.mxu0 0
    %629 = vmatprep.subr.bf16.mxu0 0
    %630 = vmatpush1.bf16.msra.mxu0 0
    %631 = vmatprep.mubr.bf16.mxu0 0
    %632 = vmatmul.mubr.bf16.gmra.mrb[0].mxu0 %v465
    %v633 = vpop.f32.mrb[0].mxu0
    %v634 = vadd.f32 0.0, %v633
    %v635 = vpop.f32.mrb[0].mxu0
    %v636 = vadd.f32 0.0, %v635
    %v637 = vpop.f32.mrb[0].mxu0
    %v638 = vpop.f32.mrb[0].mxu0
    %639 = vdwg.mxu0
    %640 = vmatprep.subr.bf16.mxu0 0
    %641 = vmatpush1.bf16.msra.mxu0 %v553
    %642 = vmatprep.subr.bf16.mxu0 0
    %643 = vmatpush1.bf16.msra.mxu0 %v556
    %644 = vmatprep.subr.bf16.mxu0 0
    %645 = vmatpush1.bf16.msra.mxu0 %v559
    %646 = vmatprep.subr.bf16.mxu0 0
    %647 = vmatpush1.bf16.msra.mxu0 %v562
    %648 = vmatprep.subr.bf16.mxu0 0
    %649 = vmatpush1.bf16.msra.mxu0 %v565
    %650 = vmatprep.subr.bf16.mxu0 0
    %651 = vmatpush1.bf16.msra.mxu0 %v568
    %652 = vmatprep.subr.bf16.mxu0 0
    %653 = vmatpush1.bf16.msra.mxu0 %v571
    %654 = vmatprep.subr.bf16.mxu0 0
    %655 = vmatpush1.bf16.msra.mxu0 %v574
    %656 = vmatprep.subr.bf16.mxu0 0
    %657 = vmatpush1.bf16.msra.mxu0 0
    %658 = vmatprep.subr.bf16.mxu0 0
    %659 = vmatpush1.bf16.msra.mxu0 0
    %660 = vmatprep.subr.bf16.mxu0 0
    %661 = vmatpush1.bf16.msra.mxu0 0
    %662 = vmatprep.subr.bf16.mxu0 0
    %663 = vmatpush1.bf16.msra.mxu0 0
    %664 = vmatprep.subr.bf16.mxu0 0
    %665 = vmatpush1.bf16.msra.mxu0 0
    %666 = vmatprep.subr.bf16.mxu0 0
    %667 = vmatpush1.bf16.msra.mxu0 0
    %668 = vmatprep.subr.bf16.mxu0 0
    %669 = vmatpush1.bf16.msra.mxu0 0
    %670 = vmatprep.subr.bf16.mxu0 0
    %671 = vmatpush1.bf16.msra.mxu0 0
    %672 = vmatprep.mubr.bf16.mxu0 0
    %673 = vmatmul.mubr.bf16.gmra.mrb[0].mxu0 %v465
    %v674 = vpop.f32.mrb[0].mxu0
    %v675 = vadd.f32 0.0, %v674
    %v676 = vpop.f32.mrb[0].mxu0
    %v677 = vpop.f32.mrb[0].mxu0
    %v678 = vpop.f32.mrb[0].mxu0
    %679 = vdwg.mxu0
    %v680 = vadd.f32 %v468, %v634
    %v681 = vxor.u32 %v680, 2147483648
    %v682 = vmul.f32 %v681, 1.442695
    %v683 = vpow.pop %v682
    %v684 = vadd.f32 %v683, 1.0
    %v685 = vrcp.pop %v684
    %v686 = vmul.f32 1.0, %v685
    %v687 = vadd.f32 %v469, %v636
    %v688 = vxor.u32 %v687, 2147483648
    %v689 = vmul.f32 %v688, 1.442695
    %v690 = vpow.pop %v689
    %v691 = vadd.f32 %v690, 1.0
    %v692 = vrcp.pop %v691
    %v693 = vmul.f32 1.0, %v692
    %v694 = vadd.f32 %v675, %v443
    %v695 = vmul.f32 %v686, %v694
    %v696 = vadd.f32 %v470, %v695
    %v697 = vtanh.pop %v696
    %v698 = vsub.f32 1.0, %v693
    %v699 = vmul.f32 %v698, %v697
    %v700 = vmul.f32 %v693, %v464
    %v701 = vadd.f32 %v699, %v700
    %v702 = vpack.c.bf16 %v701, %v701
    %s703 = scalar_lea.vmem [#allocation4], 8
    %704 = vst [vmem:[%s703] sm:$0xff] %v701
    %s705 = scalar_lea.vmem [#allocation3], 48
    %v706 = vld [vmem:[%s705] sm:$0xff]
    %v707 = vld [vmem:[%s705 + $0x8] sm:$0xff]
    %v708 = vld [vmem:[%s705 + $0x10] sm:$0xff]
    %709 = vmatprep.subr.bf16.mxu0 %v552
    %710 = vmatpush1.bf16.msra.mxu0 %v551
    %711 = vmatprep.subr.bf16.mxu0 %v555
    %712 = vmatpush1.bf16.msra.mxu0 %v554
    %713 = vmatprep.subr.bf16.mxu0 %v558
    %714 = vmatpush1.bf16.msra.mxu0 %v557
    %715 = vmatprep.subr.bf16.mxu0 %v561
    %716 = vmatpush1.bf16.msra.mxu0 %v560
    %717 = vmatprep.subr.bf16.mxu0 %v564
    %718 = vmatpush1.bf16.msra.mxu0 %v563
    %719 = vmatprep.subr.bf16.mxu0 %v567
    %720 = vmatpush1.bf16.msra.mxu0 %v566
    %721 = vmatprep.subr.bf16.mxu0 %v570
    %722 = vmatpush1.bf16.msra.mxu0 %v569
    %723 = vmatprep.subr.bf16.mxu0 %v573
    %724 = vmatpush1.bf16.msra.mxu0 %v572
    %725 = vmatprep.subr.bf16.mxu0 0
    %726 = vmatpush1.bf16.msra.mxu0 0
    %727 = vmatprep.subr.bf16.mxu0 0
    %728 = vmatpush1.bf16.msra.mxu0 0
    %729 = vmatprep.subr.bf16.mxu0 0
    %730 = vmatpush1.bf16.msra.mxu0 0
    %731 = vmatprep.subr.bf16.mxu0 0
    %732 = vmatpush1.bf16.msra.mxu0 0
    %733 = vmatprep.subr.bf16.mxu0 0
    %734 = vmatpush1.bf16.msra.mxu0 0
    %735 = vmatprep.subr.bf16.mxu0 0
    %736 = vmatpush1.bf16.msra.mxu0 0
    %737 = vmatprep.subr.bf16.mxu0 0
    %738 = vmatpush1.bf16.msra.mxu0 0
    %739 = vmatprep.subr.bf16.mxu0 0
    %740 = vmatpush1.bf16.msra.mxu0 0
    %741 = vmatprep.mubr.bf16.mxu0 0
    %742 = vmatmul.mubr.bf16.gmra.mrb[0].mxu0 %v702
    %v743 = vpop.f32.mrb[0].mxu0
    %v744 = vadd.f32 0.0, %v743
    %v745 = vpop.f32.mrb[0].mxu0
    %v746 = vadd.f32 0.0, %v745
    %v747 = vpop.f32.mrb[0].mxu0
    %v748 = vpop.f32.mrb[0].mxu0
    %749 = vdwg.mxu0
    %750 = vmatprep.subr.bf16.mxu0 0
    %751 = vmatpush1.bf16.msra.mxu0 %v553
    %752 = vmatprep.subr.bf16.mxu0 0
    %753 = vmatpush1.bf16.msra.mxu0 %v556
    %754 = vmatprep.subr.bf16.mxu0 0
    %755 = vmatpush1.bf16.msra.mxu0 %v559
    %756 = vmatprep.subr.bf16.mxu0 0
    %757 = vmatpush1.bf16.msra.mxu0 %v562
    %758 = vmatprep.subr.bf16.mxu0 0
    %759 = vmatpush1.bf16.msra.mxu0 %v565
    %760 = vmatprep.subr.bf16.mxu0 0
    %761 = vmatpush1.bf16.msra.mxu0 %v568
    %762 = vmatprep.subr.bf16.mxu0 0
    %763 = vmatpush1.bf16.msra.mxu0 %v571
    %764 = vmatprep.subr.bf16.mxu0 0
    %765 = vmatpush1.bf16.msra.mxu0 %v574
    %766 = vmatprep.subr.bf16.mxu0 0
    %767 = vmatpush1.bf16.msra.mxu0 0
    %768 = vmatprep.subr.bf16.mxu0 0
    %769 = vmatpush1.bf16.msra.mxu0 0
    %770 = vmatprep.subr.bf16.mxu0 0
    %771 = vmatpush1.bf16.msra.mxu0 0
    %772 = vmatprep.subr.bf16.mxu0 0
    %773 = vmatpush1.bf16.msra.mxu0 0
    %774 = vmatprep.subr.bf16.mxu0 0
    %775 = vmatpush1.bf16.msra.mxu0 0
    %776 = vmatprep.subr.bf16.mxu0 0
    %777 = vmatpush1.bf16.msra.mxu0 0
    %778 = vmatprep.subr.bf16.mxu0 0
    %779 = vmatpush1.bf16.msra.mxu0 0
    %780 = vmatprep.subr.bf16.mxu0 0
    %781 = vmatpush1.bf16.msra.mxu0 0
    %782 = vmatprep.mubr.bf16.mxu0 0
    %783 = vmatmul.mubr.bf16.gmra.mrb[0].mxu0 %v702
    %v784 = vpop.f32.mrb[0].mxu0
    %v785 = vadd.f32 0.0, %v784
    %v786 = vpop.f32.mrb[0].mxu0
    %v787 = vpop.f32.mrb[0].mxu0
    %v788 = vpop.f32.mrb[0].mxu0
    %789 = vdwg.mxu0
    %v790 = vadd.f32 %v706, %v744
    %v791 = vxor.u32 %v790, 2147483648
    %v792 = vmul.f32 %v791, 1.442695
    %v793 = vpow.pop %v792
    %v794 = vadd.f32 %v793, 1.0
    %v795 = vrcp.pop %v794
    %v796 = vmul.f32 1.0, %v795
    %v797 = vadd.f32 %v707, %v746
    %v798 = vxor.u32 %v797, 2147483648
    %v799 = vmul.f32 %v798, 1.442695
    %v800 = vpow.pop %v799
    %v801 = vadd.f32 %v800, 1.0
    %v802 = vrcp.pop %v801
    %v803 = vmul.f32 1.0, %v802
    %v804 = vadd.f32 %v785, %v443
    %v805 = vmul.f32 %v796, %v804
    %v806 = vadd.f32 %v708, %v805
    %v807 = vtanh.pop %v806
    %v808 = vsub.f32 1.0, %v803
    %v809 = vmul.f32 %v808, %v807
    %v810 = vmul.f32 %v803, %v701
    %v811 = vadd.f32 %v809, %v810
    %v812 = vpack.c.bf16 %v811, %v811
    %s813 = scalar_lea.vmem [#allocation4], 16
    %814 = vst [vmem:[%s813] sm:$0xff] %v811
    %s815 = scalar_lea.vmem [#allocation3], 72
    %v816 = vld [vmem:[%s815] sm:$0xff]
    %v817 = vld [vmem:[%s815 + $0x8] sm:$0xff]
    %v818 = vld [vmem:[%s815 + $0x10] sm:$0xff]
    %819 = vmatprep.subr.bf16.mxu0 %v552
    %820 = vmatpush1.bf16.msra.mxu0 %v551
    %821 = vmatprep.subr.bf16.mxu0 %v555
    %822 = vmatpush1.bf16.msra.mxu0 %v554
    %823 = vmatprep.subr.bf16.mxu0 %v558
    %824 = vmatpush1.bf16.msra.mxu0 %v557
    %825 = vmatprep.subr.bf16.mxu0 %v561
    %826 = vmatpush1.bf16.msra.mxu0 %v560
    %827 = vmatprep.subr.bf16.mxu0 %v564
    %828 = vmatpush1.bf16.msra.mxu0 %v563
    %829 = vmatprep.subr.bf16.mxu0 %v567
    %830 = vmatpush1.bf16.msra.mxu0 %v566
    %831 = vmatprep.subr.bf16.mxu0 %v570
    %832 = vmatpush1.bf16.msra.mxu0 %v569
    %833 = vmatprep.subr.bf16.mxu0 %v573
    %834 = vmatpush1.bf16.msra.mxu0 %v572
    %835 = vmatprep.subr.bf16.mxu0 0
    %836 = vmatpush1.bf16.msra.mxu0 0
    %837 = vmatprep.subr.bf16.mxu0 0
    %838 = vmatpush1.bf16.msra.mxu0 0
    %839 = vmatprep.subr.bf16.mxu0 0
    %840 = vmatpush1.bf16.msra.mxu0 0
    %841 = vmatprep.subr.bf16.mxu0 0
    %842 = vmatpush1.bf16.msra.mxu0 0
    %843 = vmatprep.subr.bf16.mxu0 0
    %844 = vmatpush1.bf16.msra.mxu0 0
    %845 = vmatprep.subr.bf16.mxu0 0
    %846 = vmatpush1.bf16.msra.mxu0 0
    %847 = vmatprep.subr.bf16.mxu0 0
    %848 = vmatpush1.bf16.msra.mxu0 0
    %849 = vmatprep.subr.bf16.mxu0 0
    %850 = vmatpush1.bf16.msra.mxu0 0
    %851 = vmatprep.mubr.bf16.mxu0 0
    %852 = vmatmul.mubr.bf16.gmra.mrb[0].mxu0 %v812
    %v853 = vpop.f32.mrb[0].mxu0
    %v854 = vadd.f32 0.0, %v853
    %v855 = vpop.f32.mrb[0].mxu0
    %v856 = vadd.f32 0.0, %v855
    %v857 = vpop.f32.mrb[0].mxu0
    %v858 = vpop.f32.mrb[0].mxu0
    %859 = vdwg.mxu0
    %860 = vmatprep.subr.bf16.mxu0 0
    %861 = vmatpush1.bf16.msra.mxu0 %v553
    %862 = vmatprep.subr.bf16.mxu0 0
    %863 = vmatpush1.bf16.msra.mxu0 %v556
    %864 = vmatprep.subr.bf16.mxu0 0
    %865 = vmatpush1.bf16.msra.mxu0 %v559
    %866 = vmatprep.subr.bf16.mxu0 0
    %867 = vmatpush1.bf16.msra.mxu0 %v562
    %868 = vmatprep.subr.bf16.mxu0 0
    %869 = vmatpush1.bf16.msra.mxu0 %v565
    %870 = vmatprep.subr.bf16.mxu0 0
    %871 = vmatpush1.bf16.msra.mxu0 %v568
    %872 = vmatprep.subr.bf16.mxu0 0
    %873 = vmatpush1.bf16.msra.mxu0 %v571
    %874 = vmatprep.subr.bf16.mxu0 0
    %875 = vmatpush1.bf16.msra.mxu0 %v574
    %876 = vmatprep.subr.bf16.mxu0 0
    %877 = vmatpush1.bf16.msra.mxu0 0
    %878 = vmatprep.subr.bf16.mxu0 0
    %879 = vmatpush1.bf16.msra.mxu0 0
    %880 = vmatprep.subr.bf16.mxu0 0
    %881 = vmatpush1.bf16.msra.mxu0 0
    %882 = vmatprep.subr.bf16.mxu0 0
    %883 = vmatpush1.bf16.msra.mxu0 0
    %884 = vmatprep.subr.bf16.mxu0 0
    %885 = vmatpush1.bf16.msra.mxu0 0
    %886 = vmatprep.subr.bf16.mxu0 0
    %887 = vmatpush1.bf16.msra.mxu0 0
    %888 = vmatprep.subr.bf16.mxu0 0
    %889 = vmatpush1.bf16.msra.mxu0 0
    %890 = vmatprep.subr.bf16.mxu0 0
    %891 = vmatpush1.bf16.msra.mxu0 0
    %892 = vmatprep.mubr.bf16.mxu0 0
    %893 = vmatmul.mubr.bf16.gmra.mrb[0].mxu0 %v812
    %v894 = vpop.f32.mrb[0].mxu0
    %v895 = vadd.f32 0.0, %v894
    %v896 = vpop.f32.mrb[0].mxu0
    %v897 = vpop.f32.mrb[0].mxu0
    %v898 = vpop.f32.mrb[0].mxu0
    %899 = vdwg.mxu0
    %v900 = vadd.f32 %v816, %v854
    %v901 = vxor.u32 %v900, 2147483648
    %v902 = vmul.f32 %v901, 1.442695
    %v903 = vpow.pop %v902
    %v904 = vadd.f32 %v903, 1.0
    %v905 = vrcp.pop %v904
    %v906 = vmul.f32 1.0, %v905
    %v907 = vadd.f32 %v817, %v856
    %v908 = vxor.u32 %v907, 2147483648
    %v909 = vmul.f32 %v908, 1.442695
    %v910 = vpow.pop %v909
    %v911 = vadd.f32 %v910, 1.0
    %v912 = vrcp.pop %v911
    %v913 = vmul.f32 1.0, %v912
    %v914 = vadd.f32 %v895, %v443
    %v915 = vmul.f32 %v906, %v914
    %v916 = vadd.f32 %v818, %v915
    %v917 = vtanh.pop %v916
    %v918 = vsub.f32 1.0, %v913
    %v919 = vmul.f32 %v918, %v917
    %v920 = vmul.f32 %v913, %v811
    %v921 = vadd.f32 %v919, %v920
    %v922 = vpack.c.bf16 %v921, %v921
    %s923 = scalar_lea.vmem [#allocation4], 24
    %924 = vst [vmem:[%s923] sm:$0xff] %v921
    %s925 = scalar_lea.vmem [#allocation3], 96
    %v926 = vld [vmem:[%s925] sm:$0xff]
    %v927 = vld [vmem:[%s925 + $0x8] sm:$0xff]
    %v928 = vld [vmem:[%s925 + $0x10] sm:$0xff]
    %929 = vmatprep.subr.bf16.mxu0 %v552
    %930 = vmatpush1.bf16.msra.mxu0 %v551
    %931 = vmatprep.subr.bf16.mxu0 %v555
    %932 = vmatpush1.bf16.msra.mxu0 %v554
    %933 = vmatprep.subr.bf16.mxu0 %v558
    %934 = vmatpush1.bf16.msra.mxu0 %v557
    %935 = vmatprep.subr.bf16.mxu0 %v561
    %936 = vmatpush1.bf16.msra.mxu0 %v560
    %937 = vmatprep.subr.bf16.mxu0 %v564
    %938 = vmatpush1.bf16.msra.mxu0 %v563
    %939 = vmatprep.subr.bf16.mxu0 %v567
    %940 = vmatpush1.bf16.msra.mxu0 %v566
    %941 = vmatprep.subr.bf16.mxu0 %v570
    %942 = vmatpush1.bf16.msra.mxu0 %v569
    %943 = vmatprep.subr.bf16.mxu0 %v573
    %944 = vmatpush1.bf16.msra.mxu0 %v572
    %945 = vmatprep.subr.bf16.mxu0 0
    %946 = vmatpush1.bf16.msra.mxu0 0
    %947 = vmatprep.subr.bf16.mxu0 0
    %948 = vmatpush1.bf16.msra.mxu0 0
    %949 = vmatprep.subr.bf16.mxu0 0
    %950 = vmatpush1.bf16.msra.mxu0 0
    %951 = vmatprep.subr.bf16.mxu0 0
    %952 = vmatpush1.bf16.msra.mxu0 0
    %953 = vmatprep.subr.bf16.mxu0 0
    %954 = vmatpush1.bf16.msra.mxu0 0
    %955 = vmatprep.subr.bf16.mxu0 0
    %956 = vmatpush1.bf16.msra.mxu0 0
    %957 = vmatprep.subr.bf16.mxu0 0
    %958 = vmatpush1.bf16.msra.mxu0 0
    %959 = vmatprep.subr.bf16.mxu0 0
    %960 = vmatpush1.bf16.msra.mxu0 0
    %961 = vmatprep.mubr.bf16.mxu0 0
    %962 = vmatmul.mubr.bf16.gmra.mrb[0].mxu0 %v922
    %v963 = vpop.f32.mrb[0].mxu0
    %v964 = vadd.f32 0.0, %v963
    %v965 = vpop.f32.mrb[0].mxu0
    %v966 = vadd.f32 0.0, %v965
    %v967 = vpop.f32.mrb[0].mxu0
    %v968 = vpop.f32.mrb[0].mxu0
    %969 = vdwg.mxu0
    %970 = vmatprep.subr.bf16.mxu0 0
    %971 = vmatpush1.bf16.msra.mxu0 %v553
    %972 = vmatprep.subr.bf16.mxu0 0
    %973 = vmatpush1.bf16.msra.mxu0 %v556
    %974 = vmatprep.subr.bf16.mxu0 0
    %975 = vmatpush1.bf16.msra.mxu0 %v559
    %976 = vmatprep.subr.bf16.mxu0 0
    %977 = vmatpush1.bf16.msra.mxu0 %v562
    %978 = vmatprep.subr.bf16.mxu0 0
    %979 = vmatpush1.bf16.msra.mxu0 %v565
    %980 = vmatprep.subr.bf16.mxu0 0
    %981 = vmatpush1.bf16.msra.mxu0 %v568
    %982 = vmatprep.subr.bf16.mxu0 0
    %983 = vmatpush1.bf16.msra.mxu0 %v571
    %984 = vmatprep.subr.bf16.mxu0 0
    %985 = vmatpush1.bf16.msra.mxu0 %v574
    %986 = vmatprep.subr.bf16.mxu0 0
    %987 = vmatpush1.bf16.msra.mxu0 0
    %988 = vmatprep.subr.bf16.mxu0 0
    %989 = vmatpush1.bf16.msra.mxu0 0
    %990 = vmatprep.subr.bf16.mxu0 0
    %991 = vmatpush1.bf16.msra.mxu0 0
    %992 = vmatprep.subr.bf16.mxu0 0
    %993 = vmatpush1.bf16.msra.mxu0 0
    %994 = vmatprep.subr.bf16.mxu0 0
    %995 = vmatpush1.bf16.msra.mxu0 0
    %996 = vmatprep.subr.bf16.mxu0 0
    %997 = vmatpush1.bf16.msra.mxu0 0
    %998 = vmatprep.subr.bf16.mxu0 0
    %999 = vmatpush1.bf16.msra.mxu0 0
    %1000 = vmatprep.subr.bf16.mxu0 0
    %1001 = vmatpush1.bf16.msra.mxu0 0
    %1002 = vmatprep.mubr.bf16.mxu0 0
    %1003 = vmatmul.mubr.bf16.gmra.mrb[0].mxu0 %v922
    %v1004 = vpop.f32.mrb[0].mxu0
    %v1005 = vadd.f32 0.0, %v1004
    %v1006 = vpop.f32.mrb[0].mxu0
    %v1007 = vpop.f32.mrb[0].mxu0
    %v1008 = vpop.f32.mrb[0].mxu0
    %1009 = vdwg.mxu0
    %v1010 = vadd.f32 %v926, %v964
    %v1011 = vxor.u32 %v1010, 2147483648
    %v1012 = vmul.f32 %v1011, 1.442695
    %v1013 = vpow.pop %v1012
    %v1014 = vadd.f32 %v1013, 1.0
    %v1015 = vrcp.pop %v1014
    %v1016 = vmul.f32 1.0, %v1015
    %v1017 = vadd.f32 %v927, %v966
    %v1018 = vxor.u32 %v1017, 2147483648
    %v1019 = vmul.f32 %v1018, 1.442695
    %v1020 = vpow.pop %v1019
    %v1021 = vadd.f32 %v1020, 1.0
    %v1022 = vrcp.pop %v1021
    %v1023 = vmul.f32 1.0, %v1022
    %v1024 = vadd.f32 %v1005, %v443
    %v1025 = vmul.f32 %v1016, %v1024
    %v1026 = vadd.f32 %v928, %v1025
    %v1027 = vtanh.pop %v1026
    %v1028 = vsub.f32 1.0, %v1023
    %v1029 = vmul.f32 %v1028, %v1027
    %v1030 = vmul.f32 %v1023, %v921
    %v1031 = vadd.f32 %v1029, %v1030
    %v1032 = vpack.c.bf16 %v1031, %v1031
    %s1033 = scalar_lea.vmem [#allocation4], 32
    %1034 = vst [vmem:[%s1033] sm:$0xff] %v1031
    %s1035 = scalar_lea.vmem [#allocation3], 120
    %v1036 = vld [vmem:[%s1035] sm:$0xff]
    %v1037 = vld [vmem:[%s1035 + $0x8] sm:$0xff]
    %v1038 = vld [vmem:[%s1035 + $0x10] sm:$0xff]
    %1039 = vmatprep.subr.bf16.mxu0 %v552
    %1040 = vmatpush1.bf16.msra.mxu0 %v551
    %1041 = vmatprep.subr.bf16.mxu0 %v555
    %1042 = vmatpush1.bf16.msra.mxu0 %v554
    %1043 = vmatprep.subr.bf16.mxu0 %v558
    %1044 = vmatpush1.bf16.msra.mxu0 %v557
    %1045 = vmatprep.subr.bf16.mxu0 %v561
    %1046 = vmatpush1.bf16.msra.mxu0 %v560
    %1047 = vmatprep.subr.bf16.mxu0 %v564
    %1048 = vmatpush1.bf16.msra.mxu0 %v563
    %1049 = vmatprep.subr.bf16.mxu0 %v567
    %1050 = vmatpush1.bf16.msra.mxu0 %v566
    %1051 = vmatprep.subr.bf16.mxu0 %v570
    %1052 = vmatpush1.bf16.msra.mxu0 %v569
    %1053 = vmatprep.subr.bf16.mxu0 %v573
    %1054 = vmatpush1.bf16.msra.mxu0 %v572
    %1055 = vmatprep.subr.bf16.mxu0 0
    %1056 = vmatpush1.bf16.msra.mxu0 0
    %1057 = vmatprep.subr.bf16.mxu0 0
    %1058 = vmatpush1.bf16.msra.mxu0 0
    %1059 = vmatprep.subr.bf16.mxu0 0
    %1060 = vmatpush1.bf16.msra.mxu0 0
    %1061 = vmatprep.subr.bf16.mxu0 0
    %1062 = vmatpush1.bf16.msra.mxu0 0
    %1063 = vmatprep.subr.bf16.mxu0 0
    %1064 = vmatpush1.bf16.msra.mxu0 0
    %1065 = vmatprep.subr.bf16.mxu0 0
    %1066 = vmatpush1.bf16.msra.mxu0 0
    %1067 = vmatprep.subr.bf16.mxu0 0
    %1068 = vmatpush1.bf16.msra.mxu0 0
    %1069 = vmatprep.subr.bf16.mxu0 0
    %1070 = vmatpush1.bf16.msra.mxu0 0
    %1071 = vmatprep.mubr.bf16.mxu0 0
    %1072 = vmatmul.mubr.bf16.gmra.mrb[0].mxu0 %v1032
    %v1073 = vpop.f32.mrb[0].mxu0
    %v1074 = vadd.f32 0.0, %v1073
    %v1075 = vpop.f32.mrb[0].mxu0
    %v1076 = vadd.f32 0.0, %v1075
    %v1077 = vpop.f32.mrb[0].mxu0
    %v1078 = vpop.f32.mrb[0].mxu0
    %1079 = vdwg.mxu0
    %1080 = vmatprep.subr.bf16.mxu0 0
    %1081 = vmatpush1.bf16.msra.mxu0 %v553
    %1082 = vmatprep.subr.bf16.mxu0 0
    %1083 = vmatpush1.bf16.msra.mxu0 %v556
    %1084 = vmatprep.subr.bf16.mxu0 0
    %1085 = vmatpush1.bf16.msra.mxu0 %v559
    %1086 = vmatprep.subr.bf16.mxu0 0
    %1087 = vmatpush1.bf16.msra.mxu0 %v562
    %1088 = vmatprep.subr.bf16.mxu0 0
    %1089 = vmatpush1.bf16.msra.mxu0 %v565
    %1090 = vmatprep.subr.bf16.mxu0 0
    %1091 = vmatpush1.bf16.msra.mxu0 %v568
    %1092 = vmatprep.subr.bf16.mxu0 0
    %1093 = vmatpush1.bf16.msra.mxu0 %v571
    %1094 = vmatprep.subr.bf16.mxu0 0
    %1095 = vmatpush1.bf16.msra.mxu0 %v574
    %1096 = vmatprep.subr.bf16.mxu0 0
    %1097 = vmatpush1.bf16.msra.mxu0 0
    %1098 = vmatprep.subr.bf16.mxu0 0
    %1099 = vmatpush1.bf16.msra.mxu0 0
    %1100 = vmatprep.subr.bf16.mxu0 0
    %1101 = vmatpush1.bf16.msra.mxu0 0
    %1102 = vmatprep.subr.bf16.mxu0 0
    %1103 = vmatpush1.bf16.msra.mxu0 0
    %1104 = vmatprep.subr.bf16.mxu0 0
    %1105 = vmatpush1.bf16.msra.mxu0 0
    %1106 = vmatprep.subr.bf16.mxu0 0
    %1107 = vmatpush1.bf16.msra.mxu0 0
    %1108 = vmatprep.subr.bf16.mxu0 0
    %1109 = vmatpush1.bf16.msra.mxu0 0
    %1110 = vmatprep.subr.bf16.mxu0 0
    %1111 = vmatpush1.bf16.msra.mxu0 0
    %1112 = vmatprep.mubr.bf16.mxu0 0
    %1113 = vmatmul.mubr.bf16.gmra.mrb[0].mxu0 %v1032
    %v1114 = vpop.f32.mrb[0].mxu0
    %v1115 = vadd.f32 0.0, %v1114
    %v1116 = vpop.f32.mrb[0].mxu0
    %v1117 = vpop.f32.mrb[0].mxu0
    %v1118 = vpop.f32.mrb[0].mxu0
    %1119 = vdwg.mxu0
    %v1120 = vadd.f32 %v1036, %v1074
    %v1121 = vxor.u32 %v1120, 2147483648
    %v1122 = vmul.f32 %v1121, 1.442695
    %v1123 = vpow.pop %v1122
    %v1124 = vadd.f32 %v1123, 1.0
    %v1125 = vrcp.pop %v1124
    %v1126 = vmul.f32 1.0, %v1125
    %v1127 = vadd.f32 %v1037, %v1076
    %v1128 = vxor.u32 %v1127, 2147483648
    %v1129 = vmul.f32 %v1128, 1.442695
    %v1130 = vpow.pop %v1129
    %v1131 = vadd.f32 %v1130, 1.0
    %v1132 = vrcp.pop %v1131
    %v1133 = vmul.f32 1.0, %v1132
    %v1134 = vadd.f32 %v1115, %v443
    %v1135 = vmul.f32 %v1126, %v1134
    %v1136 = vadd.f32 %v1038, %v1135
    %v1137 = vtanh.pop %v1136
    %v1138 = vsub.f32 1.0, %v1133
    %v1139 = vmul.f32 %v1138, %v1137
    %v1140 = vmul.f32 %v1133, %v1031
    %v1141 = vadd.f32 %v1139, %v1140
    %v1142 = vpack.c.bf16 %v1141, %v1141
    %s1143 = scalar_lea.vmem [#allocation4], 40
    %1144 = vst [vmem:[%s1143] sm:$0xff] %v1141
    %s1145 = scalar_lea.vmem [#allocation3], 144
    %v1146 = vld [vmem:[%s1145] sm:$0xff]
    %v1147 = vld [vmem:[%s1145 + $0x8] sm:$0xff]
    %v1148 = vld [vmem:[%s1145 + $0x10] sm:$0xff]
    %1149 = vmatprep.subr.bf16.mxu0 %v552
    %1150 = vmatpush1.bf16.msra.mxu0 %v551
    %1151 = vmatprep.subr.bf16.mxu0 %v555
    %1152 = vmatpush1.bf16.msra.mxu0 %v554
    %1153 = vmatprep.subr.bf16.mxu0 %v558
    %1154 = vmatpush1.bf16.msra.mxu0 %v557
    %1155 = vmatprep.subr.bf16.mxu0 %v561
    %1156 = vmatpush1.bf16.msra.mxu0 %v560
    %1157 = vmatprep.subr.bf16.mxu0 %v564
    %1158 = vmatpush1.bf16.msra.mxu0 %v563
    %1159 = vmatprep.subr.bf16.mxu0 %v567
    %1160 = vmatpush1.bf16.msra.mxu0 %v566
    %1161 = vmatprep.subr.bf16.mxu0 %v570
    %1162 = vmatpush1.bf16.msra.mxu0 %v569
    %1163 = vmatprep.subr.bf16.mxu0 %v573
    %1164 = vmatpush1.bf16.msra.mxu0 %v572
    %1165 = vmatprep.subr.bf16.mxu0 0
    %1166 = vmatpush1.bf16.msra.mxu0 0
    %1167 = vmatprep.subr.bf16.mxu0 0
    %1168 = vmatpush1.bf16.msra.mxu0 0
    %1169 = vmatprep.subr.bf16.mxu0 0
    %1170 = vmatpush1.bf16.msra.mxu0 0
    %1171 = vmatprep.subr.bf16.mxu0 0
    %1172 = vmatpush1.bf16.msra.mxu0 0
    %1173 = vmatprep.subr.bf16.mxu0 0
    %1174 = vmatpush1.bf16.msra.mxu0 0
    %1175 = vmatprep.subr.bf16.mxu0 0
    %1176 = vmatpush1.bf16.msra.mxu0 0
    %1177 = vmatprep.subr.bf16.mxu0 0
    %1178 = vmatpush1.bf16.msra.mxu0 0
    %1179 = vmatprep.subr.bf16.mxu0 0
    %1180 = vmatpush1.bf16.msra.mxu0 0
    %1181 = vmatprep.mubr.bf16.mxu0 0
    %1182 = vmatmul.mubr.bf16.gmra.mrb[0].mxu0 %v1142
    %v1183 = vpop.f32.mrb[0].mxu0
    %v1184 = vadd.f32 0.0, %v1183
    %v1185 = vpop.f32.mrb[0].mxu0
    %v1186 = vadd.f32 0.0, %v1185
    %v1187 = vpop.f32.mrb[0].mxu0
    %v1188 = vpop.f32.mrb[0].mxu0
    %1189 = vdwg.mxu0
    %1190 = vmatprep.subr.bf16.mxu0 0
    %1191 = vmatpush1.bf16.msra.mxu0 %v553
    %1192 = vmatprep.subr.bf16.mxu0 0
    %1193 = vmatpush1.bf16.msra.mxu0 %v556
    %1194 = vmatprep.subr.bf16.mxu0 0
    %1195 = vmatpush1.bf16.msra.mxu0 %v559
    %1196 = vmatprep.subr.bf16.mxu0 0
    %1197 = vmatpush1.bf16.msra.mxu0 %v562
    %1198 = vmatprep.subr.bf16.mxu0 0
    %1199 = vmatpush1.bf16.msra.mxu0 %v565
    %1200 = vmatprep.subr.bf16.mxu0 0
    %1201 = vmatpush1.bf16.msra.mxu0 %v568
    %1202 = vmatprep.subr.bf16.mxu0 0
    %1203 = vmatpush1.bf16.msra.mxu0 %v571
    %1204 = vmatprep.subr.bf16.mxu0 0
    %1205 = vmatpush1.bf16.msra.mxu0 %v574
    %1206 = vmatprep.subr.bf16.mxu0 0
    %1207 = vmatpush1.bf16.msra.mxu0 0
    %1208 = vmatprep.subr.bf16.mxu0 0
    %1209 = vmatpush1.bf16.msra.mxu0 0
    %1210 = vmatprep.subr.bf16.mxu0 0
    %1211 = vmatpush1.bf16.msra.mxu0 0
    %1212 = vmatprep.subr.bf16.mxu0 0
    %1213 = vmatpush1.bf16.msra.mxu0 0
    %1214 = vmatprep.subr.bf16.mxu0 0
    %1215 = vmatpush1.bf16.msra.mxu0 0
    %1216 = vmatprep.subr.bf16.mxu0 0
    %1217 = vmatpush1.bf16.msra.mxu0 0
    %1218 = vmatprep.subr.bf16.mxu0 0
    %1219 = vmatpush1.bf16.msra.mxu0 0
    %1220 = vmatprep.subr.bf16.mxu0 0
    %1221 = vmatpush1.bf16.msra.mxu0 0
    %1222 = vmatprep.mubr.bf16.mxu0 0
    %1223 = vmatmul.mubr.bf16.gmra.mrb[0].mxu0 %v1142
    %v1224 = vpop.f32.mrb[0].mxu0
    %v1225 = vadd.f32 0.0, %v1224
    %v1226 = vpop.f32.mrb[0].mxu0
    %v1227 = vpop.f32.mrb[0].mxu0
    %v1228 = vpop.f32.mrb[0].mxu0
    %1229 = vdwg.mxu0
    %v1230 = vadd.f32 %v1146, %v1184
    %v1231 = vxor.u32 %v1230, 2147483648
    %v1232 = vmul.f32 %v1231, 1.442695
    %v1233 = vpow.pop %v1232
    %v1234 = vadd.f32 %v1233, 1.0
    %v1235 = vrcp.pop %v1234
    %v1236 = vmul.f32 1.0, %v1235
    %v1237 = vadd.f32 %v1147, %v1186
    %v1238 = vxor.u32 %v1237, 2147483648
    %v1239 = vmul.f32 %v1238, 1.442695
    %v1240 = vpow.pop %v1239
    %v1241 = vadd.f32 %v1240, 1.0
    %v1242 = vrcp.pop %v1241
    %v1243 = vmul.f32 1.0, %v1242
    %v1244 = vadd.f32 %v1225, %v443
    %v1245 = vmul.f32 %v1236, %v1244
    %v1246 = vadd.f32 %v1148, %v1245
    %v1247 = vtanh.pop %v1246
    %v1248 = vsub.f32 1.0, %v1243
    %v1249 = vmul.f32 %v1248, %v1247
    %v1250 = vmul.f32 %v1243, %v1141
    %v1251 = vadd.f32 %v1249, %v1250
    %v1252 = vpack.c.bf16 %v1251, %v1251
    %s1253 = scalar_lea.vmem [#allocation4], 48
    %1254 = vst [vmem:[%s1253] sm:$0xff] %v1251
    %s1255 = scalar_lea.vmem [#allocation3], 168
    %v1256 = vld [vmem:[%s1255] sm:$0xff]
    %v1257 = vld [vmem:[%s1255 + $0x8] sm:$0xff]
    %v1258 = vld [vmem:[%s1255 + $0x10] sm:$0xff]
    %1259 = vmatprep.subr.bf16.mxu0 %v552
    %1260 = vmatpush1.bf16.msra.mxu0 %v551
    %1261 = vmatprep.subr.bf16.mxu0 %v555
    %1262 = vmatpush1.bf16.msra.mxu0 %v554
    %1263 = vmatprep.subr.bf16.mxu0 %v558
    %1264 = vmatpush1.bf16.msra.mxu0 %v557
    %1265 = vmatprep.subr.bf16.mxu0 %v561
    %1266 = vmatpush1.bf16.msra.mxu0 %v560
    %1267 = vmatprep.subr.bf16.mxu0 %v564
    %1268 = vmatpush1.bf16.msra.mxu0 %v563
    %1269 = vmatprep.subr.bf16.mxu0 %v567
    %1270 = vmatpush1.bf16.msra.mxu0 %v566
    %1271 = vmatprep.subr.bf16.mxu0 %v570
    %1272 = vmatpush1.bf16.msra.mxu0 %v569
    %1273 = vmatprep.subr.bf16.mxu0 %v573
    %1274 = vmatpush1.bf16.msra.mxu0 %v572
    %1275 = vmatprep.subr.bf16.mxu0 0
    %1276 = vmatpush1.bf16.msra.mxu0 0
    %1277 = vmatprep.subr.bf16.mxu0 0
    %1278 = vmatpush1.bf16.msra.mxu0 0
    %1279 = vmatprep.subr.bf16.mxu0 0
    %1280 = vmatpush1.bf16.msra.mxu0 0
    %1281 = vmatprep.subr.bf16.mxu0 0
    %1282 = vmatpush1.bf16.msra.mxu0 0
    %1283 = vmatprep.subr.bf16.mxu0 0
    %1284 = vmatpush1.bf16.msra.mxu0 0
    %1285 = vmatprep.subr.bf16.mxu0 0
    %1286 = vmatpush1.bf16.msra.mxu0 0
    %1287 = vmatprep.subr.bf16.mxu0 0
    %1288 = vmatpush1.bf16.msra.mxu0 0
    %1289 = vmatprep.subr.bf16.mxu0 0
    %1290 = vmatpush1.bf16.msra.mxu0 0
    %1291 = vmatprep.mubr.bf16.mxu0 0
    %1292 = vmatmul.mubr.bf16.gmra.mrb[0].mxu0 %v1252
    %v1293 = vpop.f32.mrb[0].mxu0
    %v1294 = vadd.f32 0.0, %v1293
    %v1295 = vpop.f32.mrb[0].mxu0
    %v1296 = vadd.f32 0.0, %v1295
    %v1297 = vpop.f32.mrb[0].mxu0
    %v1298 = vpop.f32.mrb[0].mxu0
    %1299 = vdwg.mxu0
    %1300 = vmatprep.subr.bf16.mxu0 0
    %1301 = vmatpush1.bf16.msra.mxu0 %v553
    %1302 = vmatprep.subr.bf16.mxu0 0
    %1303 = vmatpush1.bf16.msra.mxu0 %v556
    %1304 = vmatprep.subr.bf16.mxu0 0
    %1305 = vmatpush1.bf16.msra.mxu0 %v559
    %1306 = vmatprep.subr.bf16.mxu0 0
    %1307 = vmatpush1.bf16.msra.mxu0 %v562
    %1308 = vmatprep.subr.bf16.mxu0 0
    %1309 = vmatpush1.bf16.msra.mxu0 %v565
    %1310 = vmatprep.subr.bf16.mxu0 0
    %1311 = vmatpush1.bf16.msra.mxu0 %v568
    %1312 = vmatprep.subr.bf16.mxu0 0
    %1313 = vmatpush1.bf16.msra.mxu0 %v571
    %1314 = vmatprep.subr.bf16.mxu0 0
    %1315 = vmatpush1.bf16.msra.mxu0 %v574
    %1316 = vmatprep.subr.bf16.mxu0 0
    %1317 = vmatpush1.bf16.msra.mxu0 0
    %1318 = vmatprep.subr.bf16.mxu0 0
    %1319 = vmatpush1.bf16.msra.mxu0 0
    %1320 = vmatprep.subr.bf16.mxu0 0
    %1321 = vmatpush1.bf16.msra.mxu0 0
    %1322 = vmatprep.subr.bf16.mxu0 0
    %1323 = vmatpush1.bf16.msra.mxu0 0
    %1324 = vmatprep.subr.bf16.mxu0 0
    %1325 = vmatpush1.bf16.msra.mxu0 0
    %1326 = vmatprep.subr.bf16.mxu0 0
    %1327 = vmatpush1.bf16.msra.mxu0 0
    %1328 = vmatprep.subr.bf16.mxu0 0
    %1329 = vmatpush1.bf16.msra.mxu0 0
    %1330 = vmatprep.subr.bf16.mxu0 0
    %1331 = vmatpush1.bf16.msra.mxu0 0
    %1332 = vmatprep.mubr.bf16.mxu0 0
    %1333 = vmatmul.mubr.bf16.gmra.mrb[0].mxu0 %v1252
    %v1334 = vpop.f32.mrb[0].mxu0
    %v1335 = vadd.f32 0.0, %v1334
    %v1336 = vpop.f32.mrb[0].mxu0
    %v1337 = vpop.f32.mrb[0].mxu0
    %v1338 = vpop.f32.mrb[0].mxu0
    %1339 = vdwg.mxu0
    %v1340 = vadd.f32 %v1256, %v1294
    %v1341 = vxor.u32 %v1340, 2147483648
    %v1342 = vmul.f32 %v1341, 1.442695
    %v1343 = vpow.pop %v1342
    %v1344 = vadd.f32 %v1343, 1.0
    %v1345 = vrcp.pop %v1344
    %v1346 = vmul.f32 1.0, %v1345
    %v1347 = vadd.f32 %v1257, %v1296
    %v1348 = vxor.u32 %v1347, 2147483648
    %v1349 = vmul.f32 %v1348, 1.442695
    %v1350 = vpow.pop %v1349
    %v1351 = vadd.f32 %v1350, 1.0
    %v1352 = vrcp.pop %v1351
    %v1353 = vmul.f32 1.0, %v1352
    %v1354 = vadd.f32 %v1335, %v443
    %v1355 = vmul.f32 %v1346, %v1354
    %v1356 = vadd.f32 %v1258, %v1355
    %v1357 = vtanh.pop %v1356
    %v1358 = vsub.f32 1.0, %v1353
    %v1359 = vmul.f32 %v1358, %v1357
    %v1360 = vmul.f32 %v1353, %v1251
    %v1361 = vadd.f32 %v1359, %v1360
    %s1362 = scalar_lea.vmem [#allocation4], 56
    %1363 = vst [vmem:[%s1362] sm:$0xff] %v1361
    %v1364 = vld [vmem:[#allocation4] sm:$0xff]
    %v1365 = vld [vmem:[#allocation4 + $0x8] sm:$0xff]
    %v1366 = vld [vmem:[#allocation4 + $0x10] sm:$0xff]
    %v1367 = vld [vmem:[#allocation4 + $0x18] sm:$0xff]
    %v1368 = vld [vmem:[#allocation4 + $0x20] sm:$0xff]
    %v1369 = vld [vmem:[#allocation4 + $0x28] sm:$0xff]
    %v1370 = vld [vmem:[#allocation4 + $0x30] sm:$0xff]
    %v1371 = vld [vmem:[#allocation4 + $0x38] sm:$0xff]
    %v1372 = vpack.c.bf16 %v1365, %v1364
    %v1373 = vpack.c.bf16 %v1367, %v1366
    %v1374 = vpack.c.bf16 %v1369, %v1368
    %v1375 = vpack.c.bf16 %v1371, %v1370
    %v1376 = vld [vmem:[#allocation8] sm:$0xff]
    %v1377 = vld [vmem:[#allocation8 + $0x8] sm:$0xf]
    %v1378 = vld [vmem:[#allocation8 + $0xc] sm:$0xff]
    %v1379 = vld [vmem:[#allocation8 + $0x14] sm:$0xf]
    %v1380 = vld [vmem:[#allocation8 + $0x18] sm:$0xff]
    %v1381 = vld [vmem:[#allocation8 + $0x20] sm:$0xf]
    %v1382 = vld [vmem:[#allocation8 + $0x24] sm:$0xff]
    %v1383 = vld [vmem:[#allocation8 + $0x2c] sm:$0xf]
    %v1384 = vld [vmem:[#allocation8 + $0x30] sm:$0xff]
    %v1385 = vld [vmem:[#allocation8 + $0x38] sm:$0xf]
    %v1386 = vld [vmem:[#allocation8 + $0x3c] sm:$0xff]
    %v1387 = vld [vmem:[#allocation8 + $0x44] sm:$0xf]
    %v1388 = vld [vmem:[#allocation8 + $0x48] sm:$0xff]
    %v1389 = vld [vmem:[#allocation8 + $0x50] sm:$0xf]
    %v1390 = vld [vmem:[#allocation8 + $0x54] sm:$0xff]
    %v1391 = vld [vmem:[#allocation8 + $0x5c] sm:$0xf]
    %v1392 = vld [vmem:[#allocation8 + $0x60] sm:$0xff]
    %v1393 = vld [vmem:[#allocation8 + $0x68] sm:$0xf]
    %v1394 = vld [vmem:[#allocation8 + $0x6c] sm:$0xff]
    %v1395 = vld [vmem:[#allocation8 + $0x74] sm:$0xf]
    %v1396 = vld [vmem:[#allocation8 + $0x78] sm:$0xff]
    %v1397 = vld [vmem:[#allocation8 + $0x80] sm:$0xf]
    %v1398 = vld [vmem:[#allocation8 + $0x84] sm:$0xff]
    %v1399 = vld [vmem:[#allocation8 + $0x8c] sm:$0xf]
    %v1400 = vld [vmem:[#allocation8 + $0x90] sm:$0xff]
    %v1401 = vld [vmem:[#allocation8 + $0x98] sm:$0xf]
    %v1402 = vld [vmem:[#allocation8 + $0x9c] sm:$0xff]
    %v1403 = vld [vmem:[#allocation8 + $0xa4] sm:$0xf]
    %v1404 = vld [vmem:[#allocation8 + $0xa8] sm:$0xff]
    %v1405 = vld [vmem:[#allocation8 + $0xb0] sm:$0xf]
    %v1406 = vld [vmem:[#allocation8 + $0xb4] sm:$0xff]
    %v1407 = vld [vmem:[#allocation8 + $0xbc] sm:$0xf]
    %v1408 = vld [vmem:[%s7] sm:$0x7]
    %v1410 = vlaneseq
    %v1411 = vshrl.u32 %v1410, 7
    %v1412 = vsub.s32 0, %v1411
    %v1413 = vrot.slane %v1408, %v1412
    %v1414 = vlaneseq
    %v1415 = vshrl.u32 %v1414, 7
    %v1416 = vsub.s32 1, %v1415
    %v1417 = vrot.slane %v1408, %v1416
    %v1418 = vlaneseq
    %v1419 = vshrl.u32 %v1418, 7
    %v1420 = vsub.s32 2, %v1419
    %v1421 = vrot.slane %v1408, %v1420
    %v1457 = vunpack.c.l.b16 %v1376
    %v1458 = vunpack.c.h.b16 %v1376
    %v1459 = vunpack.c.l.b16 %v1377
    %v1460 = vunpack.c.l.b16 %v1378
    %v1461 = vunpack.c.h.b16 %v1378
    %v1462 = vunpack.c.l.b16 %v1379
    %v1463 = vunpack.c.l.b16 %v1380
    %v1464 = vunpack.c.h.b16 %v1380
    %v1465 = vunpack.c.l.b16 %v1381
    %v1466 = vunpack.c.l.b16 %v1382
    %v1467 = vunpack.c.h.b16 %v1382
    %v1468 = vunpack.c.l.b16 %v1383
    %v1469 = vunpack.c.l.b16 %v1384
    %v1470 = vunpack.c.h.b16 %v1384
    %v1471 = vunpack.c.l.b16 %v1385
    %v1472 = vunpack.c.l.b16 %v1386
    %v1473 = vunpack.c.h.b16 %v1386
    %v1474 = vunpack.c.l.b16 %v1387
    %v1475 = vunpack.c.l.b16 %v1388
    %v1476 = vunpack.c.h.b16 %v1388
    %v1477 = vunpack.c.l.b16 %v1389
    %v1478 = vunpack.c.l.b16 %v1390
    %v1479 = vunpack.c.h.b16 %v1390
    %v1480 = vunpack.c.l.b16 %v1391
    %v1481 = vunpack.c.l.b16 %v1392
    %v1482 = vunpack.c.h.b16 %v1392
    %v1483 = vunpack.c.l.b16 %v1393
    %v1484 = vunpack.c.l.b16 %v1394
    %v1485 = vunpack.c.h.b16 %v1394
    %v1486 = vunpack.c.l.b16 %v1395
    %v1487 = vunpack.c.l.b16 %v1396
    %v1488 = vunpack.c.h.b16 %v1396
    %v1489 = vunpack.c.l.b16 %v1397
    %v1490 = vunpack.c.l.b16 %v1398
    %v1491 = vunpack.c.h.b16 %v1398
    %v1492 = vunpack.c.l.b16 %v1399
    %v1493 = vunpack.c.l.b16 %v1400
    %v1494 = vunpack.c.h.b16 %v1400
    %v1495 = vunpack.c.l.b16 %v1401
    %v1496 = vunpack.c.l.b16 %v1402
    %v1497 = vunpack.c.h.b16 %v1402
    %v1498 = vunpack.c.l.b16 %v1403
    %v1499 = vunpack.c.l.b16 %v1404
    %v1500 = vunpack.c.h.b16 %v1404
    %v1501 = vunpack.c.l.b16 %v1405
    %v1502 = vunpack.c.l.b16 %v1406
    %v1503 = vunpack.c.h.b16 %v1406
    %v1504 = vunpack.c.l.b16 %v1407
    %v1505 = vpack.c.b16 %v1460, %v1457
    %v1506 = vpack.c.b16 %v1461, %v1458
    %v1507 = vpack.c.b16 %v1462, %v1459
    %v1508 = vpack.c.b16 %v1466, %v1463
    %v1509 = vpack.c.b16 %v1467, %v1464
    %v1510 = vpack.c.b16 %v1468, %v1465
    %v1511 = vpack.c.b16 %v1472, %v1469
    %v1512 = vpack.c.b16 %v1473, %v1470
    %v1513 = vpack.c.b16 %v1474, %v1471
    %v1514 = vpack.c.b16 %v1478, %v1475
    %v1515 = vpack.c.b16 %v1479, %v1476
    %v1516 = vpack.c.b16 %v1480, %v1477
    %v1517 = vpack.c.b16 %v1484, %v1481
    %v1518 = vpack.c.b16 %v1485, %v1482
    %v1519 = vpack.c.b16 %v1486, %v1483
    %v1520 = vpack.c.b16 %v1490, %v1487
    %v1521 = vpack.c.b16 %v1491, %v1488
    %v1522 = vpack.c.b16 %v1492, %v1489
    %v1523 = vpack.c.b16 %v1496, %v1493
    %v1524 = vpack.c.b16 %v1497, %v1494
    %v1525 = vpack.c.b16 %v1498, %v1495
    %v1526 = vpack.c.b16 %v1502, %v1499
    %v1527 = vpack.c.b16 %v1503, %v1500
    %v1528 = vpack.c.b16 %v1504, %v1501
    %1553 = vmatprep.subr.bf16.mxu0 %v1506
    %1554 = vmatpush1.bf16.msra.mxu0 %v1505
    %1555 = vmatprep.subr.bf16.mxu0 %v1509
    %1556 = vmatpush1.bf16.msra.mxu0 %v1508
    %1557 = vmatprep.subr.bf16.mxu0 %v1512
    %1558 = vmatpush1.bf16.msra.mxu0 %v1511
    %1559 = vmatprep.subr.bf16.mxu0 %v1515
    %1560 = vmatpush1.bf16.msra.mxu0 %v1514
    %1561 = vmatprep.subr.bf16.mxu0 %v1518
    %1562 = vmatpush1.bf16.msra.mxu0 %v1517
    %1563 = vmatprep.subr.bf16.mxu0 %v1521
    %1564 = vmatpush1.bf16.msra.mxu0 %v1520
    %1565 = vmatprep.subr.bf16.mxu0 %v1524
    %1566 = vmatpush1.bf16.msra.mxu0 %v1523
    %1567 = vmatprep.subr.bf16.mxu0 %v1527
    %1568 = vmatpush1.bf16.msra.mxu0 %v1526
    %1569 = vmatprep.subr.bf16.mxu0 0
    %1570 = vmatpush1.bf16.msra.mxu0 0
    %1571 = vmatprep.subr.bf16.mxu0 0
    %1572 = vmatpush1.bf16.msra.mxu0 0
    %1573 = vmatprep.subr.bf16.mxu0 0
    %1574 = vmatpush1.bf16.msra.mxu0 0
    %1575 = vmatprep.subr.bf16.mxu0 0
    %1576 = vmatpush1.bf16.msra.mxu0 0
    %1577 = vmatprep.subr.bf16.mxu0 0
    %1578 = vmatpush1.bf16.msra.mxu0 0
    %1579 = vmatprep.subr.bf16.mxu0 0
    %1580 = vmatpush1.bf16.msra.mxu0 0
    %1581 = vmatprep.subr.bf16.mxu0 0
    %1582 = vmatpush1.bf16.msra.mxu0 0
    %1583 = vmatprep.subr.bf16.mxu0 0
    %1584 = vmatpush1.bf16.msra.mxu0 0
    %1585 = vmatprep.mubr.bf16.mxu0 0
    %1586 = vmatmul.mubr.bf16.gmra.mrb[0].mxu0 %v1372
    %v1587 = vpop.f32.mrb[0].mxu0
    %v1588 = vadd.f32 %v1413, %v1587
    %v1589 = vpop.f32.mrb[0].mxu0
    %v1590 = vadd.f32 %v1417, %v1589
    %v1591 = vpop.f32.mrb[0].mxu0
    %v1592 = vadd.f32 %v1413, %v1591
    %v1593 = vpop.f32.mrb[0].mxu0
    %v1594 = vadd.f32 %v1417, %v1593
    %1595 = vmatprep.mubr.bf16.mxu0 0
    %1596 = vmatmul.mubr.bf16.gmra.mrb[0].mxu0 %v1373
    %v1597 = vpop.f32.mrb[0].mxu0
    %v1598 = vadd.f32 %v1413, %v1597
    %v1599 = vpop.f32.mrb[0].mxu0
    %v1600 = vadd.f32 %v1417, %v1599
    %v1601 = vpop.f32.mrb[0].mxu0
    %v1602 = vadd.f32 %v1413, %v1601
    %v1603 = vpop.f32.mrb[0].mxu0
    %v1604 = vadd.f32 %v1417, %v1603
    %1605 = vmatprep.mubr.bf16.mxu0 0
    %1606 = vmatmul.mubr.bf16.gmra.mrb[0].mxu0 %v1374
    %v1607 = vpop.f32.mrb[0].mxu0
    %v1608 = vadd.f32 %v1413, %v1607
    %v1609 = vpop.f32.mrb[0].mxu0
    %v1610 = vadd.f32 %v1417, %v1609
    %v1611 = vpop.f32.mrb[0].mxu0
    %v1612 = vadd.f32 %v1413, %v1611
    %v1613 = vpop.f32.mrb[0].mxu0
    %v1614 = vadd.f32 %v1417, %v1613
    %1615 = vmatprep.mubr.bf16.mxu0 0
    %1616 = vmatmul.mubr.bf16.gmra.mrb[0].mxu0 %v1375
    %v1617 = vpop.f32.mrb[0].mxu0
    %v1618 = vadd.f32 %v1413, %v1617
    %v1619 = vpop.f32.mrb[0].mxu0
    %v1620 = vadd.f32 %v1417, %v1619
    %v1621 = vpop.f32.mrb[0].mxu0
    %v1622 = vadd.f32 %v1413, %v1621
    %v1623 = vpop.f32.mrb[0].mxu0
    %v1624 = vadd.f32 %v1417, %v1623
    %1625 = vdwg.mxu0
    %1626 = vmatprep.subr.bf16.mxu0 0
    %1627 = vmatpush1.bf16.msra.mxu0 %v1507
    %1628 = vmatprep.subr.bf16.mxu0 0
    %1629 = vmatpush1.bf16.msra.mxu0 %v1510
    %1630 = vmatprep.subr.bf16.mxu0 0
    %1631 = vmatpush1.bf16.msra.mxu0 %v1513
    %1632 = vmatprep.subr.bf16.mxu0 0
    %1633 = vmatpush1.bf16.msra.mxu0 %v1516
    %1634 = vmatprep.subr.bf16.mxu0 0
    %1635 = vmatpush1.bf16.msra.mxu0 %v1519
    %1636 = vmatprep.subr.bf16.mxu0 0
    %1637 = vmatpush1.bf16.msra.mxu0 %v1522
    %1638 = vmatprep.subr.bf16.mxu0 0
    %1639 = vmatpush1.bf16.msra.mxu0 %v1525
    %1640 = vmatprep.subr.bf16.mxu0 0
    %1641 = vmatpush1.bf16.msra.mxu0 %v1528
    %1642 = vmatprep.subr.bf16.mxu0 0
    %1643 = vmatpush1.bf16.msra.mxu0 0
    %1644 = vmatprep.subr.bf16.mxu0 0
    %1645 = vmatpush1.bf16.msra.mxu0 0
    %1646 = vmatprep.subr.bf16.mxu0 0
    %1647 = vmatpush1.bf16.msra.mxu0 0
    %1648 = vmatprep.subr.bf16.mxu0 0
    %1649 = vmatpush1.bf16.msra.mxu0 0
    %1650 = vmatprep.subr.bf16.mxu0 0
    %1651 = vmatpush1.bf16.msra.mxu0 0
    %1652 = vmatprep.subr.bf16.mxu0 0
    %1653 = vmatpush1.bf16.msra.mxu0 0
    %1654 = vmatprep.subr.bf16.mxu0 0
    %1655 = vmatpush1.bf16.msra.mxu0 0
    %1656 = vmatprep.subr.bf16.mxu0 0
    %1657 = vmatpush1.bf16.msra.mxu0 0
    %1658 = vmatprep.mubr.bf16.mxu0 0
    %1659 = vmatmul.mubr.bf16.gmra.mrb[0].mxu0 %v1372
    %v1660 = vpop.f32.mrb[0].mxu0
    %v1661 = vadd.f32 %v1421, %v1660
    %v1662 = vpop.f32.mrb[0].mxu0
    %v1663 = vpop.f32.mrb[0].mxu0
    %v1664 = vadd.f32 %v1421, %v1663
    %v1665 = vpop.f32.mrb[0].mxu0
    %1666 = vmatprep.mubr.bf16.mxu0 0
    %1667 = vmatmul.mubr.bf16.gmra.mrb[0].mxu0 %v1373
    %v1668 = vpop.f32.mrb[0].mxu0
    %v1669 = vadd.f32 %v1421, %v1668
    %v1670 = vpop.f32.mrb[0].mxu0
    %v1671 = vpop.f32.mrb[0].mxu0
    %v1672 = vadd.f32 %v1421, %v1671
    %v1673 = vpop.f32.mrb[0].mxu0
    %1674 = vmatprep.mubr.bf16.mxu0 0
    %1675 = vmatmul.mubr.bf16.gmra.mrb[0].mxu0 %v1374
    %v1676 = vpop.f32.mrb[0].mxu0
    %v1677 = vadd.f32 %v1421, %v1676
    %v1678 = vpop.f32.mrb[0].mxu0
    %v1679 = vpop.f32.mrb[0].mxu0
    %v1680 = vadd.f32 %v1421, %v1679
    %v1681 = vpop.f32.mrb[0].mxu0
    %1682 = vmatprep.mubr.bf16.mxu0 0
    %1683 = vmatmul.mubr.bf16.gmra.mrb[0].mxu0 %v1375
    %v1684 = vpop.f32.mrb[0].mxu0
    %v1685 = vadd.f32 %v1421, %v1684
    %v1686 = vpop.f32.mrb[0].mxu0
    %v1687 = vpop.f32.mrb[0].mxu0
    %v1688 = vadd.f32 %v1421, %v1687
    %v1689 = vpop.f32.mrb[0].mxu0
    %1690 = vdwg.mxu0
    %1691 = vst [vmem:[#allocation3] sm:$0xff] %v1588
    %1692 = vst [vmem:[#allocation3 + $0x8] sm:$0xff] %v1590
    %1693 = vst [vmem:[#allocation3 + $0x10] sm:$0xff] %v1661
    %1694 = vst [vmem:[#allocation3 + $0x18] sm:$0xff] %v1592
    %1695 = vst [vmem:[#allocation3 + $0x20] sm:$0xff] %v1594
    %1696 = vst [vmem:[#allocation3 + $0x28] sm:$0xff] %v1664
    %1697 = vst [vmem:[#allocation3 + $0x30] sm:$0xff] %v1598
    %1698 = vst [vmem:[#allocation3 + $0x38] sm:$0xff] %v1600
    %1699 = vst [vmem:[#allocation3 + $0x40] sm:$0xff] %v1669
    %1700 = vst [vmem:[#allocation3 + $0x48] sm:$0xff] %v1602
    %1701 = vst [vmem:[#allocation3 + $0x50] sm:$0xff] %v1604
    %1702 = vst [vmem:[#allocation3 + $0x58] sm:$0xff] %v1672
    %1703 = vst [vmem:[#allocation3 + $0x60] sm:$0xff] %v1608
    %1704 = vst [vmem:[#allocation3 + $0x68] sm:$0xff] %v1610
    %1705 = vst [vmem:[#allocation3 + $0x70] sm:$0xff] %v1677
    %1706 = vst [vmem:[#allocation3 + $0x78] sm:$0xff] %v1612
    %1707 = vst [vmem:[#allocation3 + $0x80] sm:$0xff] %v1614
    %1708 = vst [vmem:[#allocation3 + $0x88] sm:$0xff] %v1680
    %1709 = vst [vmem:[#allocation3 + $0x90] sm:$0xff] %v1618
    %1710 = vst [vmem:[#allocation3 + $0x98] sm:$0xff] %v1620
    %1711 = vst [vmem:[#allocation3 + $0xa0] sm:$0xff] %v1685
    %1712 = vst [vmem:[#allocation3 + $0xa8] sm:$0xff] %v1622
    %1713 = vst [vmem:[#allocation3 + $0xb0] sm:$0xff] %v1624
    %1714 = vst [vmem:[#allocation3 + $0xb8] sm:$0xff] %v1688
    %v1715 = vld [vmem:[#allocation10] sm:$0xff]
    %v1716 = vld [vmem:[#allocation10 + $0x8] sm:$0xf]
    %v1717 = vld [vmem:[#allocation10 + $0xc] sm:$0xff]
    %v1718 = vld [vmem:[#allocation10 + $0x14] sm:$0xf]
    %v1719 = vld [vmem:[#allocation10 + $0x18] sm:$0xff]
    %v1720 = vld [vmem:[#allocation10 + $0x20] sm:$0xf]
    %v1721 = vld [vmem:[#allocation10 + $0x24] sm:$0xff]
    %v1722 = vld [vmem:[#allocation10 + $0x2c] sm:$0xf]
    %v1723 = vld [vmem:[#allocation10 + $0x30] sm:$0xff]
    %v1724 = vld [vmem:[#allocation10 + $0x38] sm:$0xf]
    %v1725 = vld [vmem:[#allocation10 + $0x3c] sm:$0xff]
    %v1726 = vld [vmem:[#allocation10 + $0x44] sm:$0xf]
    %v1727 = vld [vmem:[#allocation10 + $0x48] sm:$0xff]
    %v1728 = vld [vmem:[#allocation10 + $0x50] sm:$0xf]
    %v1729 = vld [vmem:[#allocation10 + $0x54] sm:$0xff]
    %v1730 = vld [vmem:[#allocation10 + $0x5c] sm:$0xf]
    %v1731 = vld [vmem:[#allocation10 + $0x60] sm:$0xff]
    %v1732 = vld [vmem:[#allocation10 + $0x68] sm:$0xf]
    %v1733 = vld [vmem:[#allocation10 + $0x6c] sm:$0xff]
    %v1734 = vld [vmem:[#allocation10 + $0x74] sm:$0xf]
    %v1735 = vld [vmem:[#allocation10 + $0x78] sm:$0xff]
    %v1736 = vld [vmem:[#allocation10 + $0x80] sm:$0xf]
    %v1737 = vld [vmem:[#allocation10 + $0x84] sm:$0xff]
    %v1738 = vld [vmem:[#allocation10 + $0x8c] sm:$0xf]
    %v1739 = vld [vmem:[#allocation10 + $0x90] sm:$0xff]
    %v1740 = vld [vmem:[#allocation10 + $0x98] sm:$0xf]
    %v1741 = vld [vmem:[#allocation10 + $0x9c] sm:$0xff]
    %v1742 = vld [vmem:[#allocation10 + $0xa4] sm:$0xf]
    %v1743 = vld [vmem:[#allocation10 + $0xa8] sm:$0xff]
    %v1744 = vld [vmem:[#allocation10 + $0xb0] sm:$0xf]
    %v1745 = vld [vmem:[#allocation10 + $0xb4] sm:$0xff]
    %v1746 = vld [vmem:[#allocation10 + $0xbc] sm:$0xf]
    %v1747 = vld [vmem:[%s8] sm:$0x1]
    %v1749 = vlaneseq
    %v1750 = vshrl.u32 %v1749, 7
    %v1751 = vsub.s32 0, %v1750
    %v1752 = vrot.slane %v1747, %v1751
    %v1754 = vld [vmem:[#allocation3] sm:$0xff]
    %v1755 = vld [vmem:[#allocation3 + $0x8] sm:$0xff]
    %v1756 = vld [vmem:[#allocation3 + $0x10] sm:$0xff]
    %v1757 = vxor.u32 %v1754, 2147483648
    %v1758 = vmul.f32 %v1757, 1.442695
    %v1759 = vpow.pop %v1758
    %v1760 = vadd.f32 %v1759, 1.0
    %v1761 = vrcp.pop %v1760
    %v1762 = vmul.f32 1.0, %v1761
    %v1763 = vxor.u32 %v1755, 2147483648
    %v1764 = vmul.f32 %v1763, 1.442695
    %v1765 = vpow.pop %v1764
    %v1766 = vadd.f32 %v1765, 1.0
    %v1767 = vrcp.pop %v1766
    %v1768 = vmul.f32 1.0, %v1767
    %v1769 = vmul.f32 %v1762, %v1752
    %v1770 = vadd.f32 %v1756, %v1769
    %v1771 = vtanh.pop %v1770
    %v1772 = vsub.f32 1.0, %v1768
    %v1773 = vmul.f32 %v1772, %v1771
    %v1774 = vpack.c.bf16 %v1773, %v1773
    %v1775 = vld [vmem:[%s467] sm:$0xff]
    %v1776 = vld [vmem:[%s467 + $0x8] sm:$0xff]
    %v1777 = vld [vmem:[%s467 + $0x10] sm:$0xff]
    %v1810 = vunpack.c.l.b16 %v1715
    %v1811 = vunpack.c.h.b16 %v1715
    %v1812 = vunpack.c.l.b16 %v1716
    %v1813 = vunpack.c.l.b16 %v1717
    %v1814 = vunpack.c.h.b16 %v1717
    %v1815 = vunpack.c.l.b16 %v1718
    %v1816 = vunpack.c.l.b16 %v1719
    %v1817 = vunpack.c.h.b16 %v1719
    %v1818 = vunpack.c.l.b16 %v1720
    %v1819 = vunpack.c.l.b16 %v1721
    %v1820 = vunpack.c.h.b16 %v1721
    %v1821 = vunpack.c.l.b16 %v1722
    %v1822 = vunpack.c.l.b16 %v1723
    %v1823 = vunpack.c.h.b16 %v1723
    %v1824 = vunpack.c.l.b16 %v1724
    %v1825 = vunpack.c.l.b16 %v1725
    %v1826 = vunpack.c.h.b16 %v1725
    %v1827 = vunpack.c.l.b16 %v1726
    %v1828 = vunpack.c.l.b16 %v1727
    %v1829 = vunpack.c.h.b16 %v1727
    %v1830 = vunpack.c.l.b16 %v1728
    %v1831 = vunpack.c.l.b16 %v1729
    %v1832 = vunpack.c.h.b16 %v1729
    %v1833 = vunpack.c.l.b16 %v1730
    %v1834 = vunpack.c.l.b16 %v1731
    %v1835 = vunpack.c.h.b16 %v1731
    %v1836 = vunpack.c.l.b16 %v1732
    %v1837 = vunpack.c.l.b16 %v1733
    %v1838 = vunpack.c.h.b16 %v1733
    %v1839 = vunpack.c.l.b16 %v1734
    %v1840 = vunpack.c.l.b16 %v1735
    %v1841 = vunpack.c.h.b16 %v1735
    %v1842 = vunpack.c.l.b16 %v1736
    %v1843 = vunpack.c.l.b16 %v1737
    %v1844 = vunpack.c.h.b16 %v1737
    %v1845 = vunpack.c.l.b16 %v1738
    %v1846 = vunpack.c.l.b16 %v1739
    %v1847 = vunpack.c.h.b16 %v1739
    %v1848 = vunpack.c.l.b16 %v1740
    %v1849 = vunpack.c.l.b16 %v1741
    %v1850 = vunpack.c.h.b16 %v1741
    %v1851 = vunpack.c.l.b16 %v1742
    %v1852 = vunpack.c.l.b16 %v1743
    %v1853 = vunpack.c.h.b16 %v1743
    %v1854 = vunpack.c.l.b16 %v1744
    %v1855 = vunpack.c.l.b16 %v1745
    %v1856 = vunpack.c.h.b16 %v1745
    %v1857 = vunpack.c.l.b16 %v1746
    %v1858 = vpack.c.b16 %v1813, %v1810
    %v1859 = vpack.c.b16 %v1814, %v1811
    %v1860 = vpack.c.b16 %v1815, %v1812
    %v1861 = vpack.c.b16 %v1819, %v1816
    %v1862 = vpack.c.b16 %v1820, %v1817
    %v1863 = vpack.c.b16 %v1821, %v1818
    %v1864 = vpack.c.b16 %v1825, %v1822
    %v1865 = vpack.c.b16 %v1826, %v1823
    %v1866 = vpack.c.b16 %v1827, %v1824
    %v1867 = vpack.c.b16 %v1831, %v1828
    %v1868 = vpack.c.b16 %v1832, %v1829
    %v1869 = vpack.c.b16 %v1833, %v1830
    %v1870 = vpack.c.b16 %v1837, %v1834
    %v1871 = vpack.c.b16 %v1838, %v1835
    %v1872 = vpack.c.b16 %v1839, %v1836
    %v1873 = vpack.c.b16 %v1843, %v1840
    %v1874 = vpack.c.b16 %v1844, %v1841
    %v1875 = vpack.c.b16 %v1845, %v1842
    %v1876 = vpack.c.b16 %v1849, %v1846
    %v1877 = vpack.c.b16 %v1850, %v1847
    %v1878 = vpack.c.b16 %v1851, %v1848
    %v1879 = vpack.c.b16 %v1855, %v1852
    %v1880 = vpack.c.b16 %v1856, %v1853
    %v1881 = vpack.c.b16 %v1857, %v1854
    %1906 = vmatprep.subr.bf16.mxu0 %v1859
    %1907 = vmatpush1.bf16.msra.mxu0 %v1858
    %1908 = vmatprep.subr.bf16.mxu0 %v1862
    %1909 = vmatpush1.bf16.msra.mxu0 %v1861
    %1910 = vmatprep.subr.bf16.mxu0 %v1865
    %1911 = vmatpush1.bf16.msra.mxu0 %v1864
    %1912 = vmatprep.subr.bf16.mxu0 %v1868
    %1913 = vmatpush1.bf16.msra.mxu0 %v1867
    %1914 = vmatprep.subr.bf16.mxu0 %v1871
    %1915 = vmatpush1.bf16.msra.mxu0 %v1870
    %1916 = vmatprep.subr.bf16.mxu0 %v1874
    %1917 = vmatpush1.bf16.msra.mxu0 %v1873
    %1918 = vmatprep.subr.bf16.mxu0 %v1877
    %1919 = vmatpush1.bf16.msra.mxu0 %v1876
    %1920 = vmatprep.subr.bf16.mxu0 %v1880
    %1921 = vmatpush1.bf16.msra.mxu0 %v1879
    %1922 = vmatprep.subr.bf16.mxu0 0
    %1923 = vmatpush1.bf16.msra.mxu0 0
    %1924 = vmatprep.subr.bf16.mxu0 0
    %1925 = vmatpush1.bf16.msra.mxu0 0
    %1926 = vmatprep.subr.bf16.mxu0 0
    %1927 = vmatpush1.bf16.msra.mxu0 0
    %1928 = vmatprep.subr.bf16.mxu0 0
    %1929 = vmatpush1.bf16.msra.mxu0 0
    %1930 = vmatprep.subr.bf16.mxu0 0
    %1931 = vmatpush1.bf16.msra.mxu0 0
    %1932 = vmatprep.subr.bf16.mxu0 0
    %1933 = vmatpush1.bf16.msra.mxu0 0
    %1934 = vmatprep.subr.bf16.mxu0 0
    %1935 = vmatpush1.bf16.msra.mxu0 0
    %1936 = vmatprep.subr.bf16.mxu0 0
    %1937 = vmatpush1.bf16.msra.mxu0 0
    %1938 = vmatprep.mubr.bf16.mxu0 0
    %1939 = vmatmul.mubr.bf16.gmra.mrb[0].mxu0 %v1774
    %v1940 = vpop.f32.mrb[0].mxu0
    %v1941 = vadd.f32 0.0, %v1940
    %v1942 = vpop.f32.mrb[0].mxu0
    %v1943 = vadd.f32 0.0, %v1942
    %v1944 = vpop.f32.mrb[0].mxu0
    %v1945 = vpop.f32.mrb[0].mxu0
    %1946 = vdwg.mxu0
    %1947 = vmatprep.subr.bf16.mxu0 0
    %1948 = vmatpush1.bf16.msra.mxu0 %v1860
    %1949 = vmatprep.subr.bf16.mxu0 0
    %1950 = vmatpush1.bf16.msra.mxu0 %v1863
    %1951 = vmatprep.subr.bf16.mxu0 0
    %1952 = vmatpush1.bf16.msra.mxu0 %v1866
    %1953 = vmatprep.subr.bf16.mxu0 0
    %1954 = vmatpush1.bf16.msra.mxu0 %v1869
    %1955 = vmatprep.subr.bf16.mxu0 0
    %1956 = vmatpush1.bf16.msra.mxu0 %v1872
    %1957 = vmatprep.subr.bf16.mxu0 0
    %1958 = vmatpush1.bf16.msra.mxu0 %v1875
    %1959 = vmatprep.subr.bf16.mxu0 0
    %1960 = vmatpush1.bf16.msra.mxu0 %v1878
    %1961 = vmatprep.subr.bf16.mxu0 0
    %1962 = vmatpush1.bf16.msra.mxu0 %v1881
    %1963 = vmatprep.subr.bf16.mxu0 0
    %1964 = vmatpush1.bf16.msra.mxu0 0
    %1965 = vmatprep.subr.bf16.mxu0 0
    %1966 = vmatpush1.bf16.msra.mxu0 0
    %1967 = vmatprep.subr.bf16.mxu0 0
    %1968 = vmatpush1.bf16.msra.mxu0 0
    %1969 = vmatprep.subr.bf16.mxu0 0
    %1970 = vmatpush1.bf16.msra.mxu0 0
    %1971 = vmatprep.subr.bf16.mxu0 0
    %1972 = vmatpush1.bf16.msra.mxu0 0
    %1973 = vmatprep.subr.bf16.mxu0 0
    %1974 = vmatpush1.bf16.msra.mxu0 0
    %1975 = vmatprep.subr.bf16.mxu0 0
    %1976 = vmatpush1.bf16.msra.mxu0 0
    %1977 = vmatprep.subr.bf16.mxu0 0
    %1978 = vmatpush1.bf16.msra.mxu0 0
    %1979 = vmatprep.mubr.bf16.mxu0 0
    %1980 = vmatmul.mubr.bf16.gmra.mrb[0].mxu0 %v1774
    %v1981 = vpop.f32.mrb[0].mxu0
    %v1982 = vadd.f32 0.0, %v1981
    %v1983 = vpop.f32.mrb[0].mxu0
    %v1984 = vpop.f32.mrb[0].mxu0
    %v1985 = vpop.f32.mrb[0].mxu0
    %1986 = vdwg.mxu0
    %v1987 = vadd.f32 %v1775, %v1941
    %v1988 = vxor.u32 %v1987, 2147483648
    %v1989 = vmul.f32 %v1988, 1.442695
    %v1990 = vpow.pop %v1989
    %v1991 = vadd.f32 %v1990, 1.0
    %v1992 = vrcp.pop %v1991
    %v1993 = vmul.f32 1.0, %v1992
    %v1994 = vadd.f32 %v1776, %v1943
    %v1995 = vxor.u32 %v1994, 2147483648
    %v1996 = vmul.f32 %v1995, 1.442695
    %v1997 = vpow.pop %v1996
    %v1998 = vadd.f32 %v1997, 1.0
    %v1999 = vrcp.pop %v1998
    %v2000 = vmul.f32 1.0, %v1999
    %v2001 = vadd.f32 %v1982, %v1752
    %v2002 = vmul.f32 %v1993, %v2001
    %v2003 = vadd.f32 %v1777, %v2002
    %v2004 = vtanh.pop %v2003
    %v2005 = vsub.f32 1.0, %v2000
    %v2006 = vmul.f32 %v2005, %v2004
    %v2007 = vmul.f32 %v2000, %v1773
    %v2008 = vadd.f32 %v2006, %v2007
    %v2009 = vpack.c.bf16 %v2008, %v2008
    %v2010 = vld [vmem:[%s705] sm:$0xff]
    %v2011 = vld [vmem:[%s705 + $0x8] sm:$0xff]
    %v2012 = vld [vmem:[%s705 + $0x10] sm:$0xff]
    %2013 = vmatprep.subr.bf16.mxu0 %v1859
    %2014 = vmatpush1.bf16.msra.mxu0 %v1858
    %2015 = vmatprep.subr.bf16.mxu0 %v1862
    %2016 = vmatpush1.bf16.msra.mxu0 %v1861
    %2017 = vmatprep.subr.bf16.mxu0 %v1865
    %2018 = vmatpush1.bf16.msra.mxu0 %v1864
    %2019 = vmatprep.subr.bf16.mxu0 %v1868
    %2020 = vmatpush1.bf16.msra.mxu0 %v1867
    %2021 = vmatprep.subr.bf16.mxu0 %v1871
    %2022 = vmatpush1.bf16.msra.mxu0 %v1870
    %2023 = vmatprep.subr.bf16.mxu0 %v1874
    %2024 = vmatpush1.bf16.msra.mxu0 %v1873
    %2025 = vmatprep.subr.bf16.mxu0 %v1877
    %2026 = vmatpush1.bf16.msra.mxu0 %v1876
    %2027 = vmatprep.subr.bf16.mxu0 %v1880
    %2028 = vmatpush1.bf16.msra.mxu0 %v1879
    %2029 = vmatprep.subr.bf16.mxu0 0
    %2030 = vmatpush1.bf16.msra.mxu0 0
    %2031 = vmatprep.subr.bf16.mxu0 0
    %2032 = vmatpush1.bf16.msra.mxu0 0
    %2033 = vmatprep.subr.bf16.mxu0 0
    %2034 = vmatpush1.bf16.msra.mxu0 0
    %2035 = vmatprep.subr.bf16.mxu0 0
    %2036 = vmatpush1.bf16.msra.mxu0 0
    %2037 = vmatprep.subr.bf16.mxu0 0
    %2038 = vmatpush1.bf16.msra.mxu0 0
    %2039 = vmatprep.subr.bf16.mxu0 0
    %2040 = vmatpush1.bf16.msra.mxu0 0
    %2041 = vmatprep.subr.bf16.mxu0 0
    %2042 = vmatpush1.bf16.msra.mxu0 0
    %2043 = vmatprep.subr.bf16.mxu0 0
    %2044 = vmatpush1.bf16.msra.mxu0 0
    %2045 = vmatprep.mubr.bf16.mxu0 0
    %2046 = vmatmul.mubr.bf16.gmra.mrb[0].mxu0 %v2009
    %v2047 = vpop.f32.mrb[0].mxu0
    %v2048 = vadd.f32 0.0, %v2047
    %v2049 = vpop.f32.mrb[0].mxu0
    %v2050 = vadd.f32 0.0, %v2049
    %v2051 = vpop.f32.mrb[0].mxu0
    %v2052 = vpop.f32.mrb[0].mxu0
    %2053 = vdwg.mxu0
    %2054 = vmatprep.subr.bf16.mxu0 0
    %2055 = vmatpush1.bf16.msra.mxu0 %v1860
    %2056 = vmatprep.subr.bf16.mxu0 0
    %2057 = vmatpush1.bf16.msra.mxu0 %v1863
    %2058 = vmatprep.subr.bf16.mxu0 0
    %2059 = vmatpush1.bf16.msra.mxu0 %v1866
    %2060 = vmatprep.subr.bf16.mxu0 0
    %2061 = vmatpush1.bf16.msra.mxu0 %v1869
    %2062 = vmatprep.subr.bf16.mxu0 0
    %2063 = vmatpush1.bf16.msra.mxu0 %v1872
    %2064 = vmatprep.subr.bf16.mxu0 0
    %2065 = vmatpush1.bf16.msra.mxu0 %v1875
    %2066 = vmatprep.subr.bf16.mxu0 0
    %2067 = vmatpush1.bf16.msra.mxu0 %v1878
    %2068 = vmatprep.subr.bf16.mxu0 0
    %2069 = vmatpush1.bf16.msra.mxu0 %v1881
    %2070 = vmatprep.subr.bf16.mxu0 0
    %2071 = vmatpush1.bf16.msra.mxu0 0
    %2072 = vmatprep.subr.bf16.mxu0 0
    %2073 = vmatpush1.bf16.msra.mxu0 0
    %2074 = vmatprep.subr.bf16.mxu0 0
    %2075 = vmatpush1.bf16.msra.mxu0 0
    %2076 = vmatprep.subr.bf16.mxu0 0
    %2077 = vmatpush1.bf16.msra.mxu0 0
    %2078 = vmatprep.subr.bf16.mxu0 0
    %2079 = vmatpush1.bf16.msra.mxu0 0
    %2080 = vmatprep.subr.bf16.mxu0 0
    %2081 = vmatpush1.bf16.msra.mxu0 0
    %2082 = vmatprep.subr.bf16.mxu0 0
    %2083 = vmatpush1.bf16.msra.mxu0 0
    %2084 = vmatprep.subr.bf16.mxu0 0
    %2085 = vmatpush1.bf16.msra.mxu0 0
    %2086 = vmatprep.mubr.bf16.mxu0 0
    %2087 = vmatmul.mubr.bf16.gmra.mrb[0].mxu0 %v2009
    %v2088 = vpop.f32.mrb[0].mxu0
    %v2089 = vadd.f32 0.0, %v2088
    %v2090 = vpop.f32.mrb[0].mxu0
    %v2091 = vpop.f32.mrb[0].mxu0
    %v2092 = vpop.f32.mrb[0].mxu0
    %2093 = vdwg.mxu0
    %v2094 = vadd.f32 %v2010, %v2048
    %v2095 = vxor.u32 %v2094, 2147483648
    %v2096 = vmul.f32 %v2095, 1.442695
    %v2097 = vpow.pop %v2096
    %v2098 = vadd.f32 %v2097, 1.0
    %v2099 = vrcp.pop %v2098
    %v2100 = vmul.f32 1.0, %v2099
    %v2101 = vadd.f32 %v2011, %v2050
    %v2102 = vxor.u32 %v2101, 2147483648
    %v2103 = vmul.f32 %v2102, 1.442695
    %v2104 = vpow.pop %v2103
    %v2105 = vadd.f32 %v2104, 1.0
    %v2106 = vrcp.pop %v2105
    %v2107 = vmul.f32 1.0, %v2106
    %v2108 = vadd.f32 %v2089, %v1752
    %v2109 = vmul.f32 %v2100, %v2108
    %v2110 = vadd.f32 %v2012, %v2109
    %v2111 = vtanh.pop %v2110
    %v2112 = vsub.f32 1.0, %v2107
    %v2113 = vmul.f32 %v2112, %v2111
    %v2114 = vmul.f32 %v2107, %v2008
    %v2115 = vadd.f32 %v2113, %v2114
    %v2116 = vpack.c.bf16 %v2115, %v2115
    %v2117 = vld [vmem:[%s815] sm:$0xff]
    %v2118 = vld [vmem:[%s815 + $0x8] sm:$0xff]
    %v2119 = vld [vmem:[%s815 + $0x10] sm:$0xff]
    %2120 = vmatprep.subr.bf16.mxu0 %v1859
    %2121 = vmatpush1.bf16.msra.mxu0 %v1858
    %2122 = vmatprep.subr.bf16.mxu0 %v1862
    %2123 = vmatpush1.bf16.msra.mxu0 %v1861
    %2124 = vmatprep.subr.bf16.mxu0 %v1865
    %2125 = vmatpush1.bf16.msra.mxu0 %v1864
    %2126 = vmatprep.subr.bf16.mxu0 %v1868
    %2127 = vmatpush1.bf16.msra.mxu0 %v1867
    %2128 = vmatprep.subr.bf16.mxu0 %v1871
    %2129 = vmatpush1.bf16.msra.mxu0 %v1870
    %2130 = vmatprep.subr.bf16.mxu0 %v1874
    %2131 = vmatpush1.bf16.msra.mxu0 %v1873
    %2132 = vmatprep.subr.bf16.mxu0 %v1877
    %2133 = vmatpush1.bf16.msra.mxu0 %v1876
    %2134 = vmatprep.subr.bf16.mxu0 %v1880
    %2135 = vmatpush1.bf16.msra.mxu0 %v1879
    %2136 = vmatprep.subr.bf16.mxu0 0
    %2137 = vmatpush1.bf16.msra.mxu0 0
    %2138 = vmatprep.subr.bf16.mxu0 0
    %2139 = vmatpush1.bf16.msra.mxu0 0
    %2140 = vmatprep.subr.bf16.mxu0 0
    %2141 = vmatpush1.bf16.msra.mxu0 0
    %2142 = vmatprep.subr.bf16.mxu0 0
    %2143 = vmatpush1.bf16.msra.mxu0 0
    %2144 = vmatprep.subr.bf16.mxu0 0
    %2145 = vmatpush1.bf16.msra.mxu0 0
    %2146 = vmatprep.subr.bf16.mxu0 0
    %2147 = vmatpush1.bf16.msra.mxu0 0
    %2148 = vmatprep.subr.bf16.mxu0 0
    %2149 = vmatpush1.bf16.msra.mxu0 0
    %2150 = vmatprep.subr.bf16.mxu0 0
    %2151 = vmatpush1.bf16.msra.mxu0 0
    %2152 = vmatprep.mubr.bf16.mxu0 0
    %2153 = vmatmul.mubr.bf16.gmra.mrb[0].mxu0 %v2116
    %v2154 = vpop.f32.mrb[0].mxu0
    %v2155 = vadd.f32 0.0, %v2154
    %v2156 = vpop.f32.mrb[0].mxu0
    %v2157 = vadd.f32 0.0, %v2156
    %v2158 = vpop.f32.mrb[0].mxu0
    %v2159 = vpop.f32.mrb[0].mxu0
    %2160 = vdwg.mxu0
    %2161 = vmatprep.subr.bf16.mxu0 0
    %2162 = vmatpush1.bf16.msra.mxu0 %v1860
    %2163 = vmatprep.subr.bf16.mxu0 0
    %2164 = vmatpush1.bf16.msra.mxu0 %v1863
    %2165 = vmatprep.subr.bf16.mxu0 0
    %2166 = vmatpush1.bf16.msra.mxu0 %v1866
    %2167 = vmatprep.subr.bf16.mxu0 0
    %2168 = vmatpush1.bf16.msra.mxu0 %v1869
    %2169 = vmatprep.subr.bf16.mxu0 0
    %2170 = vmatpush1.bf16.msra.mxu0 %v1872
    %2171 = vmatprep.subr.bf16.mxu0 0
    %2172 = vmatpush1.bf16.msra.mxu0 %v1875
    %2173 = vmatprep.subr.bf16.mxu0 0
    %2174 = vmatpush1.bf16.msra.mxu0 %v1878
    %2175 = vmatprep.subr.bf16.mxu0 0
    %2176 = vmatpush1.bf16.msra.mxu0 %v1881
    %2177 = vmatprep.subr.bf16.mxu0 0
    %2178 = vmatpush1.bf16.msra.mxu0 0
    %2179 = vmatprep.subr.bf16.mxu0 0
    %2180 = vmatpush1.bf16.msra.mxu0 0
    %2181 = vmatprep.subr.bf16.mxu0 0
    %2182 = vmatpush1.bf16.msra.mxu0 0
    %2183 = vmatprep.subr.bf16.mxu0 0
    %2184 = vmatpush1.bf16.msra.mxu0 0
    %2185 = vmatprep.subr.bf16.mxu0 0
    %2186 = vmatpush1.bf16.msra.mxu0 0
    %2187 = vmatprep.subr.bf16.mxu0 0
    %2188 = vmatpush1.bf16.msra.mxu0 0
    %2189 = vmatprep.subr.bf16.mxu0 0
    %2190 = vmatpush1.bf16.msra.mxu0 0
    %2191 = vmatprep.subr.bf16.mxu0 0
    %2192 = vmatpush1.bf16.msra.mxu0 0
    %2193 = vmatprep.mubr.bf16.mxu0 0
    %2194 = vmatmul.mubr.bf16.gmra.mrb[0].mxu0 %v2116
    %v2195 = vpop.f32.mrb[0].mxu0
    %v2196 = vadd.f32 0.0, %v2195
    %v2197 = vpop.f32.mrb[0].mxu0
    %v2198 = vpop.f32.mrb[0].mxu0
    %v2199 = vpop.f32.mrb[0].mxu0
    %2200 = vdwg.mxu0
    %v2201 = vadd.f32 %v2117, %v2155
    %v2202 = vxor.u32 %v2201, 2147483648
    %v2203 = vmul.f32 %v2202, 1.442695
    %v2204 = vpow.pop %v2203
    %v2205 = vadd.f32 %v2204, 1.0
    %v2206 = vrcp.pop %v2205
    %v2207 = vmul.f32 1.0, %v2206
    %v2208 = vadd.f32 %v2118, %v2157
    %v2209 = vxor.u32 %v2208, 2147483648
    %v2210 = vmul.f32 %v2209, 1.442695
    %v2211 = vpow.pop %v2210
    %v2212 = vadd.f32 %v2211, 1.0
    %v2213 = vrcp.pop %v2212
    %v2214 = vmul.f32 1.0, %v2213
    %v2215 = vadd.f32 %v2196, %v1752
    %v2216 = vmul.f32 %v2207, %v2215
    %v2217 = vadd.f32 %v2119, %v2216
    %v2218 = vtanh.pop %v2217
    %v2219 = vsub.f32 1.0, %v2214
    %v2220 = vmul.f32 %v2219, %v2218
    %v2221 = vmul.f32 %v2214, %v2115
    %v2222 = vadd.f32 %v2220, %v2221
    %v2223 = vpack.c.bf16 %v2222, %v2222
    %v2224 = vld [vmem:[%s925] sm:$0xff]
    %v2225 = vld [vmem:[%s925 + $0x8] sm:$0xff]
    %v2226 = vld [vmem:[%s925 + $0x10] sm:$0xff]
    %2227 = vmatprep.subr.bf16.mxu0 %v1859
    %2228 = vmatpush1.bf16.msra.mxu0 %v1858
    %2229 = vmatprep.subr.bf16.mxu0 %v1862
    %2230 = vmatpush1.bf16.msra.mxu0 %v1861
    %2231 = vmatprep.subr.bf16.mxu0 %v1865
    %2232 = vmatpush1.bf16.msra.mxu0 %v1864
    %2233 = vmatprep.subr.bf16.mxu0 %v1868
    %2234 = vmatpush1.bf16.msra.mxu0 %v1867
    %2235 = vmatprep.subr.bf16.mxu0 %v1871
    %2236 = vmatpush1.bf16.msra.mxu0 %v1870
    %2237 = vmatprep.subr.bf16.mxu0 %v1874
    %2238 = vmatpush1.bf16.msra.mxu0 %v1873
    %2239 = vmatprep.subr.bf16.mxu0 %v1877
    %2240 = vmatpush1.bf16.msra.mxu0 %v1876
    %2241 = vmatprep.subr.bf16.mxu0 %v1880
    %2242 = vmatpush1.bf16.msra.mxu0 %v1879
    %2243 = vmatprep.subr.bf16.mxu0 0
    %2244 = vmatpush1.bf16.msra.mxu0 0
    %2245 = vmatprep.subr.bf16.mxu0 0
    %2246 = vmatpush1.bf16.msra.mxu0 0
    %2247 = vmatprep.subr.bf16.mxu0 0
    %2248 = vmatpush1.bf16.msra.mxu0 0
    %2249 = vmatprep.subr.bf16.mxu0 0
    %2250 = vmatpush1.bf16.msra.mxu0 0
    %2251 = vmatprep.subr.bf16.mxu0 0
    %2252 = vmatpush1.bf16.msra.mxu0 0
    %2253 = vmatprep.subr.bf16.mxu0 0
    %2254 = vmatpush1.bf16.msra.mxu0 0
    %2255 = vmatprep.subr.bf16.mxu0 0
    %2256 = vmatpush1.bf16.msra.mxu0 0
    %2257 = vmatprep.subr.bf16.mxu0 0
    %2258 = vmatpush1.bf16.msra.mxu0 0
    %2259 = vmatprep.mubr.bf16.mxu0 0
    %2260 = vmatmul.mubr.bf16.gmra.mrb[0].mxu0 %v2223
    %v2261 = vpop.f32.mrb[0].mxu0
    %v2262 = vadd.f32 0.0, %v2261
    %v2263 = vpop.f32.mrb[0].mxu0
    %v2264 = vadd.f32 0.0, %v2263
    %v2265 = vpop.f32.mrb[0].mxu0
    %v2266 = vpop.f32.mrb[0].mxu0
    %2267 = vdwg.mxu0
    %2268 = vmatprep.subr.bf16.mxu0 0
    %2269 = vmatpush1.bf16.msra.mxu0 %v1860
    %2270 = vmatprep.subr.bf16.mxu0 0
    %2271 = vmatpush1.bf16.msra.mxu0 %v1863
    %2272 = vmatprep.subr.bf16.mxu0 0
    %2273 = vmatpush1.bf16.msra.mxu0 %v1866
    %2274 = vmatprep.subr.bf16.mxu0 0
    %2275 = vmatpush1.bf16.msra.mxu0 %v1869
    %2276 = vmatprep.subr.bf16.mxu0 0
    %2277 = vmatpush1.bf16.msra.mxu0 %v1872
    %2278 = vmatprep.subr.bf16.mxu0 0
    %2279 = vmatpush1.bf16.msra.mxu0 %v1875
    %2280 = vmatprep.subr.bf16.mxu0 0
    %2281 = vmatpush1.bf16.msra.mxu0 %v1878
    %2282 = vmatprep.subr.bf16.mxu0 0
    %2283 = vmatpush1.bf16.msra.mxu0 %v1881
    %2284 = vmatprep.subr.bf16.mxu0 0
    %2285 = vmatpush1.bf16.msra.mxu0 0
    %2286 = vmatprep.subr.bf16.mxu0 0
    %2287 = vmatpush1.bf16.msra.mxu0 0
    %2288 = vmatprep.subr.bf16.mxu0 0
    %2289 = vmatpush1.bf16.msra.mxu0 0
    %2290 = vmatprep.subr.bf16.mxu0 0
    %2291 = vmatpush1.bf16.msra.mxu0 0
    %2292 = vmatprep.subr.bf16.mxu0 0
    %2293 = vmatpush1.bf16.msra.mxu0 0
    %2294 = vmatprep.subr.bf16.mxu0 0
    %2295 = vmatpush1.bf16.msra.mxu0 0
    %2296 = vmatprep.subr.bf16.mxu0 0
    %2297 = vmatpush1.bf16.msra.mxu0 0
    %2298 = vmatprep.subr.bf16.mxu0 0
    %2299 = vmatpush1.bf16.msra.mxu0 0
    %2300 = vmatprep.mubr.bf16.mxu0 0
    %2301 = vmatmul.mubr.bf16.gmra.mrb[0].mxu0 %v2223
    %v2302 = vpop.f32.mrb[0].mxu0
    %v2303 = vadd.f32 0.0, %v2302
    %v2304 = vpop.f32.mrb[0].mxu0
    %v2305 = vpop.f32.mrb[0].mxu0
    %v2306 = vpop.f32.mrb[0].mxu0
    %2307 = vdwg.mxu0
    %v2308 = vadd.f32 %v2224, %v2262
    %v2309 = vxor.u32 %v2308, 2147483648
    %v2310 = vmul.f32 %v2309, 1.442695
    %v2311 = vpow.pop %v2310
    %v2312 = vadd.f32 %v2311, 1.0
    %v2313 = vrcp.pop %v2312
    %v2314 = vmul.f32 1.0, %v2313
    %v2315 = vadd.f32 %v2225, %v2264
    %v2316 = vxor.u32 %v2315, 2147483648
    %v2317 = vmul.f32 %v2316, 1.442695
    %v2318 = vpow.pop %v2317
    %v2319 = vadd.f32 %v2318, 1.0
    %v2320 = vrcp.pop %v2319
    %v2321 = vmul.f32 1.0, %v2320
    %v2322 = vadd.f32 %v2303, %v1752
    %v2323 = vmul.f32 %v2314, %v2322
    %v2324 = vadd.f32 %v2226, %v2323
    %v2325 = vtanh.pop %v2324
    %v2326 = vsub.f32 1.0, %v2321
    %v2327 = vmul.f32 %v2326, %v2325
    %v2328 = vmul.f32 %v2321, %v2222
    %v2329 = vadd.f32 %v2327, %v2328
    %v2330 = vpack.c.bf16 %v2329, %v2329
    %v2331 = vld [vmem:[%s1035] sm:$0xff]
    %v2332 = vld [vmem:[%s1035 + $0x8] sm:$0xff]
    %v2333 = vld [vmem:[%s1035 + $0x10] sm:$0xff]
    %2334 = vmatprep.subr.bf16.mxu0 %v1859
    %2335 = vmatpush1.bf16.msra.mxu0 %v1858
    %2336 = vmatprep.subr.bf16.mxu0 %v1862
    %2337 = vmatpush1.bf16.msra.mxu0 %v1861
    %2338 = vmatprep.subr.bf16.mxu0 %v1865
    %2339 = vmatpush1.bf16.msra.mxu0 %v1864
    %2340 = vmatprep.subr.bf16.mxu0 %v1868
    %2341 = vmatpush1.bf16.msra.mxu0 %v1867
    %2342 = vmatprep.subr.bf16.mxu0 %v1871
    %2343 = vmatpush1.bf16.msra.mxu0 %v1870
    %2344 = vmatprep.subr.bf16.mxu0 %v1874
    %2345 = vmatpush1.bf16.msra.mxu0 %v1873
    %2346 = vmatprep.subr.bf16.mxu0 %v1877
    %2347 = vmatpush1.bf16.msra.mxu0 %v1876
    %2348 = vmatprep.subr.bf16.mxu0 %v1880
    %2349 = vmatpush1.bf16.msra.mxu0 %v1879
    %2350 = vmatprep.subr.bf16.mxu0 0
    %2351 = vmatpush1.bf16.msra.mxu0 0
    %2352 = vmatprep.subr.bf16.mxu0 0
    %2353 = vmatpush1.bf16.msra.mxu0 0
    %2354 = vmatprep.subr.bf16.mxu0 0
    %2355 = vmatpush1.bf16.msra.mxu0 0
    %2356 = vmatprep.subr.bf16.mxu0 0
    %2357 = vmatpush1.bf16.msra.mxu0 0
    %2358 = vmatprep.subr.bf16.mxu0 0
    %2359 = vmatpush1.bf16.msra.mxu0 0
    %2360 = vmatprep.subr.bf16.mxu0 0
    %2361 = vmatpush1.bf16.msra.mxu0 0
    %2362 = vmatprep.subr.bf16.mxu0 0
    %2363 = vmatpush1.bf16.msra.mxu0 0
    %2364 = vmatprep.subr.bf16.mxu0 0
    %2365 = vmatpush1.bf16.msra.mxu0 0
    %2366 = vmatprep.mubr.bf16.mxu0 0
    %2367 = vmatmul.mubr.bf16.gmra.mrb[0].mxu0 %v2330
    %v2368 = vpop.f32.mrb[0].mxu0
    %v2369 = vadd.f32 0.0, %v2368
    %v2370 = vpop.f32.mrb[0].mxu0
    %v2371 = vadd.f32 0.0, %v2370
    %v2372 = vpop.f32.mrb[0].mxu0
    %v2373 = vpop.f32.mrb[0].mxu0
    %2374 = vdwg.mxu0
    %2375 = vmatprep.subr.bf16.mxu0 0
    %2376 = vmatpush1.bf16.msra.mxu0 %v1860
    %2377 = vmatprep.subr.bf16.mxu0 0
    %2378 = vmatpush1.bf16.msra.mxu0 %v1863
    %2379 = vmatprep.subr.bf16.mxu0 0
    %2380 = vmatpush1.bf16.msra.mxu0 %v1866
    %2381 = vmatprep.subr.bf16.mxu0 0
    %2382 = vmatpush1.bf16.msra.mxu0 %v1869
    %2383 = vmatprep.subr.bf16.mxu0 0
    %2384 = vmatpush1.bf16.msra.mxu0 %v1872
    %2385 = vmatprep.subr.bf16.mxu0 0
    %2386 = vmatpush1.bf16.msra.mxu0 %v1875
    %2387 = vmatprep.subr.bf16.mxu0 0
    %2388 = vmatpush1.bf16.msra.mxu0 %v1878
    %2389 = vmatprep.subr.bf16.mxu0 0
    %2390 = vmatpush1.bf16.msra.mxu0 %v1881
    %2391 = vmatprep.subr.bf16.mxu0 0
    %2392 = vmatpush1.bf16.msra.mxu0 0
    %2393 = vmatprep.subr.bf16.mxu0 0
    %2394 = vmatpush1.bf16.msra.mxu0 0
    %2395 = vmatprep.subr.bf16.mxu0 0
    %2396 = vmatpush1.bf16.msra.mxu0 0
    %2397 = vmatprep.subr.bf16.mxu0 0
    %2398 = vmatpush1.bf16.msra.mxu0 0
    %2399 = vmatprep.subr.bf16.mxu0 0
    %2400 = vmatpush1.bf16.msra.mxu0 0
    %2401 = vmatprep.subr.bf16.mxu0 0
    %2402 = vmatpush1.bf16.msra.mxu0 0
    %2403 = vmatprep.subr.bf16.mxu0 0
    %2404 = vmatpush1.bf16.msra.mxu0 0
    %2405 = vmatprep.subr.bf16.mxu0 0
    %2406 = vmatpush1.bf16.msra.mxu0 0
    %2407 = vmatprep.mubr.bf16.mxu0 0
    %2408 = vmatmul.mubr.bf16.gmra.mrb[0].mxu0 %v2330
    %v2409 = vpop.f32.mrb[0].mxu0
    %v2410 = vadd.f32 0.0, %v2409
    %v2411 = vpop.f32.mrb[0].mxu0
    %v2412 = vpop.f32.mrb[0].mxu0
    %v2413 = vpop.f32.mrb[0].mxu0
    %2414 = vdwg.mxu0
    %v2415 = vadd.f32 %v2331, %v2369
    %v2416 = vxor.u32 %v2415, 2147483648
    %v2417 = vmul.f32 %v2416, 1.442695
    %v2418 = vpow.pop %v2417
    %v2419 = vadd.f32 %v2418, 1.0
    %v2420 = vrcp.pop %v2419
    %v2421 = vmul.f32 1.0, %v2420
    %v2422 = vadd.f32 %v2332, %v2371
    %v2423 = vxor.u32 %v2422, 2147483648
    %v2424 = vmul.f32 %v2423, 1.442695
    %v2425 = vpow.pop %v2424
    %v2426 = vadd.f32 %v2425, 1.0
    %v2427 = vrcp.pop %v2426
    %v2428 = vmul.f32 1.0, %v2427
    %v2429 = vadd.f32 %v2410, %v1752
    %v2430 = vmul.f32 %v2421, %v2429
    %v2431 = vadd.f32 %v2333, %v2430
    %v2432 = vtanh.pop %v2431
    %v2433 = vsub.f32 1.0, %v2428
    %v2434 = vmul.f32 %v2433, %v2432
    %v2435 = vmul.f32 %v2428, %v2329
    %v2436 = vadd.f32 %v2434, %v2435
    %v2437 = vpack.c.bf16 %v2436, %v2436
    %v2438 = vld [vmem:[%s1145] sm:$0xff]
    %v2439 = vld [vmem:[%s1145 + $0x8] sm:$0xff]
    %v2440 = vld [vmem:[%s1145 + $0x10] sm:$0xff]
    %2441 = vmatprep.subr.bf16.mxu0 %v1859
    %2442 = vmatpush1.bf16.msra.mxu0 %v1858
    %2443 = vmatprep.subr.bf16.mxu0 %v1862
    %2444 = vmatpush1.bf16.msra.mxu0 %v1861
    %2445 = vmatprep.subr.bf16.mxu0 %v1865
    %2446 = vmatpush1.bf16.msra.mxu0 %v1864
    %2447 = vmatprep.subr.bf16.mxu0 %v1868
    %2448 = vmatpush1.bf16.msra.mxu0 %v1867
    %2449 = vmatprep.subr.bf16.mxu0 %v1871
    %2450 = vmatpush1.bf16.msra.mxu0 %v1870
    %2451 = vmatprep.subr.bf16.mxu0 %v1874
    %2452 = vmatpush1.bf16.msra.mxu0 %v1873
    %2453 = vmatprep.subr.bf16.mxu0 %v1877
    %2454 = vmatpush1.bf16.msra.mxu0 %v1876
    %2455 = vmatprep.subr.bf16.mxu0 %v1880
    %2456 = vmatpush1.bf16.msra.mxu0 %v1879
    %2457 = vmatprep.subr.bf16.mxu0 0
    %2458 = vmatpush1.bf16.msra.mxu0 0
    %2459 = vmatprep.subr.bf16.mxu0 0
    %2460 = vmatpush1.bf16.msra.mxu0 0
    %2461 = vmatprep.subr.bf16.mxu0 0
    %2462 = vmatpush1.bf16.msra.mxu0 0
    %2463 = vmatprep.subr.bf16.mxu0 0
    %2464 = vmatpush1.bf16.msra.mxu0 0
    %2465 = vmatprep.subr.bf16.mxu0 0
    %2466 = vmatpush1.bf16.msra.mxu0 0
    %2467 = vmatprep.subr.bf16.mxu0 0
    %2468 = vmatpush1.bf16.msra.mxu0 0
    %2469 = vmatprep.subr.bf16.mxu0 0
    %2470 = vmatpush1.bf16.msra.mxu0 0
    %2471 = vmatprep.subr.bf16.mxu0 0
    %2472 = vmatpush1.bf16.msra.mxu0 0
    %2473 = vmatprep.mubr.bf16.mxu0 0
    %2474 = vmatmul.mubr.bf16.gmra.mrb[0].mxu0 %v2437
    %v2475 = vpop.f32.mrb[0].mxu0
    %v2476 = vadd.f32 0.0, %v2475
    %v2477 = vpop.f32.mrb[0].mxu0
    %v2478 = vadd.f32 0.0, %v2477
    %v2479 = vpop.f32.mrb[0].mxu0
    %v2480 = vpop.f32.mrb[0].mxu0
    %2481 = vdwg.mxu0
    %2482 = vmatprep.subr.bf16.mxu0 0
    %2483 = vmatpush1.bf16.msra.mxu0 %v1860
    %2484 = vmatprep.subr.bf16.mxu0 0
    %2485 = vmatpush1.bf16.msra.mxu0 %v1863
    %2486 = vmatprep.subr.bf16.mxu0 0
    %2487 = vmatpush1.bf16.msra.mxu0 %v1866
    %2488 = vmatprep.subr.bf16.mxu0 0
    %2489 = vmatpush1.bf16.msra.mxu0 %v1869
    %2490 = vmatprep.subr.bf16.mxu0 0
    %2491 = vmatpush1.bf16.msra.mxu0 %v1872
    %2492 = vmatprep.subr.bf16.mxu0 0
    %2493 = vmatpush1.bf16.msra.mxu0 %v1875
    %2494 = vmatprep.subr.bf16.mxu0 0
    %2495 = vmatpush1.bf16.msra.mxu0 %v1878
    %2496 = vmatprep.subr.bf16.mxu0 0
    %2497 = vmatpush1.bf16.msra.mxu0 %v1881
    %2498 = vmatprep.subr.bf16.mxu0 0
    %2499 = vmatpush1.bf16.msra.mxu0 0
    %2500 = vmatprep.subr.bf16.mxu0 0
    %2501 = vmatpush1.bf16.msra.mxu0 0
    %2502 = vmatprep.subr.bf16.mxu0 0
    %2503 = vmatpush1.bf16.msra.mxu0 0
    %2504 = vmatprep.subr.bf16.mxu0 0
    %2505 = vmatpush1.bf16.msra.mxu0 0
    %2506 = vmatprep.subr.bf16.mxu0 0
    %2507 = vmatpush1.bf16.msra.mxu0 0
    %2508 = vmatprep.subr.bf16.mxu0 0
    %2509 = vmatpush1.bf16.msra.mxu0 0
    %2510 = vmatprep.subr.bf16.mxu0 0
    %2511 = vmatpush1.bf16.msra.mxu0 0
    %2512 = vmatprep.subr.bf16.mxu0 0
    %2513 = vmatpush1.bf16.msra.mxu0 0
    %2514 = vmatprep.mubr.bf16.mxu0 0
    %2515 = vmatmul.mubr.bf16.gmra.mrb[0].mxu0 %v2437
    %v2516 = vpop.f32.mrb[0].mxu0
    %v2517 = vadd.f32 0.0, %v2516
    %v2518 = vpop.f32.mrb[0].mxu0
    %v2519 = vpop.f32.mrb[0].mxu0
    %v2520 = vpop.f32.mrb[0].mxu0
    %2521 = vdwg.mxu0
    %v2522 = vadd.f32 %v2438, %v2476
    %v2523 = vxor.u32 %v2522, 2147483648
    %v2524 = vmul.f32 %v2523, 1.442695
    %v2525 = vpow.pop %v2524
    %v2526 = vadd.f32 %v2525, 1.0
    %v2527 = vrcp.pop %v2526
    %v2528 = vmul.f32 1.0, %v2527
    %v2529 = vadd.f32 %v2439, %v2478
    %v2530 = vxor.u32 %v2529, 2147483648
    %v2531 = vmul.f32 %v2530, 1.442695
    %v2532 = vpow.pop %v2531
    %v2533 = vadd.f32 %v2532, 1.0
    %v2534 = vrcp.pop %v2533
    %v2535 = vmul.f32 1.0, %v2534
    %v2536 = vadd.f32 %v2517, %v1752
    %v2537 = vmul.f32 %v2528, %v2536
    %v2538 = vadd.f32 %v2440, %v2537
    %v2539 = vtanh.pop %v2538
    %v2540 = vsub.f32 1.0, %v2535
    %v2541 = vmul.f32 %v2540, %v2539
    %v2542 = vmul.f32 %v2535, %v2436
    %v2543 = vadd.f32 %v2541, %v2542
    %v2544 = vpack.c.bf16 %v2543, %v2543
    %v2545 = vld [vmem:[%s1255] sm:$0xff]
    %v2546 = vld [vmem:[%s1255 + $0x8] sm:$0xff]
    %v2547 = vld [vmem:[%s1255 + $0x10] sm:$0xff]
    %2548 = vmatprep.subr.bf16.mxu0 %v1859
    %2549 = vmatpush1.bf16.msra.mxu0 %v1858
    %2550 = vmatprep.subr.bf16.mxu0 %v1862
    %2551 = vmatpush1.bf16.msra.mxu0 %v1861
    %2552 = vmatprep.subr.bf16.mxu0 %v1865
    %2553 = vmatpush1.bf16.msra.mxu0 %v1864
    %2554 = vmatprep.subr.bf16.mxu0 %v1868
    %2555 = vmatpush1.bf16.msra.mxu0 %v1867
    %2556 = vmatprep.subr.bf16.mxu0 %v1871
    %2557 = vmatpush1.bf16.msra.mxu0 %v1870
    %2558 = vmatprep.subr.bf16.mxu0 %v1874
    %2559 = vmatpush1.bf16.msra.mxu0 %v1873
    %2560 = vmatprep.subr.bf16.mxu0 %v1877
    %2561 = vmatpush1.bf16.msra.mxu0 %v1876
    %2562 = vmatprep.subr.bf16.mxu0 %v1880
    %2563 = vmatpush1.bf16.msra.mxu0 %v1879
    %2564 = vmatprep.subr.bf16.mxu0 0
    %2565 = vmatpush1.bf16.msra.mxu0 0
    %2566 = vmatprep.subr.bf16.mxu0 0
    %2567 = vmatpush1.bf16.msra.mxu0 0
    %2568 = vmatprep.subr.bf16.mxu0 0
    %2569 = vmatpush1.bf16.msra.mxu0 0
    %2570 = vmatprep.subr.bf16.mxu0 0
    %2571 = vmatpush1.bf16.msra.mxu0 0
    %2572 = vmatprep.subr.bf16.mxu0 0
    %2573 = vmatpush1.bf16.msra.mxu0 0
    %2574 = vmatprep.subr.bf16.mxu0 0
    %2575 = vmatpush1.bf16.msra.mxu0 0
    %2576 = vmatprep.subr.bf16.mxu0 0
    %2577 = vmatpush1.bf16.msra.mxu0 0
    %2578 = vmatprep.subr.bf16.mxu0 0
    %2579 = vmatpush1.bf16.msra.mxu0 0
    %2580 = vmatprep.mubr.bf16.mxu0 0
    %2581 = vmatmul.mubr.bf16.gmra.mrb[0].mxu0 %v2544
    %v2582 = vpop.f32.mrb[0].mxu0
    %v2583 = vadd.f32 0.0, %v2582
    %v2584 = vpop.f32.mrb[0].mxu0
    %v2585 = vadd.f32 0.0, %v2584
    %v2586 = vpop.f32.mrb[0].mxu0
    %v2587 = vpop.f32.mrb[0].mxu0
    %2588 = vdwg.mxu0
    %2589 = vmatprep.subr.bf16.mxu0 0
    %2590 = vmatpush1.bf16.msra.mxu0 %v1860
    %2591 = vmatprep.subr.bf16.mxu0 0
    %2592 = vmatpush1.bf16.msra.mxu0 %v1863
    %2593 = vmatprep.subr.bf16.mxu0 0
    %2594 = vmatpush1.bf16.msra.mxu0 %v1866
    %2595 = vmatprep.subr.bf16.mxu0 0
    %2596 = vmatpush1.bf16.msra.mxu0 %v1869
    %2597 = vmatprep.subr.bf16.mxu0 0
    %2598 = vmatpush1.bf16.msra.mxu0 %v1872
    %2599 = vmatprep.subr.bf16.mxu0 0
    %2600 = vmatpush1.bf16.msra.mxu0 %v1875
    %2601 = vmatprep.subr.bf16.mxu0 0
    %2602 = vmatpush1.bf16.msra.mxu0 %v1878
    %2603 = vmatprep.subr.bf16.mxu0 0
    %2604 = vmatpush1.bf16.msra.mxu0 %v1881
    %2605 = vmatprep.subr.bf16.mxu0 0
    %2606 = vmatpush1.bf16.msra.mxu0 0
    %2607 = vmatprep.subr.bf16.mxu0 0
    %2608 = vmatpush1.bf16.msra.mxu0 0
    %2609 = vmatprep.subr.bf16.mxu0 0
    %2610 = vmatpush1.bf16.msra.mxu0 0
    %2611 = vmatprep.subr.bf16.mxu0 0
    %2612 = vmatpush1.bf16.msra.mxu0 0
    %2613 = vmatprep.subr.bf16.mxu0 0
    %2614 = vmatpush1.bf16.msra.mxu0 0
    %2615 = vmatprep.subr.bf16.mxu0 0
    %2616 = vmatpush1.bf16.msra.mxu0 0
    %2617 = vmatprep.subr.bf16.mxu0 0
    %2618 = vmatpush1.bf16.msra.mxu0 0
    %2619 = vmatprep.subr.bf16.mxu0 0
    %2620 = vmatpush1.bf16.msra.mxu0 0
    %2621 = vmatprep.mubr.bf16.mxu0 0
    %2622 = vmatmul.mubr.bf16.gmra.mrb[0].mxu0 %v2544
    %v2623 = vpop.f32.mrb[0].mxu0
    %v2624 = vadd.f32 0.0, %v2623
    %v2625 = vpop.f32.mrb[0].mxu0
    %v2626 = vpop.f32.mrb[0].mxu0
    %v2627 = vpop.f32.mrb[0].mxu0
    %2628 = vdwg.mxu0
    %v2629 = vadd.f32 %v2545, %v2583
    %v2630 = vxor.u32 %v2629, 2147483648
    %v2631 = vmul.f32 %v2630, 1.442695
    %v2632 = vpow.pop %v2631
    %v2633 = vadd.f32 %v2632, 1.0
    %v2634 = vrcp.pop %v2633
    %v2635 = vmul.f32 1.0, %v2634
    %v2636 = vadd.f32 %v2546, %v2585
    %v2637 = vxor.u32 %v2636, 2147483648
    %v2638 = vmul.f32 %v2637, 1.442695
    %v2639 = vpow.pop %v2638
    %v2640 = vadd.f32 %v2639, 1.0
    %v2641 = vrcp.pop %v2640
    %v2642 = vmul.f32 1.0, %v2641
    %v2643 = vadd.f32 %v2624, %v1752
    %v2644 = vmul.f32 %v2635, %v2643
    %v2645 = vadd.f32 %v2547, %v2644
    %v2646 = vtanh.pop %v2645
    %v2647 = vsub.f32 1.0, %v2642
    %v2648 = vmul.f32 %v2647, %v2646
    %v2649 = vmul.f32 %v2642, %v2543
    %v2650 = vadd.f32 %v2648, %v2649
    %v2651 = vld [vmem:[%s9] sm:$0xff]
    %v2652 = vld [vmem:[%s9 + $0x8] sm:$0xff]
    %v2653 = vld [vmem:[%s9 + $0x10] sm:$0xff]
    %v2654 = vld [vmem:[%s9 + $0x18] sm:$0xff]
    %v2655 = vld [vmem:[%s9 + $0x20] sm:$0xff]
    %v2656 = vld [vmem:[%s9 + $0x28] sm:$0xff]
    %v2657 = vld [vmem:[%s9 + $0x30] sm:$0xff]
    %v2658 = vld [vmem:[%s9 + $0x38] sm:$0xff]
    %v2659 = vld [vmem:[%s9 + $0x40] sm:$0xff]
    %v2660 = vld [vmem:[%s9 + $0x48] sm:$0xff]
    %v2661 = vld [vmem:[%s9 + $0x50] sm:$0xff]
    %v2662 = vld [vmem:[%s9 + $0x58] sm:$0xff]
    %v2663 = vld [vmem:[%s9 + $0x60] sm:$0xff]
    %v2664 = vld [vmem:[%s9 + $0x68] sm:$0xff]
    %v2665 = vld [vmem:[%s9 + $0x70] sm:$0xff]
    %v2666 = vld [vmem:[%s9 + $0x78] sm:$0xff]
    %v2667 = vld [vmem:[%s10] sm:$0x1]
    %v2669 = vlaneseq
    %v2670 = vshrl.u32 %v2669, 7
    %v2671 = vsub.s32 0, %v2670
    %v2672 = vrot.slane %v2667, %v2671
    %2674 = vmatprep.subr.mxu0 0.0
    %2675 = vmatpush1.msra.mxu0 %v2651
    %2676 = vmatprep.subr.mxu0 0.0
    %2677 = vmatpush1.msra.mxu0 %v2652
    %2678 = vmatprep.subr.mxu0 0.0
    %2679 = vmatpush1.msra.mxu0 %v2653
    %2680 = vmatprep.subr.mxu0 0.0
    %2681 = vmatpush1.msra.mxu0 %v2654
    %2682 = vmatprep.subr.mxu0 0.0
    %2683 = vmatpush1.msra.mxu0 %v2655
    %2684 = vmatprep.subr.mxu0 0.0
    %2685 = vmatpush1.msra.mxu0 %v2656
    %2686 = vmatprep.subr.mxu0 0.0
    %2687 = vmatpush1.msra.mxu0 %v2657
    %2688 = vmatprep.subr.mxu0 0.0
    %2689 = vmatpush1.msra.mxu0 %v2658
    %2690 = vmatprep.subr.mxu0 0.0
    %2691 = vmatpush1.msra.mxu0 %v2659
    %2692 = vmatprep.subr.mxu0 0.0
    %2693 = vmatpush1.msra.mxu0 %v2660
    %2694 = vmatprep.subr.mxu0 0.0
    %2695 = vmatpush1.msra.mxu0 %v2661
    %2696 = vmatprep.subr.mxu0 0.0
    %2697 = vmatpush1.msra.mxu0 %v2662
    %2698 = vmatprep.subr.mxu0 0.0
    %2699 = vmatpush1.msra.mxu0 %v2663
    %2700 = vmatprep.subr.mxu0 0.0
    %2701 = vmatpush1.msra.mxu0 %v2664
    %2702 = vmatprep.subr.mxu0 0.0
    %2703 = vmatpush1.msra.mxu0 %v2665
    %2704 = vmatprep.subr.mxu0 0.0
    %2705 = vmatpush1.msra.mxu0 %v2666
    %2706 = vmatprep.subr.mxu0 0.0
    %2707 = vmatpush1.msra.mxu0 0.0
    %2708 = vmatprep.subr.mxu0 0.0
    %2709 = vmatpush1.msra.mxu0 0.0
    %2710 = vmatprep.subr.mxu0 0.0
    %2711 = vmatpush1.msra.mxu0 0.0
    %2712 = vmatprep.subr.mxu0 0.0
    %2713 = vmatpush1.msra.mxu0 0.0
    %2714 = vmatprep.subr.mxu0 0.0
    %2715 = vmatpush1.msra.mxu0 0.0
    %2716 = vmatprep.subr.mxu0 0.0
    %2717 = vmatpush1.msra.mxu0 0.0
    %2718 = vmatprep.subr.mxu0 0.0
    %2719 = vmatpush1.msra.mxu0 0.0
    %2720 = vmatprep.subr.mxu0 0.0
    %2721 = vmatpush1.msra.mxu0 0.0
    %2722 = vmatprep.subr.mxu0 0.0
    %2723 = vmatpush1.msra.mxu0 0.0
    %2724 = vmatprep.subr.mxu0 0.0
    %2725 = vmatpush1.msra.mxu0 0.0
    %2726 = vmatprep.subr.mxu0 0.0
    %2727 = vmatpush1.msra.mxu0 0.0
    %2728 = vmatprep.subr.mxu0 0.0
    %2729 = vmatpush1.msra.mxu0 0.0
    %2730 = vmatprep.subr.mxu0 0.0
    %2731 = vmatpush1.msra.mxu0 0.0
    %2732 = vmatprep.subr.mxu0 0.0
    %2733 = vmatpush1.msra.mxu0 0.0
    %2734 = vmatprep.subr.mxu0 0.0
    %2735 = vmatpush1.msra.mxu0 0.0
    %2736 = vmatprep.subr.mxu0 0.0
    %2737 = vmatpush1.msra.mxu0 0.0
    %2738 = vmatprep.mubr.f32.mxu0 0.0
    %2739 = vmatmul.mubr.f32.gmra.mrb[0].mxu0 %v2650
    %v2740 = vpop.f32.mrb[0].mxu0
    %v2741 = vadd.f32 %v2672, %v2740
    %v2742 = vpop.f32.mrb[0].mxu0
    %2743 = vdwg.mxu0
    %vm2744 = vcmask 17408
    %2745 = vst.msk [vmem:[#allocation11] sm:$0x3] %vm2744, %v2741
    // Predicated region
    $region58: #{_fused_forward.1} parent=1 // pred_check
      _
    $region59: #{_fused_forward.1} parent=1 // pred_check_branch
      %2747 = sbr.rel (0) target = $region61
    $region60: #{_fused_forward.1} parent=1 // pred_region
      %s2749 = ssub.s32 32, 32
      %2750 = vsyncadd [#allocation7], %s2749
      %s2752 = sshll.u32 [#allocation11], 4
      %s2753 = int_to_ptr.vmem [resolvable:$true] %s2752
      %2755 = dma.vmem_to_hbm [thread:$0]  %s2753, 32, %s11, [#allocation7]
    $region61: #{_fused_forward.1} parent=1 // pred_fallthru
      _
    // Predicated region
    $region62: #{_fused_forward.1} parent=1 // pred_check
      _
    $region63: #{_fused_forward.1} parent=1 // pred_check_branch
      %2757 = sbr.rel (0) target = $region65
    $region64: #{_fused_forward.1} parent=1 // pred_region
      %2758 = dma.done [#allocation7], 32
    $region65: #{_fused_forward.1} parent=1 // pred_fallthru
      _
    %2759 = vsyncpa [#allocation6], 1
    %2760 = vsyncpa [#allocation9], 1
    %2761 = vsyncpa [#allocation7], 1

</llo_original>
